<compile_context>
chip_gen: v5e
topology: v5e:2x2
jax: 0.10.0
libtpu: 0.0.40
codegen_flags: <defaults>
</compile_context>

<pallas_src>
import functools
import math

import jax
import jax.numpy as jnp
from jax import lax
from jax.experimental import pallas as pl
from jax.experimental.pallas import tpu as pltpu

EPS = 1e-5


def _build_kernel(n_true, tile_n, num_tiles, d1, d2):
    """Builds the 3-phase fused kernel body; static sizes baked in via closure."""
    inv_n = 1.0 / float(n_true)
    needs_mask = (num_tiles * tile_n) != n_true
    last_tile = num_tiles - 1

    def accum(sum_ref, sumsq_ref, v):
        sum_ref[...] += jnp.sum(v, axis=1, keepdims=True)
        sumsq_ref[...] += jnp.sum(v * v, axis=1, keepdims=True)

    def kernel(x_ref, w1_ref, g1_ref, be1_ref, w2_ref, g2_ref, be2_ref,
               w3_ref, b3_ref, o_ref,
               h1c, h2c, sum1, sumsq1, sum2, sumsq2, sc1, sh1, sc2, sh2):
        phase = pl.program_id(0)   # 0: L1 + BN1 stats, 1: BN1/L2 + BN2 stats, 2: emit
        tile = pl.program_id(1)    # batch tile
        col_off = tile * tile_n    # first batch row covered by this tile

        @pl.when((phase == 0) & (tile == 0))
        def _():
            sum1[...] = jnp.zeros_like(sum1)
            sumsq1[...] = jnp.zeros_like(sumsq1)
            sum2[...] = jnp.zeros_like(sum2)
            sumsq2[...] = jnp.zeros_like(sumsq2)

        # -------- phase 0: Linear(32->64), cache h1, accumulate BN-1 stats --------
        @pl.when(phase == 0)
        def _():
            # Feature-major [d1, tile_n]: contract the 32-wide feature dim of
            # both operands (x stays batch-major; reorder happens on-chip).
            # Linear bias omitted: training-mode BN cancels it exactly.
            h1 = lax.dot_general(
                w1_ref[...], x_ref[...],
                dimension_numbers=(((1,), (1,)), ((), ())),
                preferred_element_type=jnp.float32)           # [d1, tile_n]
            h1c[tile] = h1
            if needs_mask:
                # Only the last tile has out-of-range (garbage) batch columns.
                @pl.when(tile == last_tile)
                def _():
                    col = lax.broadcasted_iota(jnp.int32, (d1, tile_n), 1) + col_off
                    accum(sum1, sumsq1, jnp.where(col < n_true, h1, 0.0))

                @pl.when(tile < last_tile)
                def _():
                    accum(sum1, sumsq1, h1)
            else:
                accum(sum1, sumsq1, h1)

        # -------- phase 1: BN1+ReLU (from cache), Linear(64->16), BN-2 stats --------
        @pl.when(phase == 1)
        def _():
            @pl.when(tile == 0)
            def _():
                mean1 = sum1[...] * inv_n
                var1 = jnp.maximum(sumsq1[...] * inv_n - mean1 * mean1, 0.0)
                s = g1_ref[...] * lax.rsqrt(var1 + EPS)       # [d1, 1]
                sc1[...] = s
                sh1[...] = be1_ref[...] - mean1 * s

            a1 = jnp.maximum(h1c[tile] * sc1[...] + sh1[...], 0.0)   # [d1, tile_n]
            h2 = jnp.dot(w2_ref[...], a1,
                         preferred_element_type=jnp.float32)          # [d2, tile_n]
            h2c[tile] = h2
            if needs_mask:
                @pl.when(tile == last_tile)
                def _():
                    col = lax.broadcasted_iota(jnp.int32, (d2, tile_n), 1) + col_off
                    accum(sum2, sumsq2, jnp.where(col < n_true, h2, 0.0))

                @pl.when(tile < last_tile)
                def _():
                    accum(sum2, sumsq2, h2)
            else:
                accum(sum2, sumsq2, h2)

        # -------- phase 2: BN2+ReLU (from cache), Linear(16->1), lane-dense emit ----
        @pl.when(phase == 2)
        def _():
            @pl.when(tile == 0)
            def _():
                mean2 = sum2[...] * inv_n
                var2 = jnp.maximum(sumsq2[...] * inv_n - mean2 * mean2, 0.0)
                s = g2_ref[...] * lax.rsqrt(var2 + EPS)       # [d2, 1]
                sc2[...] = s
                sh2[...] = be2_ref[...] - mean2 * s

            a2 = jnp.maximum(h2c[tile] * sc2[...] + sh2[...], 0.0)   # [d2, tile_n]
            # [1,d2] @ [d2,tile_n] -> [1,tile_n]: output row is lane-dense.
            out = jnp.dot(w3_ref[...], a2,
                          preferred_element_type=jnp.float32) + b3_ref[...]
            o_ref[...] = out.astype(o_ref.dtype)

    return kernel


@functools.partial(jax.jit, static_argnames=("max_tile_n",))
def fc_forward(x, params, *, max_tile_n=2048):
    """x: [N, 32] float32 (batch-major, PyTorch layout). Returns [N] float32."""
    assert max_tile_n % 128 == 0
    n, f_in = x.shape
    w1, g1, be1 = params["w1"], params["g1"], params["be1"]
    w2, g2, be2 = params["w2"], params["g2"], params["be2"]
    w3, b3 = params["w3"], params["b3"]
    d1, d2 = w1.shape[0], w2.shape[0]

    # Batch tiling: a single tile for small N (3 grid steps total; constant
    # block indices -> x DMA'd once), otherwise 128-aligned tiles.
    if n <= max_tile_n:
        tile_n = n if n % 8 == 0 else ((n + 127) // 128) * 128
    else:
        tile_n = max_tile_n
    num_tiles = (n + tile_n - 1) // tile_n

    # VMEM activation cache: 320 B per batch row.  Keep well under v7x's
    # 64 MiB physical VMEM (the smallest of v5e/v6e/v7x).
    cache_bytes = (d1 + d2) * num_tiles * tile_n * 4
    if cache_bytes > 40 * 1024 * 1024:
        # TODO(synk): h2-only caching / x re-read fallback for very large N.
        raise NotImplementedError("activation cache exceeds the VMEM budget")

    # BN affine params as [features, 1] columns (broadcast along the lane axis).
    g1c, be1c = g1.reshape(d1, 1), be1.reshape(d1, 1)
    g2c, be2c = g2.reshape(d2, 1), be2.reshape(d2, 1)
    b3r = b3.reshape(1, 1)

    kernel = _build_kernel(n, tile_n, num_tiles, d1, d2)
    const = lambda shape: pl.BlockSpec(shape, lambda p, i: (0, 0))

    out = pl.pallas_call(
        kernel,
        out_shape=jax.ShapeDtypeStruct((1, n), jnp.float32),
        grid=(3, num_tiles),                      # (phase, batch tile)
        in_specs=[
            # x is only read in phase 0; for phases >= 1 the index map pins the
            # block index so Pallas never re-DMAs x from HBM.
            pl.BlockSpec((tile_n, f_in),
                         lambda p, i: (jnp.where(p == 0, i, num_tiles - 1), 0)),
            const(w1.shape), const((d1, 1)), const((d1, 1)),
            const(w2.shape), const((d2, 1)), const((d2, 1)),
            const(w3.shape), const((1, 1)),
        ],
        # Output is only written in phase 2; pin the block for phases 0/1 so no
        # unwritten VMEM block is ever written back to HBM.
        out_specs=pl.BlockSpec((1, tile_n),
                               lambda p, i: (0, jnp.where(p == 2, i, 0))),
        scratch_shapes=[
            pltpu.VMEM((num_tiles, d1, tile_n), jnp.float32),  # h1 cache (layer-1 out)
            pltpu.VMEM((num_tiles, d2, tile_n), jnp.float32),  # h2 cache (layer-2 out)
            pltpu.VMEM((d1, 1), jnp.float32),   # sum(h1)   per feature
            pltpu.VMEM((d1, 1), jnp.float32),   # sum(h1^2) per feature
            pltpu.VMEM((d2, 1), jnp.float32),   # sum(h2)   per feature
            pltpu.VMEM((d2, 1), jnp.float32),   # sum(h2^2) per feature
            pltpu.VMEM((d1, 1), jnp.float32),   # BN1 scale (folded)
            pltpu.VMEM((d1, 1), jnp.float32),   # BN1 shift (folded)
            pltpu.VMEM((d2, 1), jnp.float32),   # BN2 scale (folded)
            pltpu.VMEM((d2, 1), jnp.float32),   # BN2 shift (folded)
        ],
        compiler_params=pltpu.CompilerParams(
            # Both axes carry cross-iteration state (stat accumulation across
            # tiles, phase ordering) -> sequential on one TensorCore.
            dimension_semantics=("arbitrary", "arbitrary"),
            vmem_limit_bytes=48 * 1024 * 1024,
        ),
    )(x, w1, g1c, be1c, w2, g2c, be2c, w3, b3r)

    return out[0]   # .squeeze(1)-equivalent  -> [N]


def init_params(key, sizes):
    """Deterministic PyTorch-style init; weights in PyTorch [out, in] layout."""
    p = {}
    names = [("w1", "b1"), ("w2", "b2"), ("w3", "b3")]
    for idx, (wn, bn) in enumerate(names):
        fin, fout = sizes[idx], sizes[idx + 1]
        key, kw, kb = jax.random.split(key, 3)
        bound = 1.0 / math.sqrt(fin)
        p[wn] = jax.random.uniform(kw, (fout, fin), jnp.float32, -bound, bound)
        p[bn] = jax.random.uniform(kb, (fout,), jnp.float32, -bound, bound)
    # BatchNorm1d affine params (PyTorch default: gamma=1, beta=0).
    p["g1"] = jnp.ones((sizes[1],), jnp.float32)
    p["be1"] = jnp.zeros((sizes[1],), jnp.float32)
    p["g2"] = jnp.ones((sizes[2],), jnp.float32)
    p["be2"] = jnp.zeros((sizes[2],), jnp.float32)
    return p


def reference_forward(x, p):
    """Pure-JAX reference (keeps the b1/b2 bias adds; training-mode BN cancels them)."""

    def bn_relu(h, g, be):
        m = jnp.mean(h, axis=0, keepdims=True)
        v = jnp.mean((h - m) ** 2, axis=0, keepdims=True)   # biased var
        return jnp.maximum((h - m) / jnp.sqrt(v + EPS) * g + be, 0.0)

    h = bn_relu(x @ p["w1"].T + p["b1"], p["g1"], p["be1"])
    h = bn_relu(h @ p["w2"].T + p["b2"], p["g2"], p["be2"])
    return (h @ p["w3"].T + p["b3"])[:, 0]


if __name__ == "__main__":
    encoder_hidden_size = [32, 64, 16, 1]
    N = 1000

    key = jax.random.PRNGKey(0)
    kx, kp = jax.random.split(key)
    x = jax.random.normal(kx, (N, encoder_hidden_size[0]), dtype=jnp.float32)
    params = init_params(kp, encoder_hidden_size)

    ref = reference_forward(x, params)

    # Primary (perf) config: single batch tile, 3 grid steps, x streamed once.
    out = jax.block_until_ready(fc_forward(x, params))
    assert out.shape == (N,), out.shape
    assert jnp.allclose(out, ref, atol=1e-4, rtol=1e-4), (
        float(jnp.max(jnp.abs(out - ref))))

    # Robustness config: multiple batch tiles with a ragged last tile
    # (exercises the in-kernel tail masking of the BN statistics).
    out_tiled = jax.block_until_ready(fc_forward(x, params, max_tile_n=256))
    assert out_tiled.shape == (N,), out_tiled.shape
    assert jnp.allclose(out_tiled, ref, atol=1e-4, rtol=1e-4), (
        float(jnp.max(jnp.abs(out_tiled - ref))))

    print("KERNEL_OK")
</pallas_src>

<mosaic_0001>
module attributes {stable_mosaic.version = 11 : i64} {
  func.func @kernel(%arg0: i32, %arg1: i32, %arg2: memref<1000x32xf32, #tpu.memory_space<vmem>>, %arg3: memref<64x32xf32, #tpu.memory_space<vmem>>, %arg4: memref<64x1xf32, #tpu.memory_space<vmem>>, %arg5: memref<64x1xf32, #tpu.memory_space<vmem>>, %arg6: memref<16x64xf32, #tpu.memory_space<vmem>>, %arg7: memref<16x1xf32, #tpu.memory_space<vmem>>, %arg8: memref<16x1xf32, #tpu.memory_space<vmem>>, %arg9: memref<1x16xf32, #tpu.memory_space<vmem>>, %arg10: memref<1x1xf32, #tpu.memory_space<vmem>>, %arg11: memref<1x1000xf32, #tpu.memory_space<vmem>>, %arg12: memref<1x64x1000xf32, #tpu.memory_space<vmem>>, %arg13: memref<1x16x1000xf32, #tpu.memory_space<vmem>>, %arg14: memref<64x1xf32, #tpu.memory_space<vmem>>, %arg15: memref<64x1xf32, #tpu.memory_space<vmem>>, %arg16: memref<16x1xf32, #tpu.memory_space<vmem>>, %arg17: memref<16x1xf32, #tpu.memory_space<vmem>>, %arg18: memref<64x1xf32, #tpu.memory_space<vmem>>, %arg19: memref<64x1xf32, #tpu.memory_space<vmem>>, %arg20: memref<16x1xf32, #tpu.memory_space<vmem>>, %arg21: memref<16x1xf32, #tpu.memory_space<vmem>>) attributes {dimension_semantics = [#tpu.dimension_semantics<arbitrary>, #tpu.dimension_semantics<arbitrary>], iteration_bounds = array<i64: 3, 1>, scalar_prefetch = 0 : i64, scratch_operands = 10 : i64, tpu.core_type = #tpu.core_type<tc>, window_params = [{transform_indices = @transform_0, window_bounds = array<i64: 1000, 32>}, {pipeline_mode = #tpu.pipeline_mode<synchronous>, transform_indices = @transform_1, window_bounds = array<i64: 64, 32>}, {pipeline_mode = #tpu.pipeline_mode<synchronous>, transform_indices = @transform_2, window_bounds = array<i64: 64, 1>}, {pipeline_mode = #tpu.pipeline_mode<synchronous>, transform_indices = @transform_3, window_bounds = array<i64: 64, 1>}, {pipeline_mode = #tpu.pipeline_mode<synchronous>, transform_indices = @transform_4, window_bounds = array<i64: 16, 64>}, {pipeline_mode = #tpu.pipeline_mode<synchronous>, transform_indices = @transform_5, window_bounds = array<i64: 16, 1>}, {pipeline_mode = #tpu.pipeline_mode<synchronous>, transform_indices = @transform_6, window_bounds = array<i64: 16, 1>}, {pipeline_mode = #tpu.pipeline_mode<synchronous>, transform_indices = @transform_7, window_bounds = array<i64: 1, 16>}, {pipeline_mode = #tpu.pipeline_mode<synchronous>, transform_indices = @transform_8, window_bounds = array<i64: 1, 1>}, {transform_indices = @transform_9, window_bounds = array<i64: 1, 1000>}]} {
    %c0_i32 = arith.constant 0 : i32
    %0 = arith.cmpi eq, %arg0, %c0_i32 : i32
    %c0_i32_0 = arith.constant 0 : i32
    %1 = arith.cmpi eq, %arg1, %c0_i32_0 : i32
    %2 = arith.andi %0, %1 : i1
    %3 = arith.extui %2 : i1 to i32
    %c0_i32_1 = arith.constant 0 : i32
    %4 = arith.cmpi ne, %3, %c0_i32_1 : i32
    scf.if %4 {
      %cst = arith.constant 0.000000e+00 : f32
      %14 = vector.broadcast %cst : f32 to vector<64x1xf32>
      %c0 = arith.constant 0 : index
      %c0_6 = arith.constant 0 : index
      %15 = vector.load %arg14[%c0, %c0_6] : memref<64x1xf32, #tpu.memory_space<vmem>>, vector<64x1xf32>
      tpu.vector_store %arg14[%c0, %c0_6], %14 {strides = array<i32>} : memref<64x1xf32, #tpu.memory_space<vmem>>, vector<64x1xf32>,
      %cst_7 = arith.constant 0.000000e+00 : f32
      %16 = vector.broadcast %cst_7 : f32 to vector<64x1xf32>
      %c0_8 = arith.constant 0 : index
      %c0_9 = arith.constant 0 : index
      %17 = vector.load %arg15[%c0_8, %c0_9] : memref<64x1xf32, #tpu.memory_space<vmem>>, vector<64x1xf32>
      tpu.vector_store %arg15[%c0_8, %c0_9], %16 {strides = array<i32>} : memref<64x1xf32, #tpu.memory_space<vmem>>, vector<64x1xf32>,
      %cst_10 = arith.constant 0.000000e+00 : f32
      %18 = vector.broadcast %cst_10 : f32 to vector<16x1xf32>
      %c0_11 = arith.constant 0 : index
      %c0_12 = arith.constant 0 : index
      %19 = vector.load %arg16[%c0_11, %c0_12] : memref<16x1xf32, #tpu.memory_space<vmem>>, vector<16x1xf32>
      tpu.vector_store %arg16[%c0_11, %c0_12], %18 {strides = array<i32>} : memref<16x1xf32, #tpu.memory_space<vmem>>, vector<16x1xf32>,
      %cst_13 = arith.constant 0.000000e+00 : f32
      %20 = vector.broadcast %cst_13 : f32 to vector<16x1xf32>
      %c0_14 = arith.constant 0 : index
      %c0_15 = arith.constant 0 : index
      %21 = vector.load %arg17[%c0_14, %c0_15] : memref<16x1xf32, #tpu.memory_space<vmem>>, vector<16x1xf32>
      tpu.vector_store %arg17[%c0_14, %c0_15], %20 {strides = array<i32>} : memref<16x1xf32, #tpu.memory_space<vmem>>, vector<16x1xf32>,
    } else {
    }
    %c0_i32_2 = arith.constant 0 : i32
    %5 = arith.cmpi eq, %arg0, %c0_i32_2 : i32
    %6 = arith.extui %5 : i1 to i32
    %c0_i32_3 = arith.constant 0 : i32
    %7 = arith.cmpi ne, %6, %c0_i32_3 : i32
    scf.if %7 {
      %c0 = arith.constant 0 : index
      %c0_6 = arith.constant 0 : index
      %14 = vector.load %arg3[%c0, %c0_6] : memref<64x32xf32, #tpu.memory_space<vmem>>, vector<64x32xf32>
      %c0_7 = arith.constant 0 : index
      %c0_8 = arith.constant 0 : index
      %15 = vector.load %arg2[%c0_7, %c0_8] : memref<1000x32xf32, #tpu.memory_space<vmem>>, vector<1000x32xf32>
      %cst = arith.constant dense<0.000000e+00> : vector<64x1000xf32>
      %16 = tpu.matmul %14, %15, %cst {dimension_numbers = #tpu.dot_dimension_numbers<[1], [1], [0], [0], [0, 0, 1, 0], [], []>} : vector<64x32xf32>, vector<1000x32xf32>, vector<64x1000xf32> -> vector<64x1000xf32>
      %17 = arith.index_cast %arg1 : i32 to index
      %c0_9 = arith.constant 0 : index
      %c0_10 = arith.constant 0 : index
      %18 = vector.load %arg12[%17, %c0_9, %c0_10] : memref<1x64x1000xf32, #tpu.memory_space<vmem>>, vector<1x64x1000xf32>
      %19 = vector.shape_cast %18 : vector<1x64x1000xf32> to vector<64x1000xf32>
      %20 = vector.shape_cast %16 : vector<64x1000xf32> to vector<1x64x1000xf32>
      tpu.vector_store %arg12[%17, %c0_9, %c0_10], %20 {strides = array<i32>} : memref<1x64x1000xf32, #tpu.memory_space<vmem>>, vector<1x64x1000xf32>,
      %c0_11 = arith.constant 0 : index
      %c0_12 = arith.constant 0 : index
      %21 = vector.load %arg14[%c0_11, %c0_12] : memref<64x1xf32, #tpu.memory_space<vmem>>, vector<64x1xf32>
      %cst_13 = arith.constant dense<0.000000e+00> : vector<64xf32>
      %22 = vector.multi_reduction <add>, %16, %cst_13 [1] : vector<64x1000xf32> to vector<64xf32>
      %23 = vector.shape_cast %22 : vector<64xf32> to vector<64x1xf32>
      %24 = arith.addf %21, %23 : vector<64x1xf32>
      %c0_14 = arith.constant 0 : index
      %c0_15 = arith.constant 0 : index
      %25 = vector.load %arg14[%c0_14, %c0_15] : memref<64x1xf32, #tpu.memory_space<vmem>>, vector<64x1xf32>
      tpu.vector_store %arg14[%c0_14, %c0_15], %24 {strides = array<i32>} : memref<64x1xf32, #tpu.memory_space<vmem>>, vector<64x1xf32>,
      %c0_16 = arith.constant 0 : index
      %c0_17 = arith.constant 0 : index
      %26 = vector.load %arg15[%c0_16, %c0_17] : memref<64x1xf32, #tpu.memory_space<vmem>>, vector<64x1xf32>
      %27 = arith.mulf %16, %16 : vector<64x1000xf32>
      %cst_18 = arith.constant dense<0.000000e+00> : vector<64xf32>
      %28 = vector.multi_reduction <add>, %27, %cst_18 [1] : vector<64x1000xf32> to vector<64xf32>
      %29 = vector.shape_cast %28 : vector<64xf32> to vector<64x1xf32>
      %30 = arith.addf %26, %29 : vector<64x1xf32>
      %c0_19 = arith.constant 0 : index
      %c0_20 = arith.constant 0 : index
      %31 = vector.load %arg15[%c0_19, %c0_20] : memref<64x1xf32, #tpu.memory_space<vmem>>, vector<64x1xf32>
      tpu.vector_store %arg15[%c0_19, %c0_20], %30 {strides = array<i32>} : memref<64x1xf32, #tpu.memory_space<vmem>>, vector<64x1xf32>,
    } else {
    }
    %c1_i32 = arith.constant 1 : i32
    %8 = arith.cmpi eq, %arg0, %c1_i32 : i32
    %9 = arith.extui %8 : i1 to i32
    %c0_i32_4 = arith.constant 0 : i32
    %10 = arith.cmpi ne, %9, %c0_i32_4 : i32
    scf.if %10 {
      %c0_i32_6 = arith.constant 0 : i32
      %14 = arith.cmpi eq, %arg1, %c0_i32_6 : i32
      %15 = arith.extui %14 : i1 to i32
      %c0_i32_7 = arith.constant 0 : i32
      %16 = arith.cmpi ne, %15, %c0_i32_7 : i32
      scf.if %16 {
        %c0_28 = arith.constant 0 : index
        %c0_29 = arith.constant 0 : index
        %45 = vector.load %arg14[%c0_28, %c0_29] : memref<64x1xf32, #tpu.memory_space<vmem>>, vector<64x1xf32>
        %cst_30 = arith.constant 1.000000e-03 : f32
        %46 = vector.broadcast %cst_30 : f32 to vector<64x1xf32>
        %47 = arith.mulf %45, %46 : vector<64x1xf32>
        %c0_31 = arith.constant 0 : index
        %c0_32 = arith.constant 0 : index
        %48 = vector.load %arg15[%c0_31, %c0_32] : memref<64x1xf32, #tpu.memory_space<vmem>>, vector<64x1xf32>
        %cst_33 = arith.constant 1.000000e-03 : f32
        %49 = vector.broadcast %cst_33 : f32 to vector<64x1xf32>
        %50 = arith.mulf %48, %49 : vector<64x1xf32>
        %51 = arith.mulf %47, %47 : vector<64x1xf32>
        %52 = arith.subf %50, %51 : vector<64x1xf32>
        %cst_34 = arith.constant 0.000000e+00 : f32
        %53 = vector.broadcast %cst_34 : f32 to vector<64x1xf32>
        %54 = arith.maximumf %52, %53 : vector<64x1xf32>
        %c0_35 = arith.constant 0 : index
        %c0_36 = arith.constant 0 : index
        %55 = vector.load %arg4[%c0_35, %c0_36] : memref<64x1xf32, #tpu.memory_space<vmem>>, vector<64x1xf32>
        %cst_37 = arith.constant 9.99999974E-6 : f32
        %56 = vector.broadcast %cst_37 : f32 to vector<64x1xf32>
        %57 = arith.addf %54, %56 : vector<64x1xf32>
        %58 = math.rsqrt %57 : vector<64x1xf32>
        %59 = arith.mulf %55, %58 : vector<64x1xf32>
        %c0_38 = arith.constant 0 : index
        %c0_39 = arith.constant 0 : index
        %60 = vector.load %arg18[%c0_38, %c0_39] : memref<64x1xf32, #tpu.memory_space<vmem>>, vector<64x1xf32>
        tpu.vector_store %arg18[%c0_38, %c0_39], %59 {strides = array<i32>} : memref<64x1xf32, #tpu.memory_space<vmem>>, vector<64x1xf32>,
        %c0_40 = arith.constant 0 : index
        %c0_41 = arith.constant 0 : index
        %61 = vector.load %arg5[%c0_40, %c0_41] : memref<64x1xf32, #tpu.memory_space<vmem>>, vector<64x1xf32>
        %62 = arith.mulf %47, %59 : vector<64x1xf32>
        %63 = arith.subf %61, %62 : vector<64x1xf32>
        %c0_42 = arith.constant 0 : index
        %c0_43 = arith.constant 0 : index
        %64 = vector.load %arg19[%c0_42, %c0_43] : memref<64x1xf32, #tpu.memory_space<vmem>>, vector<64x1xf32>
        tpu.vector_store %arg19[%c0_42, %c0_43], %63 {strides = array<i32>} : memref<64x1xf32, #tpu.memory_space<vmem>>, vector<64x1xf32>,
      } else {
      }
      %17 = arith.index_cast %arg1 : i32 to index
      %c0 = arith.constant 0 : index
      %c0_8 = arith.constant 0 : index
      %18 = vector.load %arg12[%17, %c0, %c0_8] : memref<1x64x1000xf32, #tpu.memory_space<vmem>>, vector<1x64x1000xf32>
      %19 = vector.shape_cast %18 : vector<1x64x1000xf32> to vector<64x1000xf32>
      %c0_9 = arith.constant 0 : index
      %c0_10 = arith.constant 0 : index
      %20 = vector.load %arg18[%c0_9, %c0_10] : memref<64x1xf32, #tpu.memory_space<vmem>>, vector<64x1xf32>
      %21 = vector.broadcast %20 : vector<64x1xf32> to vector<64x1000xf32>
      %22 = arith.mulf %19, %21 : vector<64x1000xf32>
      %c0_11 = arith.constant 0 : index
      %c0_12 = arith.constant 0 : index
      %23 = vector.load %arg19[%c0_11, %c0_12] : memref<64x1xf32, #tpu.memory_space<vmem>>, vector<64x1xf32>
      %24 = vector.broadcast %23 : vector<64x1xf32> to vector<64x1000xf32>
      %25 = arith.addf %22, %24 : vector<64x1000xf32>
      %cst = arith.constant 0.000000e+00 : f32
      %26 = vector.broadcast %cst : f32 to vector<64x1000xf32>
      %27 = arith.maximumf %25, %26 : vector<64x1000xf32>
      %c0_13 = arith.constant 0 : index
      %c0_14 = arith.constant 0 : index
      %28 = vector.load %arg6[%c0_13, %c0_14] : memref<16x64xf32, #tpu.memory_space<vmem>>, vector<16x64xf32>
      %cst_15 = arith.constant dense<0.000000e+00> : vector<16x1000xf32>
      %29 = tpu.matmul %28, %27, %cst_15 {dimension_numbers = #tpu.dot_dimension_numbers<[1], [0], [0], [1], [0, 0, 1, 1], [], []>} : vector<16x64xf32>, vector<64x1000xf32>, vector<16x1000xf32> -> vector<16x1000xf32>
      %30 = arith.index_cast %arg1 : i32 to index
      %c0_16 = arith.constant 0 : index
      %c0_17 = arith.constant 0 : index
      %31 = vector.load %arg13[%30, %c0_16, %c0_17] : memref<1x16x1000xf32, #tpu.memory_space<vmem>>, vector<1x16x1000xf32>
      %32 = vector.shape_cast %31 : vector<1x16x1000xf32> to vector<16x1000xf32>
      %33 = vector.shape_cast %29 : vector<16x1000xf32> to vector<1x16x1000xf32>
      tpu.vector_store %arg13[%30, %c0_16, %c0_17], %33 {strides = array<i32>} : memref<1x16x1000xf32, #tpu.memory_space<vmem>>, vector<1x16x1000xf32>,
      %c0_18 = arith.constant 0 : index
      %c0_19 = arith.constant 0 : index
      %34 = vector.load %arg16[%c0_18, %c0_19] : memref<16x1xf32, #tpu.memory_space<vmem>>, vector<16x1xf32>
      %cst_20 = arith.constant dense<0.000000e+00> : vector<16xf32>
      %35 = vector.multi_reduction <add>, %29, %cst_20 [1] : vector<16x1000xf32> to vector<16xf32>
      %36 = vector.shape_cast %35 : vector<16xf32> to vector<16x1xf32>
      %37 = arith.addf %34, %36 : vector<16x1xf32>
      %c0_21 = arith.constant 0 : index
      %c0_22 = arith.constant 0 : index
      %38 = vector.load %arg16[%c0_21, %c0_22] : memref<16x1xf32, #tpu.memory_space<vmem>>, vector<16x1xf32>
      tpu.vector_store %arg16[%c0_21, %c0_22], %37 {strides = array<i32>} : memref<16x1xf32, #tpu.memory_space<vmem>>, vector<16x1xf32>,
      %c0_23 = arith.constant 0 : index
      %c0_24 = arith.constant 0 : index
      %39 = vector.load %arg17[%c0_23, %c0_24] : memref<16x1xf32, #tpu.memory_space<vmem>>, vector<16x1xf32>
      %40 = arith.mulf %29, %29 : vector<16x1000xf32>
      %cst_25 = arith.constant dense<0.000000e+00> : vector<16xf32>
      %41 = vector.multi_reduction <add>, %40, %cst_25 [1] : vector<16x1000xf32> to vector<16xf32>
      %42 = vector.shape_cast %41 : vector<16xf32> to vector<16x1xf32>
      %43 = arith.addf %39, %42 : vector<16x1xf32>
      %c0_26 = arith.constant 0 : index
      %c0_27 = arith.constant 0 : index
      %44 = vector.load %arg17[%c0_26, %c0_27] : memref<16x1xf32, #tpu.memory_space<vmem>>, vector<16x1xf32>
      tpu.vector_store %arg17[%c0_26, %c0_27], %43 {strides = array<i32>} : memref<16x1xf32, #tpu.memory_space<vmem>>, vector<16x1xf32>,
    } else {
    }
    %c2_i32 = arith.constant 2 : i32
    %11 = arith.cmpi eq, %arg0, %c2_i32 : i32
    %12 = arith.extui %11 : i1 to i32
    %c0_i32_5 = arith.constant 0 : i32
    %13 = arith.cmpi ne, %12, %c0_i32_5 : i32
    scf.if %13 {
      %c0_i32_6 = arith.constant 0 : i32
      %14 = arith.cmpi eq, %arg1, %c0_i32_6 : i32
      %15 = arith.extui %14 : i1 to i32
      %c0_i32_7 = arith.constant 0 : i32
      %16 = arith.cmpi ne, %15, %c0_i32_7 : i32
      scf.if %16 {
        %c0_20 = arith.constant 0 : index
        %c0_21 = arith.constant 0 : index
        %34 = vector.load %arg16[%c0_20, %c0_21] : memref<16x1xf32, #tpu.memory_space<vmem>>, vector<16x1xf32>
        %cst_22 = arith.constant 1.000000e-03 : f32
        %35 = vector.broadcast %cst_22 : f32 to vector<16x1xf32>
        %36 = arith.mulf %34, %35 : vector<16x1xf32>
        %c0_23 = arith.constant 0 : index
        %c0_24 = arith.constant 0 : index
        %37 = vector.load %arg17[%c0_23, %c0_24] : memref<16x1xf32, #tpu.memory_space<vmem>>, vector<16x1xf32>
        %cst_25 = arith.constant 1.000000e-03 : f32
        %38 = vector.broadcast %cst_25 : f32 to vector<16x1xf32>
        %39 = arith.mulf %37, %38 : vector<16x1xf32>
        %40 = arith.mulf %36, %36 : vector<16x1xf32>
        %41 = arith.subf %39, %40 : vector<16x1xf32>
        %cst_26 = arith.constant 0.000000e+00 : f32
        %42 = vector.broadcast %cst_26 : f32 to vector<16x1xf32>
        %43 = arith.maximumf %41, %42 : vector<16x1xf32>
        %c0_27 = arith.constant 0 : index
        %c0_28 = arith.constant 0 : index
        %44 = vector.load %arg7[%c0_27, %c0_28] : memref<16x1xf32, #tpu.memory_space<vmem>>, vector<16x1xf32>
        %cst_29 = arith.constant 9.99999974E-6 : f32
        %45 = vector.broadcast %cst_29 : f32 to vector<16x1xf32>
        %46 = arith.addf %43, %45 : vector<16x1xf32>
        %47 = math.rsqrt %46 : vector<16x1xf32>
        %48 = arith.mulf %44, %47 : vector<16x1xf32>
        %c0_30 = arith.constant 0 : index
        %c0_31 = arith.constant 0 : index
        %49 = vector.load %arg20[%c0_30, %c0_31] : memref<16x1xf32, #tpu.memory_space<vmem>>, vector<16x1xf32>
        tpu.vector_store %arg20[%c0_30, %c0_31], %48 {strides = array<i32>} : memref<16x1xf32, #tpu.memory_space<vmem>>, vector<16x1xf32>,
        %c0_32 = arith.constant 0 : index
        %c0_33 = arith.constant 0 : index
        %50 = vector.load %arg8[%c0_32, %c0_33] : memref<16x1xf32, #tpu.memory_space<vmem>>, vector<16x1xf32>
        %51 = arith.mulf %36, %48 : vector<16x1xf32>
        %52 = arith.subf %50, %51 : vector<16x1xf32>
        %c0_34 = arith.constant 0 : index
        %c0_35 = arith.constant 0 : index
        %53 = vector.load %arg21[%c0_34, %c0_35] : memref<16x1xf32, #tpu.memory_space<vmem>>, vector<16x1xf32>
        tpu.vector_store %arg21[%c0_34, %c0_35], %52 {strides = array<i32>} : memref<16x1xf32, #tpu.memory_space<vmem>>, vector<16x1xf32>,
      } else {
      }
      %17 = arith.index_cast %arg1 : i32 to index
      %c0 = arith.constant 0 : index
      %c0_8 = arith.constant 0 : index
      %18 = vector.load %arg13[%17, %c0, %c0_8] : memref<1x16x1000xf32, #tpu.memory_space<vmem>>, vector<1x16x1000xf32>
      %19 = vector.shape_cast %18 : vector<1x16x1000xf32> to vector<16x1000xf32>
      %c0_9 = arith.constant 0 : index
      %c0_10 = arith.constant 0 : index
      %20 = vector.load %arg20[%c0_9, %c0_10] : memref<16x1xf32, #tpu.memory_space<vmem>>, vector<16x1xf32>
      %21 = vector.broadcast %20 : vector<16x1xf32> to vector<16x1000xf32>
      %22 = arith.mulf %19, %21 : vector<16x1000xf32>
      %c0_11 = arith.constant 0 : index
      %c0_12 = arith.constant 0 : index
      %23 = vector.load %arg21[%c0_11, %c0_12] : memref<16x1xf32, #tpu.memory_space<vmem>>, vector<16x1xf32>
      %24 = vector.broadcast %23 : vector<16x1xf32> to vector<16x1000xf32>
      %25 = arith.addf %22, %24 : vector<16x1000xf32>
      %cst = arith.constant 0.000000e+00 : f32
      %26 = vector.broadcast %cst : f32 to vector<16x1000xf32>
      %27 = arith.maximumf %25, %26 : vector<16x1000xf32>
      %c0_13 = arith.constant 0 : index
      %c0_14 = arith.constant 0 : index
      %28 = vector.load %arg9[%c0_13, %c0_14] : memref<1x16xf32, #tpu.memory_space<vmem>>, vector<1x16xf32>
      %cst_15 = arith.constant dense<0.000000e+00> : vector<1x1000xf32>
      %29 = tpu.matmul %28, %27, %cst_15 {dimension_numbers = #tpu.dot_dimension_numbers<[1], [0], [0], [1], [0, 0, 1, 1], [], []>} : vector<1x16xf32>, vector<16x1000xf32>, vector<1x1000xf32> -> vector<1x1000xf32>
      %c0_16 = arith.constant 0 : index
      %c0_17 = arith.constant 0 : index
      %30 = vector.load %arg10[%c0_16, %c0_17] : memref<1x1xf32, #tpu.memory_space<vmem>>, vector<1x1xf32>
      %31 = vector.broadcast %30 : vector<1x1xf32> to vector<1x1000xf32>
      %32 = arith.addf %29, %31 : vector<1x1000xf32>
      %c0_18 = arith.constant 0 : index
      %c0_19 = arith.constant 0 : index
      %33 = vector.load %arg11[%c0_18, %c0_19] : memref<1x1000xf32, #tpu.memory_space<vmem>>, vector<1x1000xf32>
      tpu.vector_store %arg11[%c0_18, %c0_19], %32 {strides = array<i32>} : memref<1x1000xf32, #tpu.memory_space<vmem>>, vector<1x1000xf32>,
    } else {
    }
    return
  }
  func.func @transform_0(%arg0: i32, %arg1: i32) -> (i32, i32) {
    %c0_i32 = arith.constant 0 : i32
    %0 = arith.cmpi eq, %arg0, %c0_i32 : i32
    %c0_i32_0 = arith.constant 0 : i32
    %1 = arith.select %0, %arg1, %c0_i32_0 : i32
    %c0_i32_1 = arith.constant 0 : i32
    %c0_i32_2 = arith.constant 0 : i32
    return %1, %c0_i32_1 : i32, i32
  }
  func.func @transform_1(%arg0: i32, %arg1: i32) -> (i32, i32) {
    %c0_i32 = arith.constant 0 : i32
    %c0_i32_0 = arith.constant 0 : i32
    %c0_i32_1 = arith.constant 0 : i32
    return %c0_i32, %c0_i32_0 : i32, i32
  }
  func.func @transform_2(%arg0: i32, %arg1: i32) -> (i32, i32) {
    %c0_i32 = arith.constant 0 : i32
    %c0_i32_0 = arith.constant 0 : i32
    %c0_i32_1 = arith.constant 0 : i32
    return %c0_i32, %c0_i32_0 : i32, i32
  }
  func.func @transform_3(%arg0: i32, %arg1: i32) -> (i32, i32) {
    %c0_i32 = arith.constant 0 : i32
    %c0_i32_0 = arith.constant 0 : i32
    %c0_i32_1 = arith.constant 0 : i32
    return %c0_i32, %c0_i32_0 : i32, i32
  }
  func.func @transform_4(%arg0: i32, %arg1: i32) -> (i32, i32) {
    %c0_i32 = arith.constant 0 : i32
    %c0_i32_0 = arith.constant 0 : i32
    %c0_i32_1 = arith.constant 0 : i32
    return %c0_i32, %c0_i32_0 : i32, i32
  }
  func.func @transform_5(%arg0: i32, %arg1: i32) -> (i32, i32) {
    %c0_i32 = arith.constant 0 : i32
    %c0_i32_0 = arith.constant 0 : i32
    %c0_i32_1 = arith.constant 0 : i32
    return %c0_i32, %c0_i32_0 : i32, i32
  }
  func.func @transform_6(%arg0: i32, %arg1: i32) -> (i32, i32) {
    %c0_i32 = arith.constant 0 : i32
    %c0_i32_0 = arith.constant 0 : i32
    %c0_i32_1 = arith.constant 0 : i32
    return %c0_i32, %c0_i32_0 : i32, i32
  }
  func.func @transform_7(%arg0: i32, %arg1: i32) -> (i32, i32) {
    %c0_i32 = arith.constant 0 : i32
    %c0_i32_0 = arith.constant 0 : i32
    %c0_i32_1 = arith.constant 0 : i32
    return %c0_i32, %c0_i32_0 : i32, i32
  }
  func.func @transform_8(%arg0: i32, %arg1: i32) -> (i32, i32) {
    %c0_i32 = arith.constant 0 : i32
    %c0_i32_0 = arith.constant 0 : i32
    %c0_i32_1 = arith.constant 0 : i32
    return %c0_i32, %c0_i32_0 : i32, i32
  }
  func.func @transform_9(%arg0: i32, %arg1: i32) -> (i32, i32) {
    %c2_i32 = arith.constant 2 : i32
    %0 = arith.cmpi eq, %arg0, %c2_i32 : i32
    %c0_i32 = arith.constant 0 : i32
    %1 = arith.select %0, %arg1, %c0_i32 : i32
    %c0_i32_0 = arith.constant 0 : i32
    %c0_i32_1 = arith.constant 0 : i32
    return %c0_i32_0, %1 : i32, i32
  }
}

</mosaic_0001>

<llo_original>
// kernel: fc_forward.1
$region0: #{fc_forward.1}
  #allocation0 [shape = 'u32[]', space=smem, size = 0x4, offset = 0x4, fixed_abs, tag = 'smem constant byte address 0x4 - core index']
  #allocation1 [shape = 'u32[72,128]{1,0:T(1,128)}', space=vmem, size = 0x9000, scoped, tag = 'internal scratch']
  #allocation2 [shape = 'f32[1,64,1000]{2,1,0:T(8,128)}', space=vmem, size = 0x40000, scoped, tag = 'scratch operand']
  #allocation3 [shape = 'f32[1,16,1000]{2,1,0:T(8,128)}', space=vmem, size = 0x10000, scoped, tag = 'scratch operand']
  #allocation4 [shape = 'f32[64,1]{1,0:T(8,128)}', space=vmem, size = 0x8000, scoped, tag = 'scratch operand']
  #allocation5 [shape = 'f32[64,1]{1,0:T(8,128)}', space=vmem, size = 0x8000, scoped, tag = 'scratch operand']
  #allocation6 [shape = 'f32[16,1]{1,0:T(8,128)}', space=vmem, size = 0x2000, scoped, tag = 'scratch operand']
  #allocation7 [shape = 'f32[16,1]{1,0:T(8,128)}', space=vmem, size = 0x2000, scoped, tag = 'scratch operand']
  #allocation8 [shape = 'f32[64,1]{1,0:T(8,128)}', space=vmem, size = 0x8000, scoped, tag = 'scratch operand']
  #allocation9 [shape = 'f32[64,1]{1,0:T(8,128)}', space=vmem, size = 0x8000, scoped, tag = 'scratch operand']
  #allocation10 [shape = 'f32[16,1]{1,0:T(8,128)}', space=vmem, size = 0x2000, scoped, tag = 'scratch operand']
  #allocation11 [shape = 'f32[16,1]{1,0:T(8,128)}', space=vmem, size = 0x2000, scoped, tag = 'scratch operand']
  #allocation12 [shape = 'f32[1,1]{1,0:T(1,128)S(1)}', space=vmem, size = 0x200, scoped, tag = 'scoped memory for fc_forward.1']
  %s0 = inlined_call_operand.vmem [shape: f32[1000,32], index: 0, kind: input, shape index: {}]
  %s1 = inlined_call_operand.vmem [shape: f32[64,32], index: 1, kind: input, shape index: {}]
  %s2 = inlined_call_operand.vmem [shape: f32[64,1], index: 2, kind: input, shape index: {}]
  %s3 = inlined_call_operand.vmem [shape: f32[64,1], index: 3, kind: input, shape index: {}]
  %s4 = inlined_call_operand.vmem [shape: f32[16,64], index: 4, kind: input, shape index: {}]
  %s5 = inlined_call_operand.vmem [shape: f32[16,1], index: 5, kind: input, shape index: {}]
  %s6 = inlined_call_operand.vmem [shape: f32[16,1], index: 6, kind: input, shape index: {}]
  %s7 = inlined_call_operand.vmem [shape: f32[1,16], index: 7, kind: input, shape index: {}]
  %s8 = inlined_call_operand.<no memory space> [shape: f32[1,1], index: 8, kind: input, shape index: {}]
  %s9 = inlined_call_operand.hbm [shape: f32[1,1000], index: 9, kind: output, shape index: {}]
  %s10 = sld [smem:[#allocation0]]
  $region93: #{fc_forward.1} parent=0
    _
  %s12 = ssub.s32 1, %s10
  %s13 = scalar_select 0, %s12, %s10
  %v14 = vstv %s8
  %15 = vst [vmem:[#allocation12] sm:$0x1] %v14
  $region1: #{fc_forward.1} parent=0
    #allocation13 [shape = 'u8[8192]{0}', space=vmem, size = 0x2000, scoped, tag = 'output window, operand 0']
    #allocation14 [shape = 's32[2]{0}', space=sflag, size = 0x8, scoped, tag = 'scoped memory for fc_forward.1']
    %16 = vsyncpa [#allocation14], 0
    %s17 = scalar_lea.sflag [#allocation14], 1
    %18 = vsyncpa %s17, 0
    loop: start=0, step=1, limit=5
    $region2: #{fc_forward.1} parent=1 // loop_pre_header
      _
    $region3: #{fc_forward.1} parent=1 // loop_header
      %s20 = sphi 0, %s24
      %p21 = scmp.ge.s32.totalorder %s20, 5
      %s27 = sphi 0, %s39
      %s28 = sphi 0, %s35
      %s29 = sphi 0, %s27
      %s30 = sphi 0, %s28
      %s31 = sphi 0, %s29
      %s32 = sphi 0, %s30
      %s46 = sphi 0, %s48
      %s49 = sphi 0, %s46
      %s50 = sphi 0, %s49
      %s66 = sphi 0, %s50
      %s70 = sphi 0, %s70
      %s72 = sphi 0, %s70
      %s73 = sphi 0, %s72
      %s87 = sphi 0, %s73
      %s91 = sphi 0, %s91
      %s93 = sphi 0, %s91
      %s94 = sphi 0, %s93
      %s108 = sphi 0, %s94
      %s112 = sphi 0, %s112
      %s114 = sphi 0, %s112
      %s115 = sphi 0, %s114
      %s129 = sphi 0, %s115
      %s133 = sphi 0, %s133
      %s135 = sphi 0, %s133
      %s136 = sphi 0, %s135
      %s150 = sphi 0, %s136
      %s154 = sphi 0, %s154
      %s156 = sphi 0, %s154
      %s157 = sphi 0, %s156
      %s171 = sphi 0, %s157
      %s175 = sphi 0, %s175
      %s177 = sphi 0, %s175
      %s178 = sphi 0, %s177
      %s192 = sphi 0, %s178
      %s196 = sphi 0, %s196
      %s198 = sphi 0, %s196
      %s199 = sphi 0, %s198
      %s213 = sphi 0, %s199
      %s217 = sphi 0, %s217
      %s219 = sphi 0, %s217
      %s220 = sphi 0, %s219
      %s234 = sphi 0, %s220
      %s244 = sphi 0, %s246
      %s247 = sphi 0, %s244
      %s248 = sphi 0, %s247
      %s264 = sphi 0, %s248
    $region4: #{fc_forward.1} parent=1 // loop_header_branch
      %23 = sbr.rel (%p21) target = $region8
    $region5: #{fc_forward.1} parent=1 // loop_body
      %s25 = ssub.s32 %s20, 1
      %s26 = ssub.s32 %s20, 2
      %s33 = sadd.s32 1, %s28
      %p34 = scmp.ge.s32.totalorder %s33, 1
      %s35 = scalar_select %p34, 0, %s33
      %s36 = sadd.s32 1, %s27
      %s37 = scalar_select %p34, %s36, %s27
      %p38 = scmp.ge.s32.totalorder %s37, 3
      %s39 = scalar_select %p38, 0, %s37
      %p40 = scmp.eq.s32.totalorder %s27, 0
      %s41 = scalar_select %p40, %s28, 0
      %p42 = scmp.eq.s32.totalorder %s39, 0
      %s43 = scalar_select %p42, %s35, 0
      %s44 = ssub.s32 %s41, %s43
      %p45 = scmp.eq.s32.totalorder %s44, 0
      %s47 = sadd.s32 %s46, 1
      %s48 = scalar_select %p45, %s46, %s47
      %p51 = pneg %p45
      %p52 = scmp.eq.s32.totalorder %s20, 2
      %p53 = por %p51, %p52
      %p54 = scmp.ne.s32.totalorder %s46, %s49
      %p55 = scmp.eq.s32.totalorder %s20, 0
      %p56 = por %p54, %p55
      %p57 = scmp.ne.s32.totalorder %s46, %s49
      %p58 = scmp.eq.s32.totalorder %s25, 2
      %p59 = por %p57, %p58
      %p60 = scmp.ne.s32.totalorder %s49, %s50
      %p61 = scmp.eq.s32.totalorder %s25, 0
      %p62 = por %p60, %p61
      %p63 = scmp.ne.s32.totalorder %s49, %s50
      %p64 = scmp.eq.s32.totalorder %s26, 2
      %p65 = por %p63, %p64
      %p67 = scmp.ne.s32.totalorder %s50, %s66
      %p68 = scmp.eq.s32.totalorder %s26, 0
      %p69 = por %p67, %p68
      %s71 = sadd.s32 %s70, 1
      %p74 = scmp.eq.s32.totalorder %s20, 2
      %p75 = scmp.ne.s32.totalorder %s70, %s72
      %p76 = scmp.eq.s32.totalorder %s20, 0
      %p77 = por %p75, %p76
      %p78 = scmp.ne.s32.totalorder %s70, %s72
      %p79 = scmp.eq.s32.totalorder %s25, 2
      %p80 = por %p78, %p79
      %p81 = scmp.ne.s32.totalorder %s72, %s73
      %p82 = scmp.eq.s32.totalorder %s25, 0
      %p83 = por %p81, %p82
      %p84 = scmp.ne.s32.totalorder %s72, %s73
      %p85 = scmp.eq.s32.totalorder %s26, 2
      %p86 = por %p84, %p85
      %p88 = scmp.ne.s32.totalorder %s73, %s87
      %p89 = scmp.eq.s32.totalorder %s26, 0
      %p90 = por %p88, %p89
      %s92 = sadd.s32 %s91, 1
      %p95 = scmp.eq.s32.totalorder %s20, 2
      %p96 = scmp.ne.s32.totalorder %s91, %s93
      %p97 = scmp.eq.s32.totalorder %s20, 0
      %p98 = por %p96, %p97
      %p99 = scmp.ne.s32.totalorder %s91, %s93
      %p100 = scmp.eq.s32.totalorder %s25, 2
      %p101 = por %p99, %p100
      %p102 = scmp.ne.s32.totalorder %s93, %s94
      %p103 = scmp.eq.s32.totalorder %s25, 0
      %p104 = por %p102, %p103
      %p105 = scmp.ne.s32.totalorder %s93, %s94
      %p106 = scmp.eq.s32.totalorder %s26, 2
      %p107 = por %p105, %p106
      %p109 = scmp.ne.s32.totalorder %s94, %s108
      %p110 = scmp.eq.s32.totalorder %s26, 0
      %p111 = por %p109, %p110
      %s113 = sadd.s32 %s112, 1
      %p116 = scmp.eq.s32.totalorder %s20, 2
      %p117 = scmp.ne.s32.totalorder %s112, %s114
      %p118 = scmp.eq.s32.totalorder %s20, 0
      %p119 = por %p117, %p118
      %p120 = scmp.ne.s32.totalorder %s112, %s114
      %p121 = scmp.eq.s32.totalorder %s25, 2
      %p122 = por %p120, %p121
      %p123 = scmp.ne.s32.totalorder %s114, %s115
      %p124 = scmp.eq.s32.totalorder %s25, 0
      %p125 = por %p123, %p124
      %p126 = scmp.ne.s32.totalorder %s114, %s115
      %p127 = scmp.eq.s32.totalorder %s26, 2
      %p128 = por %p126, %p127
      %p130 = scmp.ne.s32.totalorder %s115, %s129
      %p131 = scmp.eq.s32.totalorder %s26, 0
      %p132 = por %p130, %p131
      %s134 = sadd.s32 %s133, 1
      %p137 = scmp.eq.s32.totalorder %s20, 2
      %p138 = scmp.ne.s32.totalorder %s133, %s135
      %p139 = scmp.eq.s32.totalorder %s20, 0
      %p140 = por %p138, %p139
      %p141 = scmp.ne.s32.totalorder %s133, %s135
      %p142 = scmp.eq.s32.totalorder %s25, 2
      %p143 = por %p141, %p142
      %p144 = scmp.ne.s32.totalorder %s135, %s136
      %p145 = scmp.eq.s32.totalorder %s25, 0
      %p146 = por %p144, %p145
      %p147 = scmp.ne.s32.totalorder %s135, %s136
      %p148 = scmp.eq.s32.totalorder %s26, 2
      %p149 = por %p147, %p148
      %p151 = scmp.ne.s32.totalorder %s136, %s150
      %p152 = scmp.eq.s32.totalorder %s26, 0
      %p153 = por %p151, %p152
      %s155 = sadd.s32 %s154, 1
      %p158 = scmp.eq.s32.totalorder %s20, 2
      %p159 = scmp.ne.s32.totalorder %s154, %s156
      %p160 = scmp.eq.s32.totalorder %s20, 0
      %p161 = por %p159, %p160
      %p162 = scmp.ne.s32.totalorder %s154, %s156
      %p163 = scmp.eq.s32.totalorder %s25, 2
      %p164 = por %p162, %p163
      %p165 = scmp.ne.s32.totalorder %s156, %s157
      %p166 = scmp.eq.s32.totalorder %s25, 0
      %p167 = por %p165, %p166
      %p168 = scmp.ne.s32.totalorder %s156, %s157
      %p169 = scmp.eq.s32.totalorder %s26, 2
      %p170 = por %p168, %p169
      %p172 = scmp.ne.s32.totalorder %s157, %s171
      %p173 = scmp.eq.s32.totalorder %s26, 0
      %p174 = por %p172, %p173
      %s176 = sadd.s32 %s175, 1
      %p179 = scmp.eq.s32.totalorder %s20, 2
      %p180 = scmp.ne.s32.totalorder %s175, %s177
      %p181 = scmp.eq.s32.totalorder %s20, 0
      %p182 = por %p180, %p181
      %p183 = scmp.ne.s32.totalorder %s175, %s177
      %p184 = scmp.eq.s32.totalorder %s25, 2
      %p185 = por %p183, %p184
      %p186 = scmp.ne.s32.totalorder %s177, %s178
      %p187 = scmp.eq.s32.totalorder %s25, 0
      %p188 = por %p186, %p187
      %p189 = scmp.ne.s32.totalorder %s177, %s178
      %p190 = scmp.eq.s32.totalorder %s26, 2
      %p191 = por %p189, %p190
      %p193 = scmp.ne.s32.totalorder %s178, %s192
      %p194 = scmp.eq.s32.totalorder %s26, 0
      %p195 = por %p193, %p194
      %s197 = sadd.s32 %s196, 1
      %p200 = scmp.eq.s32.totalorder %s20, 2
      %p201 = scmp.ne.s32.totalorder %s196, %s198
      %p202 = scmp.eq.s32.totalorder %s20, 0
      %p203 = por %p201, %p202
      %p204 = scmp.ne.s32.totalorder %s196, %s198
      %p205 = scmp.eq.s32.totalorder %s25, 2
      %p206 = por %p204, %p205
      %p207 = scmp.ne.s32.totalorder %s198, %s199
      %p208 = scmp.eq.s32.totalorder %s25, 0
      %p209 = por %p207, %p208
      %p210 = scmp.ne.s32.totalorder %s198, %s199
      %p211 = scmp.eq.s32.totalorder %s26, 2
      %p212 = por %p210, %p211
      %p214 = scmp.ne.s32.totalorder %s199, %s213
      %p215 = scmp.eq.s32.totalorder %s26, 0
      %p216 = por %p214, %p215
      %s218 = sadd.s32 %s217, 1
      %p221 = scmp.eq.s32.totalorder %s20, 2
      %p222 = scmp.ne.s32.totalorder %s217, %s219
      %p223 = scmp.eq.s32.totalorder %s20, 0
      %p224 = por %p222, %p223
      %p225 = scmp.ne.s32.totalorder %s217, %s219
      %p226 = scmp.eq.s32.totalorder %s25, 2
      %p227 = por %p225, %p226
      %p228 = scmp.ne.s32.totalorder %s219, %s220
      %p229 = scmp.eq.s32.totalorder %s25, 0
      %p230 = por %p228, %p229
      %p231 = scmp.ne.s32.totalorder %s219, %s220
      %p232 = scmp.eq.s32.totalorder %s26, 2
      %p233 = por %p231, %p232
      %p235 = scmp.ne.s32.totalorder %s220, %s234
      %p236 = scmp.eq.s32.totalorder %s26, 0
      %p237 = por %p235, %p236
      %p238 = scmp.eq.s32.totalorder %s27, 2
      %s239 = scalar_select %p238, %s28, 0
      %p240 = scmp.eq.s32.totalorder %s39, 2
      %s241 = scalar_select %p240, %s35, 0
      %s242 = ssub.s32 %s239, %s241
      %p243 = scmp.eq.s32.totalorder %s242, 0
      %s245 = sadd.s32 %s244, 1
      %s246 = scalar_select %p243, %s244, %s245
      %p249 = pneg %p243
      %p250 = scmp.eq.s32.totalorder %s20, 2
      %p251 = por %p249, %p250
      %p252 = scmp.ne.s32.totalorder %s244, %s247
      %p253 = scmp.eq.s32.totalorder %s20, 0
      %p254 = por %p252, %p253
      %p255 = scmp.ne.s32.totalorder %s244, %s247
      %p256 = scmp.eq.s32.totalorder %s25, 2
      %p257 = por %p255, %p256
      %p258 = scmp.ne.s32.totalorder %s247, %s248
      %p259 = scmp.eq.s32.totalorder %s25, 0
      %p260 = por %p258, %p259
      %p261 = scmp.ne.s32.totalorder %s247, %s248
      %p262 = scmp.eq.s32.totalorder %s26, 2
      %p263 = por %p261, %p262
      %p265 = scmp.ne.s32.totalorder %s248, %s264
      %p266 = scmp.eq.s32.totalorder %s26, 0
      %p267 = por %p265, %p266
      %p268 = scmp.le.s32.totalorder 1, %s20
      %p269 = scmp.lt.s32.totalorder %s20, 4
      %p270 = pnand %p268, %p269
      %p271 = pneg %p270
      // Predicated region
      $region9: #{fc_forward.1} parent=5 // pred_check
        _
      $region10: #{fc_forward.1} parent=5 // pred_check_branch
        %273 = sbr.rel (%p270) target = $region12
      $region11: #{fc_forward.1} parent=5 // pred_region
        %s274 = ssub.s32 %s20, 1
        // Predicated region
        $region13: #{fc_forward.1} parent=11 // pred_check
          %p275 = pneg %p83
        $region14: #{fc_forward.1} parent=11 // pred_check_branch
          %277 = sbr.rel (%p275) target = $region16
        $region15: #{fc_forward.1} parent=11 // pred_region
          _
        $region16: #{fc_forward.1} parent=11 // pred_fallthru
          _
        // Predicated region
        $region17: #{fc_forward.1} parent=11 // pred_check
          %p278 = pneg %p104
        $region18: #{fc_forward.1} parent=11 // pred_check_branch
          %280 = sbr.rel (%p278) target = $region20
        $region19: #{fc_forward.1} parent=11 // pred_region
          _
        $region20: #{fc_forward.1} parent=11 // pred_fallthru
          _
        // Predicated region
        $region21: #{fc_forward.1} parent=11 // pred_check
          %p281 = pneg %p125
        $region22: #{fc_forward.1} parent=11 // pred_check_branch
          %283 = sbr.rel (%p281) target = $region24
        $region23: #{fc_forward.1} parent=11 // pred_region
          _
        $region24: #{fc_forward.1} parent=11 // pred_fallthru
          _
        // Predicated region
        $region25: #{fc_forward.1} parent=11 // pred_check
          %p284 = pneg %p146
        $region26: #{fc_forward.1} parent=11 // pred_check_branch
          %286 = sbr.rel (%p284) target = $region28
        $region27: #{fc_forward.1} parent=11 // pred_region
          _
        $region28: #{fc_forward.1} parent=11 // pred_fallthru
          _
        // Predicated region
        $region29: #{fc_forward.1} parent=11 // pred_check
          %p287 = pneg %p167
        $region30: #{fc_forward.1} parent=11 // pred_check_branch
          %289 = sbr.rel (%p287) target = $region32
        $region31: #{fc_forward.1} parent=11 // pred_region
          _
        $region32: #{fc_forward.1} parent=11 // pred_fallthru
          _
        // Predicated region
        $region33: #{fc_forward.1} parent=11 // pred_check
          %p290 = pneg %p188
        $region34: #{fc_forward.1} parent=11 // pred_check_branch
          %292 = sbr.rel (%p290) target = $region36
        $region35: #{fc_forward.1} parent=11 // pred_region
          _
        $region36: #{fc_forward.1} parent=11 // pred_fallthru
          _
        // Predicated region
        $region37: #{fc_forward.1} parent=11 // pred_check
          %p293 = pneg %p209
        $region38: #{fc_forward.1} parent=11 // pred_check_branch
          %295 = sbr.rel (%p293) target = $region40
        $region39: #{fc_forward.1} parent=11 // pred_region
          _
        $region40: #{fc_forward.1} parent=11 // pred_fallthru
          _
        // Predicated region
        $region41: #{fc_forward.1} parent=11 // pred_check
          %p296 = pneg %p230
        $region42: #{fc_forward.1} parent=11 // pred_check_branch
          %298 = sbr.rel (%p296) target = $region44
        $region43: #{fc_forward.1} parent=11 // pred_region
          _
        $region44: #{fc_forward.1} parent=11 // pred_fallthru
          _
      $region12: #{fc_forward.1} parent=5 // pred_fallthru
        _
      %p299 = scmp.lt.s32.totalorder %s20, 3
      // Predicated region
      $region45: #{fc_forward.1} parent=5 // pred_check
        %p300 = pneg %p299
      $region46: #{fc_forward.1} parent=5 // pred_check_branch
        %302 = sbr.rel (%p300) target = $region48
      $region47: #{fc_forward.1} parent=5 // pred_region
        // Predicated region
        $region49: #{fc_forward.1} parent=47 // pred_check
          %p303 = pneg %p56
        $region50: #{fc_forward.1} parent=47 // pred_check_branch
          %305 = sbr.rel (%p303) target = $region52
        $region51: #{fc_forward.1} parent=47 // pred_region
          %p306 = scmp.eq.s32.totalorder %s27, 0
          %s307 = scalar_select %p306, %s28, 0
          %s308 = smul.u32 125, %s307
          %p309 = scmp.lt.s32.totalorder %s308, 124
          %s310 = scalar_select %p309, %s308, 124
          %s311 = smul.addr %s310, 8
          %s312 = scalar_lea.vmem %s0, %s311
          %p313 = scmp.eq.s32.totalorder %s27, 0
          %s314 = scalar_select %p313, %s28, 0
          %s315 = smul.u32 125, %s314
        $region52: #{fc_forward.1} parent=47 // pred_fallthru
          _
      $region48: #{fc_forward.1} parent=5 // pred_fallthru
        _
      %p316 = scmp.le.s32.totalorder 1, %s20
      %p317 = scmp.lt.s32.totalorder %s20, 4
      %p318 = pnand %p316, %p317
      %p319 = pneg %p318
      // Predicated region
      $region53: #{fc_forward.1} parent=5 // pred_check
        _
      $region54: #{fc_forward.1} parent=5 // pred_check_branch
        %321 = sbr.rel (%p318) target = $region56
      $region55: #{fc_forward.1} parent=5 // pred_region
        %s322 = ssub.s32 %s20, 1
        %p323 = scmp.eq.s32.totalorder %s29, 0
        %s324 = scalar_select %p323, %s30, 0
        %s325 = smul.u32 125, %s324
        %p326 = scmp.lt.s32.totalorder %s325, 124
        %s327 = scalar_select %p326, %s325, 124
        %s328 = smul.addr %s327, 8
        %s329 = scalar_lea.vmem %s0, %s328
        %p330 = pneg %p62
        %p331 = pneg %p59
        %p332 = pneg %p83
        %p333 = pneg %p80
        %p334 = pneg %p104
        %p335 = pneg %p101
        %p336 = pneg %p125
        %p337 = pneg %p122
        %p338 = pneg %p146
        %p339 = pneg %p143
        %p340 = pneg %p167
        %p341 = pneg %p164
        %p342 = pneg %p188
        %p343 = pneg %p185
        %p344 = pneg %p209
        %p345 = pneg %p206
        %p346 = pneg %p230
        %p347 = pneg %p227
        %p348 = pneg %p260
        %p349 = pneg %p257
        %s350 = sand.u32 %s247, 1
        %s351 = scalar_lea.sflag [#allocation14], %s350
        %s352 = sand.u32 %s247, 1
        %s353 = smul.addr %s352, 8
        %s354 = scalar_lea.vmem [#allocation13], %s353
        %p355 = scmp.eq.s32.totalorder %s29, 0
        %s356 = scalar_select %p355, %s30, 0
        %s357 = smul.u32 125, %s356
        %p358 = scmp.lt.s32.totalorder %s357, 124
        %s359 = scalar_select %p358, %s357, 124
        %s360 = smul.addr %s359, 8
        %s361 = scalar_lea.vmem %s0, %s360
        %p362 = scmp.eq.s32.totalorder %s29, 0
        %s363 = scalar_select %p362, %s30, 0
        %s364 = smul.u32 125, %s363
        %p365 = scmp.eq.s32.totalorder %s29, 2
        %s366 = scalar_select %p365, %s30, 0
        %s367 = smul.u32 8, %s366
        %p368 = scmp.eq.s32.totalorder %s29, 0
        %p369 = scmp.eq.s32.totalorder %s30, 0
        %p370 = pnand %p368, %p369
        %p371 = pneg %p370
        // Predicated region
        $region57: #{fc_forward.1} parent=55 // pred_check
          _
        $region58: #{fc_forward.1} parent=55 // pred_check_branch
          %373 = sbr.rel (%p370) target = $region60
        $region59: #{fc_forward.1} parent=55 // pred_region
          %vm374 = vcmask 7168
          %375 = vst.msk [vmem:[#allocation4] sm:$0xff] %vm374, 0.0
          %376 = vst.msk [vmem:[#allocation4 + $0x8] sm:$0xff] %vm374, 0.0
          %377 = vst.msk [vmem:[#allocation4 + $0x10] sm:$0xff] %vm374, 0.0
          %378 = vst.msk [vmem:[#allocation4 + $0x18] sm:$0xff] %vm374, 0.0
          %379 = vst.msk [vmem:[#allocation4 + $0x20] sm:$0xff] %vm374, 0.0
          %380 = vst.msk [vmem:[#allocation4 + $0x28] sm:$0xff] %vm374, 0.0
          %381 = vst.msk [vmem:[#allocation4 + $0x30] sm:$0xff] %vm374, 0.0
          %382 = vst.msk [vmem:[#allocation4 + $0x38] sm:$0xff] %vm374, 0.0
          %383 = vst.msk [vmem:[#allocation5] sm:$0xff] %vm374, 0.0
          %384 = vst.msk [vmem:[#allocation5 + $0x8] sm:$0xff] %vm374, 0.0
          %385 = vst.msk [vmem:[#allocation5 + $0x10] sm:$0xff] %vm374, 0.0
          %386 = vst.msk [vmem:[#allocation5 + $0x18] sm:$0xff] %vm374, 0.0
          %387 = vst.msk [vmem:[#allocation5 + $0x20] sm:$0xff] %vm374, 0.0
          %388 = vst.msk [vmem:[#allocation5 + $0x28] sm:$0xff] %vm374, 0.0
          %389 = vst.msk [vmem:[#allocation5 + $0x30] sm:$0xff] %vm374, 0.0
          %390 = vst.msk [vmem:[#allocation5 + $0x38] sm:$0xff] %vm374, 0.0
          %391 = vst.msk [vmem:[#allocation6] sm:$0xff] %vm374, 0.0
          %392 = vst.msk [vmem:[#allocation6 + $0x8] sm:$0xff] %vm374, 0.0
          %393 = vst.msk [vmem:[#allocation7] sm:$0xff] %vm374, 0.0
          %394 = vst.msk [vmem:[#allocation7 + $0x8] sm:$0xff] %vm374, 0.0
        $region60: #{fc_forward.1} parent=55 // pred_fallthru
          _
        // Predicated region
        $region61: #{fc_forward.1} parent=55 // pred_check
          %p395 = pneg %p368
        $region62: #{fc_forward.1} parent=55 // pred_check_branch
          %397 = sbr.rel (%p395) target = $region64
        $region63: #{fc_forward.1} parent=55 // pred_region
          %v398 = vld [vmem:[%s1] sm:$0xff]
          %v399 = vld [vmem:[%s1 + $0x8] sm:$0xff]
          %v400 = vld [vmem:[%s1 + $0x10] sm:$0xff]
          %v401 = vld [vmem:[%s1 + $0x18] sm:$0xff]
          %v402 = vld [vmem:[%s1 + $0x20] sm:$0xff]
          %v403 = vld [vmem:[%s1 + $0x28] sm:$0xff]
          %v404 = vld [vmem:[%s1 + $0x30] sm:$0xff]
          %v405 = vld [vmem:[%s1 + $0x38] sm:$0xff]
          %v406 = vld [vmem:[%s361] sm:$0xff]
          %v407 = vld [vmem:[%s361 + $0x8] sm:$0xff]
          %v408 = vld [vmem:[%s361 + $0x10] sm:$0xff]
          %v409 = vld [vmem:[%s361 + $0x18] sm:$0xff]
          %v410 = vld [vmem:[%s361 + $0x20] sm:$0xff]
          %v411 = vld [vmem:[%s361 + $0x28] sm:$0xff]
          %v412 = vld [vmem:[%s361 + $0x30] sm:$0xff]
          %v413 = vld [vmem:[%s361 + $0x38] sm:$0xff]
          %v414 = vld [vmem:[%s361 + $0x40] sm:$0xff]
          %v415 = vld [vmem:[%s361 + $0x48] sm:$0xff]
          %v416 = vld [vmem:[%s361 + $0x50] sm:$0xff]
          %v417 = vld [vmem:[%s361 + $0x58] sm:$0xff]
          %v418 = vld [vmem:[%s361 + $0x60] sm:$0xff]
          %v419 = vld [vmem:[%s361 + $0x68] sm:$0xff]
          %v420 = vld [vmem:[%s361 + $0x70] sm:$0xff]
          %v421 = vld [vmem:[%s361 + $0x78] sm:$0xff]
          %v422 = vld [vmem:[%s361 + $0x80] sm:$0xff]
          %v423 = vld [vmem:[%s361 + $0x88] sm:$0xff]
          %v424 = vld [vmem:[%s361 + $0x90] sm:$0xff]
          %v425 = vld [vmem:[%s361 + $0x98] sm:$0xff]
          %v426 = vld [vmem:[%s361 + $0xa0] sm:$0xff]
          %v427 = vld [vmem:[%s361 + $0xa8] sm:$0xff]
          %v428 = vld [vmem:[%s361 + $0xb0] sm:$0xff]
          %v429 = vld [vmem:[%s361 + $0xb8] sm:$0xff]
          %v430 = vld [vmem:[%s361 + $0xc0] sm:$0xff]
          %v431 = vld [vmem:[%s361 + $0xc8] sm:$0xff]
          %v432 = vld [vmem:[%s361 + $0xd0] sm:$0xff]
          %v433 = vld [vmem:[%s361 + $0xd8] sm:$0xff]
          %v434 = vld [vmem:[%s361 + $0xe0] sm:$0xff]
          %v435 = vld [vmem:[%s361 + $0xe8] sm:$0xff]
          %v436 = vld [vmem:[%s361 + $0xf0] sm:$0xff]
          %v437 = vld [vmem:[%s361 + $0xf8] sm:$0xff]
          %v438 = vld [vmem:[%s361 + $0x100] sm:$0xff]
          %v439 = vld [vmem:[%s361 + $0x108] sm:$0xff]
          %v440 = vld [vmem:[%s361 + $0x110] sm:$0xff]
          %v441 = vld [vmem:[%s361 + $0x118] sm:$0xff]
          %v442 = vld [vmem:[%s361 + $0x120] sm:$0xff]
          %v443 = vld [vmem:[%s361 + $0x128] sm:$0xff]
          %v444 = vld [vmem:[%s361 + $0x130] sm:$0xff]
          %v445 = vld [vmem:[%s361 + $0x138] sm:$0xff]
          %v446 = vld [vmem:[%s361 + $0x140] sm:$0xff]
          %v447 = vld [vmem:[%s361 + $0x148] sm:$0xff]
          %v448 = vld [vmem:[%s361 + $0x150] sm:$0xff]
          %v449 = vld [vmem:[%s361 + $0x158] sm:$0xff]
          %v450 = vld [vmem:[%s361 + $0x160] sm:$0xff]
          %v451 = vld [vmem:[%s361 + $0x168] sm:$0xff]
          %v452 = vld [vmem:[%s361 + $0x170] sm:$0xff]
          %v453 = vld [vmem:[%s361 + $0x178] sm:$0xff]
          %v454 = vld [vmem:[%s361 + $0x180] sm:$0xff]
          %v455 = vld [vmem:[%s361 + $0x188] sm:$0xff]
          %v456 = vld [vmem:[%s361 + $0x190] sm:$0xff]
          %v457 = vld [vmem:[%s361 + $0x198] sm:$0xff]
          %v458 = vld [vmem:[%s361 + $0x1a0] sm:$0xff]
          %v459 = vld [vmem:[%s361 + $0x1a8] sm:$0xff]
          %v460 = vld [vmem:[%s361 + $0x1b0] sm:$0xff]
          %v461 = vld [vmem:[%s361 + $0x1b8] sm:$0xff]
          %v462 = vld [vmem:[%s361 + $0x1c0] sm:$0xff]
          %v463 = vld [vmem:[%s361 + $0x1c8] sm:$0xff]
          %v464 = vld [vmem:[%s361 + $0x1d0] sm:$0xff]
          %v465 = vld [vmem:[%s361 + $0x1d8] sm:$0xff]
          %v466 = vld [vmem:[%s361 + $0x1e0] sm:$0xff]
          %v467 = vld [vmem:[%s361 + $0x1e8] sm:$0xff]
          %v468 = vld [vmem:[%s361 + $0x1f0] sm:$0xff]
          %v469 = vld [vmem:[%s361 + $0x1f8] sm:$0xff]
          %v470 = vld [vmem:[%s361 + $0x200] sm:$0xff]
          %v471 = vld [vmem:[%s361 + $0x208] sm:$0xff]
          %v472 = vld [vmem:[%s361 + $0x210] sm:$0xff]
          %v473 = vld [vmem:[%s361 + $0x218] sm:$0xff]
          %v474 = vld [vmem:[%s361 + $0x220] sm:$0xff]
          %v475 = vld [vmem:[%s361 + $0x228] sm:$0xff]
          %v476 = vld [vmem:[%s361 + $0x230] sm:$0xff]
          %v477 = vld [vmem:[%s361 + $0x238] sm:$0xff]
          %v478 = vld [vmem:[%s361 + $0x240] sm:$0xff]
          %v479 = vld [vmem:[%s361 + $0x248] sm:$0xff]
          %v480 = vld [vmem:[%s361 + $0x250] sm:$0xff]
          %v481 = vld [vmem:[%s361 + $0x258] sm:$0xff]
          %v482 = vld [vmem:[%s361 + $0x260] sm:$0xff]
          %v483 = vld [vmem:[%s361 + $0x268] sm:$0xff]
          %v484 = vld [vmem:[%s361 + $0x270] sm:$0xff]
          %v485 = vld [vmem:[%s361 + $0x278] sm:$0xff]
          %v486 = vld [vmem:[%s361 + $0x280] sm:$0xff]
          %v487 = vld [vmem:[%s361 + $0x288] sm:$0xff]
          %v488 = vld [vmem:[%s361 + $0x290] sm:$0xff]
          %v489 = vld [vmem:[%s361 + $0x298] sm:$0xff]
          %v490 = vld [vmem:[%s361 + $0x2a0] sm:$0xff]
          %v491 = vld [vmem:[%s361 + $0x2a8] sm:$0xff]
          %v492 = vld [vmem:[%s361 + $0x2b0] sm:$0xff]
          %v493 = vld [vmem:[%s361 + $0x2b8] sm:$0xff]
          %v494 = vld [vmem:[%s361 + $0x2c0] sm:$0xff]
          %v495 = vld [vmem:[%s361 + $0x2c8] sm:$0xff]
          %v496 = vld [vmem:[%s361 + $0x2d0] sm:$0xff]
          %v497 = vld [vmem:[%s361 + $0x2d8] sm:$0xff]
          %v498 = vld [vmem:[%s361 + $0x2e0] sm:$0xff]
          %v499 = vld [vmem:[%s361 + $0x2e8] sm:$0xff]
          %v500 = vld [vmem:[%s361 + $0x2f0] sm:$0xff]
          %v501 = vld [vmem:[%s361 + $0x2f8] sm:$0xff]
          %v502 = vld [vmem:[%s361 + $0x300] sm:$0xff]
          %v503 = vld [vmem:[%s361 + $0x308] sm:$0xff]
          %v504 = vld [vmem:[%s361 + $0x310] sm:$0xff]
          %v505 = vld [vmem:[%s361 + $0x318] sm:$0xff]
          %v506 = vld [vmem:[%s361 + $0x320] sm:$0xff]
          %v507 = vld [vmem:[%s361 + $0x328] sm:$0xff]
          %v508 = vld [vmem:[%s361 + $0x330] sm:$0xff]
          %v509 = vld [vmem:[%s361 + $0x338] sm:$0xff]
          %v510 = vld [vmem:[%s361 + $0x340] sm:$0xff]
          %v511 = vld [vmem:[%s361 + $0x348] sm:$0xff]
          %v512 = vld [vmem:[%s361 + $0x350] sm:$0xff]
          %v513 = vld [vmem:[%s361 + $0x358] sm:$0xff]
          %v514 = vld [vmem:[%s361 + $0x360] sm:$0xff]
          %v515 = vld [vmem:[%s361 + $0x368] sm:$0xff]
          %v516 = vld [vmem:[%s361 + $0x370] sm:$0xff]
          %v517 = vld [vmem:[%s361 + $0x378] sm:$0xff]
          %v518 = vld [vmem:[%s361 + $0x380] sm:$0xff]
          %v519 = vld [vmem:[%s361 + $0x388] sm:$0xff]
          %v520 = vld [vmem:[%s361 + $0x390] sm:$0xff]
          %v521 = vld [vmem:[%s361 + $0x398] sm:$0xff]
          %v522 = vld [vmem:[%s361 + $0x3a0] sm:$0xff]
          %v523 = vld [vmem:[%s361 + $0x3a8] sm:$0xff]
          %v524 = vld [vmem:[%s361 + $0x3b0] sm:$0xff]
          %v525 = vld [vmem:[%s361 + $0x3b8] sm:$0xff]
          %v526 = vld [vmem:[%s361 + $0x3c0] sm:$0xff]
          %v527 = vld [vmem:[%s361 + $0x3c8] sm:$0xff]
          %v528 = vld [vmem:[%s361 + $0x3d0] sm:$0xff]
          %v529 = vld [vmem:[%s361 + $0x3d8] sm:$0xff]
          %v530 = vld [vmem:[%s361 + $0x3e0] sm:$0xff]
          %vm531 = vcmask 261120
          %v533 = vsel %vm531, %v398, 0
          %v536 = vsel %vm531, %v399, 0
          %v539 = vsel %vm531, %v400, 0
          %v542 = vsel %vm531, %v401, 0
          %v545 = vsel %vm531, %v402, 0
          %v548 = vsel %vm531, %v403, 0
          %v551 = vsel %vm531, %v404, 0
          %v554 = vsel %vm531, %v405, 0
          %v557 = vsel %vm531, %v406, 0
          %v560 = vsel %vm531, %v407, 0
          %v563 = vsel %vm531, %v408, 0
          %v566 = vsel %vm531, %v409, 0
          %v569 = vsel %vm531, %v410, 0
          %v572 = vsel %vm531, %v411, 0
          %v575 = vsel %vm531, %v412, 0
          %v578 = vsel %vm531, %v413, 0
          %v581 = vsel %vm531, %v414, 0
          %v584 = vsel %vm531, %v415, 0
          %v587 = vsel %vm531, %v416, 0
          %v590 = vsel %vm531, %v417, 0
          %v593 = vsel %vm531, %v418, 0
          %v596 = vsel %vm531, %v419, 0
          %v599 = vsel %vm531, %v420, 0
          %v602 = vsel %vm531, %v421, 0
          %v605 = vsel %vm531, %v422, 0
          %v608 = vsel %vm531, %v423, 0
          %v611 = vsel %vm531, %v424, 0
          %v614 = vsel %vm531, %v425, 0
          %v617 = vsel %vm531, %v426, 0
          %v620 = vsel %vm531, %v427, 0
          %v623 = vsel %vm531, %v428, 0
          %v626 = vsel %vm531, %v429, 0
          %v629 = vsel %vm531, %v430, 0
          %v632 = vsel %vm531, %v431, 0
          %v635 = vsel %vm531, %v432, 0
          %v638 = vsel %vm531, %v433, 0
          %v641 = vsel %vm531, %v434, 0
          %v644 = vsel %vm531, %v435, 0
          %v647 = vsel %vm531, %v436, 0
          %v650 = vsel %vm531, %v437, 0
          %v653 = vsel %vm531, %v438, 0
          %v656 = vsel %vm531, %v439, 0
          %v659 = vsel %vm531, %v440, 0
          %v662 = vsel %vm531, %v441, 0
          %v665 = vsel %vm531, %v442, 0
          %v668 = vsel %vm531, %v443, 0
          %v671 = vsel %vm531, %v444, 0
          %v674 = vsel %vm531, %v445, 0
          %v677 = vsel %vm531, %v446, 0
          %v680 = vsel %vm531, %v447, 0
          %v683 = vsel %vm531, %v448, 0
          %v686 = vsel %vm531, %v449, 0
          %v689 = vsel %vm531, %v450, 0
          %v692 = vsel %vm531, %v451, 0
          %v695 = vsel %vm531, %v452, 0
          %v698 = vsel %vm531, %v453, 0
          %v701 = vsel %vm531, %v454, 0
          %v704 = vsel %vm531, %v455, 0
          %v707 = vsel %vm531, %v456, 0
          %v710 = vsel %vm531, %v457, 0
          %v713 = vsel %vm531, %v458, 0
          %v716 = vsel %vm531, %v459, 0
          %v719 = vsel %vm531, %v460, 0
          %v722 = vsel %vm531, %v461, 0
          %v725 = vsel %vm531, %v462, 0
          %v728 = vsel %vm531, %v463, 0
          %v731 = vsel %vm531, %v464, 0
          %v734 = vsel %vm531, %v465, 0
          %v737 = vsel %vm531, %v466, 0
          %v740 = vsel %vm531, %v467, 0
          %v743 = vsel %vm531, %v468, 0
          %v746 = vsel %vm531, %v469, 0
          %v749 = vsel %vm531, %v470, 0
          %v752 = vsel %vm531, %v471, 0
          %v755 = vsel %vm531, %v472, 0
          %v758 = vsel %vm531, %v473, 0
          %v761 = vsel %vm531, %v474, 0
          %v764 = vsel %vm531, %v475, 0
          %v767 = vsel %vm531, %v476, 0
          %v770 = vsel %vm531, %v477, 0
          %v773 = vsel %vm531, %v478, 0
          %v776 = vsel %vm531, %v479, 0
          %v779 = vsel %vm531, %v480, 0
          %v782 = vsel %vm531, %v481, 0
          %v785 = vsel %vm531, %v482, 0
          %v788 = vsel %vm531, %v483, 0
          %v791 = vsel %vm531, %v484, 0
          %v794 = vsel %vm531, %v485, 0
          %v797 = vsel %vm531, %v486, 0
          %v800 = vsel %vm531, %v487, 0
          %v803 = vsel %vm531, %v488, 0
          %v806 = vsel %vm531, %v489, 0
          %v809 = vsel %vm531, %v490, 0
          %v812 = vsel %vm531, %v491, 0
          %v815 = vsel %vm531, %v492, 0
          %v818 = vsel %vm531, %v493, 0
          %v821 = vsel %vm531, %v494, 0
          %v824 = vsel %vm531, %v495, 0
          %v827 = vsel %vm531, %v496, 0
          %v830 = vsel %vm531, %v497, 0
          %v833 = vsel %vm531, %v498, 0
          %v836 = vsel %vm531, %v499, 0
          %v839 = vsel %vm531, %v500, 0
          %v842 = vsel %vm531, %v501, 0
          %v845 = vsel %vm531, %v502, 0
          %v848 = vsel %vm531, %v503, 0
          %v851 = vsel %vm531, %v504, 0
          %v854 = vsel %vm531, %v505, 0
          %v857 = vsel %vm531, %v506, 0
          %v860 = vsel %vm531, %v507, 0
          %v863 = vsel %vm531, %v508, 0
          %v866 = vsel %vm531, %v509, 0
          %v869 = vsel %vm531, %v510, 0
          %v872 = vsel %vm531, %v511, 0
          %v875 = vsel %vm531, %v512, 0
          %v878 = vsel %vm531, %v513, 0
          %v881 = vsel %vm531, %v514, 0
          %v884 = vsel %vm531, %v515, 0
          %v887 = vsel %vm531, %v516, 0
          %v890 = vsel %vm531, %v517, 0
          %v893 = vsel %vm531, %v518, 0
          %v896 = vsel %vm531, %v519, 0
          %v899 = vsel %vm531, %v520, 0
          %v902 = vsel %vm531, %v521, 0
          %v905 = vsel %vm531, %v522, 0
          %v908 = vsel %vm531, %v523, 0
          %v911 = vsel %vm531, %v524, 0
          %v914 = vsel %vm531, %v525, 0
          %v917 = vsel %vm531, %v526, 0
          %v920 = vsel %vm531, %v527, 0
          %v923 = vsel %vm531, %v528, 0
          %v926 = vsel %vm531, %v529, 0
          %v929 = vsel %vm531, %v530, 0
          %931 = vmatpush.xpose.msra.mxu0 %v602
          %932 = vmatpush.xpose.msra.mxu0 %v599
          %933 = vmatpush.xpose.msra.mxu0 %v596
          %934 = vmatpush.xpose.msra.mxu0 %v593
          %935 = vmatpush.xpose.msra.mxu0 %v590
          %936 = vmatpush.xpose.msra.mxu0 %v587
          %937 = vmatpush.xpose.msra.mxu0 %v584
          %938 = vmatpush.xpose.msra.mxu0 %v581
          %939 = vmatpush.xpose.msra.mxu0 %v578
          %940 = vmatpush.xpose.msra.mxu0 %v575
          %941 = vmatpush.xpose.msra.mxu0 %v572
          %942 = vmatpush.xpose.msra.mxu0 %v569
          %943 = vmatpush.xpose.msra.mxu0 %v566
          %944 = vmatpush.xpose.msra.mxu0 %v563
          %945 = vmatpush.xpose.msra.mxu0 %v560
          %946 = vmatpush.xpose.msra.mxu0 %v557
          %947 = vmatmul.f32.gmra.mxu0 %v533
          %v948 = vpop.f32.mrf.mxu0
          %v949 = vadd.f32 0.0, %v948
          %950 = vmatmul.f32.gmra.mxu0 %v536
          %v951 = vpop.f32.mrf.mxu0
          %v952 = vadd.f32 0.0, %v951
          %953 = vmatmul.f32.gmra.mxu0 %v539
          %v954 = vpop.f32.mrf.mxu0
          %v955 = vadd.f32 0.0, %v954
          %956 = vmatmul.f32.gmra.mxu0 %v542
          %v957 = vpop.f32.mrf.mxu0
          %v958 = vadd.f32 0.0, %v957
          %959 = vmatmul.f32.gmra.mxu0 %v545
          %v960 = vpop.f32.mrf.mxu0
          %v961 = vadd.f32 0.0, %v960
          %962 = vmatmul.f32.gmra.mxu0 %v548
          %v963 = vpop.f32.mrf.mxu0
          %v964 = vadd.f32 0.0, %v963
          %965 = vmatmul.f32.gmra.mxu0 %v551
          %v966 = vpop.f32.mrf.mxu0
          %v967 = vadd.f32 0.0, %v966
          %968 = vmatmul.f32.gmra.mxu0 %v554
          %v969 = vpop.f32.mrf.mxu0
          %v970 = vadd.f32 0.0, %v969
          %971 = vdwg.mxu0
          %972 = vmatpush.xpose.msra.mxu0 %v650
          %973 = vmatpush.xpose.msra.mxu0 %v647
          %974 = vmatpush.xpose.msra.mxu0 %v644
          %975 = vmatpush.xpose.msra.mxu0 %v641
          %976 = vmatpush.xpose.msra.mxu0 %v638
          %977 = vmatpush.xpose.msra.mxu0 %v635
          %978 = vmatpush.xpose.msra.mxu0 %v632
          %979 = vmatpush.xpose.msra.mxu0 %v629
          %980 = vmatpush.xpose.msra.mxu0 %v626
          %981 = vmatpush.xpose.msra.mxu0 %v623
          %982 = vmatpush.xpose.msra.mxu0 %v620
          %983 = vmatpush.xpose.msra.mxu0 %v617
          %984 = vmatpush.xpose.msra.mxu0 %v614
          %985 = vmatpush.xpose.msra.mxu0 %v611
          %986 = vmatpush.xpose.msra.mxu0 %v608
          %987 = vmatpush.xpose.msra.mxu0 %v605
          %988 = vmatmul.f32.gmra.mxu0 %v533
          %v989 = vpop.f32.mrf.mxu0
          %v990 = vadd.f32 0.0, %v989
          %991 = vmatmul.f32.gmra.mxu0 %v536
          %v992 = vpop.f32.mrf.mxu0
          %v993 = vadd.f32 0.0, %v992
          %994 = vmatmul.f32.gmra.mxu0 %v539
          %v995 = vpop.f32.mrf.mxu0
          %v996 = vadd.f32 0.0, %v995
          %997 = vmatmul.f32.gmra.mxu0 %v542
          %v998 = vpop.f32.mrf.mxu0
          %v999 = vadd.f32 0.0, %v998
          %1000 = vmatmul.f32.gmra.mxu0 %v545
          %v1001 = vpop.f32.mrf.mxu0
          %v1002 = vadd.f32 0.0, %v1001
          %1003 = vmatmul.f32.gmra.mxu0 %v548
          %v1004 = vpop.f32.mrf.mxu0
          %v1005 = vadd.f32 0.0, %v1004
          %1006 = vmatmul.f32.gmra.mxu0 %v551
          %v1007 = vpop.f32.mrf.mxu0
          %v1008 = vadd.f32 0.0, %v1007
          %1009 = vmatmul.f32.gmra.mxu0 %v554
          %v1010 = vpop.f32.mrf.mxu0
          %v1011 = vadd.f32 0.0, %v1010
          %1012 = vdwg.mxu0
          %1013 = vmatpush.xpose.msra.mxu0 %v698
          %1014 = vmatpush.xpose.msra.mxu0 %v695
          %1015 = vmatpush.xpose.msra.mxu0 %v692
          %1016 = vmatpush.xpose.msra.mxu0 %v689
          %1017 = vmatpush.xpose.msra.mxu0 %v686
          %1018 = vmatpush.xpose.msra.mxu0 %v683
          %1019 = vmatpush.xpose.msra.mxu0 %v680
          %1020 = vmatpush.xpose.msra.mxu0 %v677
          %1021 = vmatpush.xpose.msra.mxu0 %v674
          %1022 = vmatpush.xpose.msra.mxu0 %v671
          %1023 = vmatpush.xpose.msra.mxu0 %v668
          %1024 = vmatpush.xpose.msra.mxu0 %v665
          %1025 = vmatpush.xpose.msra.mxu0 %v662
          %1026 = vmatpush.xpose.msra.mxu0 %v659
          %1027 = vmatpush.xpose.msra.mxu0 %v656
          %1028 = vmatpush.xpose.msra.mxu0 %v653
          %1029 = vmatmul.f32.gmra.mxu0 %v533
          %v1030 = vpop.f32.mrf.mxu0
          %v1031 = vadd.f32 0.0, %v1030
          %1032 = vmatmul.f32.gmra.mxu0 %v536
          %v1033 = vpop.f32.mrf.mxu0
          %v1034 = vadd.f32 0.0, %v1033
          %1035 = vmatmul.f32.gmra.mxu0 %v539
          %v1036 = vpop.f32.mrf.mxu0
          %v1037 = vadd.f32 0.0, %v1036
          %1038 = vmatmul.f32.gmra.mxu0 %v542
          %v1039 = vpop.f32.mrf.mxu0
          %v1040 = vadd.f32 0.0, %v1039
          %1041 = vmatmul.f32.gmra.mxu0 %v545
          %v1042 = vpop.f32.mrf.mxu0
          %v1043 = vadd.f32 0.0, %v1042
          %1044 = vmatmul.f32.gmra.mxu0 %v548
          %v1045 = vpop.f32.mrf.mxu0
          %v1046 = vadd.f32 0.0, %v1045
          %1047 = vmatmul.f32.gmra.mxu0 %v551
          %v1048 = vpop.f32.mrf.mxu0
          %v1049 = vadd.f32 0.0, %v1048
          %1050 = vmatmul.f32.gmra.mxu0 %v554
          %v1051 = vpop.f32.mrf.mxu0
          %v1052 = vadd.f32 0.0, %v1051
          %1053 = vdwg.mxu0
          %1054 = vmatpush.xpose.msra.mxu0 %v746
          %1055 = vmatpush.xpose.msra.mxu0 %v743
          %1056 = vmatpush.xpose.msra.mxu0 %v740
          %1057 = vmatpush.xpose.msra.mxu0 %v737
          %1058 = vmatpush.xpose.msra.mxu0 %v734
          %1059 = vmatpush.xpose.msra.mxu0 %v731
          %1060 = vmatpush.xpose.msra.mxu0 %v728
          %1061 = vmatpush.xpose.msra.mxu0 %v725
          %1062 = vmatpush.xpose.msra.mxu0 %v722
          %1063 = vmatpush.xpose.msra.mxu0 %v719
          %1064 = vmatpush.xpose.msra.mxu0 %v716
          %1065 = vmatpush.xpose.msra.mxu0 %v713
          %1066 = vmatpush.xpose.msra.mxu0 %v710
          %1067 = vmatpush.xpose.msra.mxu0 %v707
          %1068 = vmatpush.xpose.msra.mxu0 %v704
          %1069 = vmatpush.xpose.msra.mxu0 %v701
          %1070 = vmatmul.f32.gmra.mxu0 %v533
          %v1071 = vpop.f32.mrf.mxu0
          %v1072 = vadd.f32 0.0, %v1071
          %1073 = vmatmul.f32.gmra.mxu0 %v536
          %v1074 = vpop.f32.mrf.mxu0
          %v1075 = vadd.f32 0.0, %v1074
          %1076 = vmatmul.f32.gmra.mxu0 %v539
          %v1077 = vpop.f32.mrf.mxu0
          %v1078 = vadd.f32 0.0, %v1077
          %1079 = vmatmul.f32.gmra.mxu0 %v542
          %v1080 = vpop.f32.mrf.mxu0
          %v1081 = vadd.f32 0.0, %v1080
          %1082 = vmatmul.f32.gmra.mxu0 %v545
          %v1083 = vpop.f32.mrf.mxu0
          %v1084 = vadd.f32 0.0, %v1083
          %1085 = vmatmul.f32.gmra.mxu0 %v548
          %v1086 = vpop.f32.mrf.mxu0
          %v1087 = vadd.f32 0.0, %v1086
          %1088 = vmatmul.f32.gmra.mxu0 %v551
          %v1089 = vpop.f32.mrf.mxu0
          %v1090 = vadd.f32 0.0, %v1089
          %1091 = vmatmul.f32.gmra.mxu0 %v554
          %v1092 = vpop.f32.mrf.mxu0
          %v1093 = vadd.f32 0.0, %v1092
          %1094 = vdwg.mxu0
          %1095 = vmatpush.xpose.msra.mxu0 %v794
          %1096 = vmatpush.xpose.msra.mxu0 %v791
          %1097 = vmatpush.xpose.msra.mxu0 %v788
          %1098 = vmatpush.xpose.msra.mxu0 %v785
          %1099 = vmatpush.xpose.msra.mxu0 %v782
          %1100 = vmatpush.xpose.msra.mxu0 %v779
          %1101 = vmatpush.xpose.msra.mxu0 %v776
          %1102 = vmatpush.xpose.msra.mxu0 %v773
          %1103 = vmatpush.xpose.msra.mxu0 %v770
          %1104 = vmatpush.xpose.msra.mxu0 %v767
          %1105 = vmatpush.xpose.msra.mxu0 %v764
          %1106 = vmatpush.xpose.msra.mxu0 %v761
          %1107 = vmatpush.xpose.msra.mxu0 %v758
          %1108 = vmatpush.xpose.msra.mxu0 %v755
          %1109 = vmatpush.xpose.msra.mxu0 %v752
          %1110 = vmatpush.xpose.msra.mxu0 %v749
          %1111 = vmatmul.f32.gmra.mxu0 %v533
          %v1112 = vpop.f32.mrf.mxu0
          %v1113 = vadd.f32 0.0, %v1112
          %1114 = vmatmul.f32.gmra.mxu0 %v536
          %v1115 = vpop.f32.mrf.mxu0
          %v1116 = vadd.f32 0.0, %v1115
          %1117 = vmatmul.f32.gmra.mxu0 %v539
          %v1118 = vpop.f32.mrf.mxu0
          %v1119 = vadd.f32 0.0, %v1118
          %1120 = vmatmul.f32.gmra.mxu0 %v542
          %v1121 = vpop.f32.mrf.mxu0
          %v1122 = vadd.f32 0.0, %v1121
          %1123 = vmatmul.f32.gmra.mxu0 %v545
          %v1124 = vpop.f32.mrf.mxu0
          %v1125 = vadd.f32 0.0, %v1124
          %1126 = vmatmul.f32.gmra.mxu0 %v548
          %v1127 = vpop.f32.mrf.mxu0
          %v1128 = vadd.f32 0.0, %v1127
          %1129 = vmatmul.f32.gmra.mxu0 %v551
          %v1130 = vpop.f32.mrf.mxu0
          %v1131 = vadd.f32 0.0, %v1130
          %1132 = vmatmul.f32.gmra.mxu0 %v554
          %v1133 = vpop.f32.mrf.mxu0
          %v1134 = vadd.f32 0.0, %v1133
          %1135 = vdwg.mxu0
          %1136 = vmatpush.xpose.msra.mxu0 %v842
          %1137 = vmatpush.xpose.msra.mxu0 %v839
          %1138 = vmatpush.xpose.msra.mxu0 %v836
          %1139 = vmatpush.xpose.msra.mxu0 %v833
          %1140 = vmatpush.xpose.msra.mxu0 %v830
          %1141 = vmatpush.xpose.msra.mxu0 %v827
          %1142 = vmatpush.xpose.msra.mxu0 %v824
          %1143 = vmatpush.xpose.msra.mxu0 %v821
          %1144 = vmatpush.xpose.msra.mxu0 %v818
          %1145 = vmatpush.xpose.msra.mxu0 %v815
          %1146 = vmatpush.xpose.msra.mxu0 %v812
          %1147 = vmatpush.xpose.msra.mxu0 %v809
          %1148 = vmatpush.xpose.msra.mxu0 %v806
          %1149 = vmatpush.xpose.msra.mxu0 %v803
          %1150 = vmatpush.xpose.msra.mxu0 %v800
          %1151 = vmatpush.xpose.msra.mxu0 %v797
          %1152 = vmatmul.f32.gmra.mxu0 %v533
          %v1153 = vpop.f32.mrf.mxu0
          %v1154 = vadd.f32 0.0, %v1153
          %1155 = vmatmul.f32.gmra.mxu0 %v536
          %v1156 = vpop.f32.mrf.mxu0
          %v1157 = vadd.f32 0.0, %v1156
          %1158 = vmatmul.f32.gmra.mxu0 %v539
          %v1159 = vpop.f32.mrf.mxu0
          %v1160 = vadd.f32 0.0, %v1159
          %1161 = vmatmul.f32.gmra.mxu0 %v542
          %v1162 = vpop.f32.mrf.mxu0
          %v1163 = vadd.f32 0.0, %v1162
          %1164 = vmatmul.f32.gmra.mxu0 %v545
          %v1165 = vpop.f32.mrf.mxu0
          %v1166 = vadd.f32 0.0, %v1165
          %1167 = vmatmul.f32.gmra.mxu0 %v548
          %v1168 = vpop.f32.mrf.mxu0
          %v1169 = vadd.f32 0.0, %v1168
          %1170 = vmatmul.f32.gmra.mxu0 %v551
          %v1171 = vpop.f32.mrf.mxu0
          %v1172 = vadd.f32 0.0, %v1171
          %1173 = vmatmul.f32.gmra.mxu0 %v554
          %v1174 = vpop.f32.mrf.mxu0
          %v1175 = vadd.f32 0.0, %v1174
          %1176 = vdwg.mxu0
          %1177 = vmatpush.xpose.msra.mxu0 %v890
          %1178 = vmatpush.xpose.msra.mxu0 %v887
          %1179 = vmatpush.xpose.msra.mxu0 %v884
          %1180 = vmatpush.xpose.msra.mxu0 %v881
          %1181 = vmatpush.xpose.msra.mxu0 %v878
          %1182 = vmatpush.xpose.msra.mxu0 %v875
          %1183 = vmatpush.xpose.msra.mxu0 %v872
          %1184 = vmatpush.xpose.msra.mxu0 %v869
          %1185 = vmatpush.xpose.msra.mxu0 %v866
          %1186 = vmatpush.xpose.msra.mxu0 %v863
          %1187 = vmatpush.xpose.msra.mxu0 %v860
          %1188 = vmatpush.xpose.msra.mxu0 %v857
          %1189 = vmatpush.xpose.msra.mxu0 %v854
          %1190 = vmatpush.xpose.msra.mxu0 %v851
          %1191 = vmatpush.xpose.msra.mxu0 %v848
          %1192 = vmatpush.xpose.msra.mxu0 %v845
          %1193 = vmatmul.f32.gmra.mxu0 %v533
          %v1194 = vpop.f32.mrf.mxu0
          %v1195 = vadd.f32 0.0, %v1194
          %1196 = vmatmul.f32.gmra.mxu0 %v536
          %v1197 = vpop.f32.mrf.mxu0
          %v1198 = vadd.f32 0.0, %v1197
          %1199 = vmatmul.f32.gmra.mxu0 %v539
          %v1200 = vpop.f32.mrf.mxu0
          %v1201 = vadd.f32 0.0, %v1200
          %1202 = vmatmul.f32.gmra.mxu0 %v542
          %v1203 = vpop.f32.mrf.mxu0
          %v1204 = vadd.f32 0.0, %v1203
          %1205 = vmatmul.f32.gmra.mxu0 %v545
          %v1206 = vpop.f32.mrf.mxu0
          %v1207 = vadd.f32 0.0, %v1206
          %1208 = vmatmul.f32.gmra.mxu0 %v548
          %v1209 = vpop.f32.mrf.mxu0
          %v1210 = vadd.f32 0.0, %v1209
          %1211 = vmatmul.f32.gmra.mxu0 %v551
          %v1212 = vpop.f32.mrf.mxu0
          %v1213 = vadd.f32 0.0, %v1212
          %1214 = vmatmul.f32.gmra.mxu0 %v554
          %v1215 = vpop.f32.mrf.mxu0
          %v1216 = vadd.f32 0.0, %v1215
          %1217 = vdwg.mxu0
          %1218 = vmatpush.xpose.msra.mxu0 0.0
          %1219 = vmatpush.xpose.msra.mxu0 0.0
          %1220 = vmatpush.xpose.msra.mxu0 0.0
          %1221 = vmatpush.xpose.msra.mxu0 %v929
          %1222 = vmatpush.xpose.msra.mxu0 %v926
          %1223 = vmatpush.xpose.msra.mxu0 %v923
          %1224 = vmatpush.xpose.msra.mxu0 %v920
          %1225 = vmatpush.xpose.msra.mxu0 %v917
          %1226 = vmatpush.xpose.msra.mxu0 %v914
          %1227 = vmatpush.xpose.msra.mxu0 %v911
          %1228 = vmatpush.xpose.msra.mxu0 %v908
          %1229 = vmatpush.xpose.msra.mxu0 %v905
          %1230 = vmatpush.xpose.msra.mxu0 %v902
          %1231 = vmatpush.xpose.msra.mxu0 %v899
          %1232 = vmatpush.xpose.msra.mxu0 %v896
          %1233 = vmatpush.xpose.msra.mxu0 %v893
          %1234 = vmatmul.f32.gmra.mxu0 %v533
          %v1235 = vpop.f32.mrf.mxu0
          %v1236 = vadd.f32 0.0, %v1235
          %1237 = vmatmul.f32.gmra.mxu0 %v536
          %v1238 = vpop.f32.mrf.mxu0
          %v1239 = vadd.f32 0.0, %v1238
          %1240 = vmatmul.f32.gmra.mxu0 %v539
          %v1241 = vpop.f32.mrf.mxu0
          %v1242 = vadd.f32 0.0, %v1241
          %1243 = vmatmul.f32.gmra.mxu0 %v542
          %v1244 = vpop.f32.mrf.mxu0
          %v1245 = vadd.f32 0.0, %v1244
          %1246 = vmatmul.f32.gmra.mxu0 %v545
          %v1247 = vpop.f32.mrf.mxu0
          %v1248 = vadd.f32 0.0, %v1247
          %1249 = vmatmul.f32.gmra.mxu0 %v548
          %v1250 = vpop.f32.mrf.mxu0
          %v1251 = vadd.f32 0.0, %v1250
          %1252 = vmatmul.f32.gmra.mxu0 %v551
          %v1253 = vpop.f32.mrf.mxu0
          %v1254 = vadd.f32 0.0, %v1253
          %1255 = vmatmul.f32.gmra.mxu0 %v554
          %v1256 = vpop.f32.mrf.mxu0
          %v1257 = vadd.f32 0.0, %v1256
          %1258 = vdwg.mxu0
          %s1259 = smul.u32 %s30, 64
          %s1260 = smul.addr %s1259, 8
          %s1261 = scalar_lea.vmem [#allocation2], %s1260
          %1262 = vst [vmem:[%s1261] sm:$0xff] %v949
          %1263 = vst [vmem:[%s1261 + $0x8] sm:$0xff] %v990
          %1264 = vst [vmem:[%s1261 + $0x10] sm:$0xff] %v1031
          %1265 = vst [vmem:[%s1261 + $0x18] sm:$0xff] %v1072
          %1266 = vst [vmem:[%s1261 + $0x20] sm:$0xff] %v1113
          %1267 = vst [vmem:[%s1261 + $0x28] sm:$0xff] %v1154
          %1268 = vst [vmem:[%s1261 + $0x30] sm:$0xff] %v1195
          %vm1269 = vcmask 850944
          %1270 = vst.msk [vmem:[%s1261 + $0x38] sm:$0xff] %vm1269, %v1236
          %1271 = vst [vmem:[%s1261 + $0x40] sm:$0xff] %v952
          %1272 = vst [vmem:[%s1261 + $0x48] sm:$0xff] %v993
          %1273 = vst [vmem:[%s1261 + $0x50] sm:$0xff] %v1034
          %1274 = vst [vmem:[%s1261 + $0x58] sm:$0xff] %v1075
          %1275 = vst [vmem:[%s1261 + $0x60] sm:$0xff] %v1116
          %1276 = vst [vmem:[%s1261 + $0x68] sm:$0xff] %v1157
          %1277 = vst [vmem:[%s1261 + $0x70] sm:$0xff] %v1198
          %1278 = vst.msk [vmem:[%s1261 + $0x78] sm:$0xff] %vm1269, %v1239
          %1279 = vst [vmem:[%s1261 + $0x80] sm:$0xff] %v955
          %1280 = vst [vmem:[%s1261 + $0x88] sm:$0xff] %v996
          %1281 = vst [vmem:[%s1261 + $0x90] sm:$0xff] %v1037
          %1282 = vst [vmem:[%s1261 + $0x98] sm:$0xff] %v1078
          %1283 = vst [vmem:[%s1261 + $0xa0] sm:$0xff] %v1119
          %1284 = vst [vmem:[%s1261 + $0xa8] sm:$0xff] %v1160
          %1285 = vst [vmem:[%s1261 + $0xb0] sm:$0xff] %v1201
          %1286 = vst.msk [vmem:[%s1261 + $0xb8] sm:$0xff] %vm1269, %v1242
          %1287 = vst [vmem:[%s1261 + $0xc0] sm:$0xff] %v958
          %1288 = vst [vmem:[%s1261 + $0xc8] sm:$0xff] %v999
          %1289 = vst [vmem:[%s1261 + $0xd0] sm:$0xff] %v1040
          %1290 = vst [vmem:[%s1261 + $0xd8] sm:$0xff] %v1081
          %1291 = vst [vmem:[%s1261 + $0xe0] sm:$0xff] %v1122
          %1292 = vst [vmem:[%s1261 + $0xe8] sm:$0xff] %v1163
          %1293 = vst [vmem:[%s1261 + $0xf0] sm:$0xff] %v1204
          %1294 = vst.msk [vmem:[%s1261 + $0xf8] sm:$0xff] %vm1269, %v1245
          %1295 = vst [vmem:[%s1261 + $0x100] sm:$0xff] %v961
          %1296 = vst [vmem:[%s1261 + $0x108] sm:$0xff] %v1002
          %1297 = vst [vmem:[%s1261 + $0x110] sm:$0xff] %v1043
          %1298 = vst [vmem:[%s1261 + $0x118] sm:$0xff] %v1084
          %1299 = vst [vmem:[%s1261 + $0x120] sm:$0xff] %v1125
          %1300 = vst [vmem:[%s1261 + $0x128] sm:$0xff] %v1166
          %1301 = vst [vmem:[%s1261 + $0x130] sm:$0xff] %v1207
          %1302 = vst.msk [vmem:[%s1261 + $0x138] sm:$0xff] %vm1269, %v1248
          %1303 = vst [vmem:[%s1261 + $0x140] sm:$0xff] %v964
          %1304 = vst [vmem:[%s1261 + $0x148] sm:$0xff] %v1005
          %1305 = vst [vmem:[%s1261 + $0x150] sm:$0xff] %v1046
          %1306 = vst [vmem:[%s1261 + $0x158] sm:$0xff] %v1087
          %1307 = vst [vmem:[%s1261 + $0x160] sm:$0xff] %v1128
          %1308 = vst [vmem:[%s1261 + $0x168] sm:$0xff] %v1169
          %1309 = vst [vmem:[%s1261 + $0x170] sm:$0xff] %v1210
          %1310 = vst.msk [vmem:[%s1261 + $0x178] sm:$0xff] %vm1269, %v1251
          %1311 = vst [vmem:[%s1261 + $0x180] sm:$0xff] %v967
          %1312 = vst [vmem:[%s1261 + $0x188] sm:$0xff] %v1008
          %1313 = vst [vmem:[%s1261 + $0x190] sm:$0xff] %v1049
          %1314 = vst [vmem:[%s1261 + $0x198] sm:$0xff] %v1090
          %1315 = vst [vmem:[%s1261 + $0x1a0] sm:$0xff] %v1131
          %1316 = vst [vmem:[%s1261 + $0x1a8] sm:$0xff] %v1172
          %1317 = vst [vmem:[%s1261 + $0x1b0] sm:$0xff] %v1213
          %1318 = vst.msk [vmem:[%s1261 + $0x1b8] sm:$0xff] %vm1269, %v1254
          %1319 = vst [vmem:[%s1261 + $0x1c0] sm:$0xff] %v970
          %1320 = vst [vmem:[%s1261 + $0x1c8] sm:$0xff] %v1011
          %1321 = vst [vmem:[%s1261 + $0x1d0] sm:$0xff] %v1052
          %1322 = vst [vmem:[%s1261 + $0x1d8] sm:$0xff] %v1093
          %1323 = vst [vmem:[%s1261 + $0x1e0] sm:$0xff] %v1134
          %1324 = vst [vmem:[%s1261 + $0x1e8] sm:$0xff] %v1175
          %1325 = vst [vmem:[%s1261 + $0x1f0] sm:$0xff] %v1216
          %1326 = vst.msk [vmem:[%s1261 + $0x1f8] sm:$0xff] %vm1269, %v1257
          %v1327 = vld [vmem:[#allocation4] sm:$0xff]
          %v1328 = vld [vmem:[#allocation4 + $0x8] sm:$0xff]
          %v1329 = vld [vmem:[#allocation4 + $0x10] sm:$0xff]
          %v1330 = vld [vmem:[#allocation4 + $0x18] sm:$0xff]
          %v1331 = vld [vmem:[#allocation4 + $0x20] sm:$0xff]
          %v1332 = vld [vmem:[#allocation4 + $0x28] sm:$0xff]
          %v1333 = vld [vmem:[#allocation4 + $0x30] sm:$0xff]
          %v1334 = vld [vmem:[#allocation4 + $0x38] sm:$0xff]
          %v1335 = vadd.f32 %v949, %v990
          %v1336 = vadd.f32 %v1335, %v1031
          %v1337 = vadd.f32 %v1336, %v1072
          %v1338 = vadd.f32 %v1337, %v1113
          %v1339 = vadd.f32 %v1338, %v1154
          %v1340 = vadd.f32 %v1339, %v1195
          %v1341 = vsel %vm1269, %v1236, 0.0
          %v1342 = vadd.f32 %v1340, %v1341
          %1343 = vadd.xlane.f32.xlu0 %v1342
          %v1344 = vpop.xlane.xlu0 %1343
          %v1345 = vadd.f32 %v952, %v993
          %v1346 = vadd.f32 %v1345, %v1034
          %v1347 = vadd.f32 %v1346, %v1075
          %v1348 = vadd.f32 %v1347, %v1116
          %v1349 = vadd.f32 %v1348, %v1157
          %v1350 = vadd.f32 %v1349, %v1198
          %v1351 = vsel %vm1269, %v1239, 0.0
          %v1352 = vadd.f32 %v1350, %v1351
          %1353 = vadd.xlane.f32.xlu0 %v1352
          %v1354 = vpop.xlane.xlu0 %1353
          %v1355 = vadd.f32 %v955, %v996
          %v1356 = vadd.f32 %v1355, %v1037
          %v1357 = vadd.f32 %v1356, %v1078
          %v1358 = vadd.f32 %v1357, %v1119
          %v1359 = vadd.f32 %v1358, %v1160
          %v1360 = vadd.f32 %v1359, %v1201
          %v1361 = vsel %vm1269, %v1242, 0.0
          %v1362 = vadd.f32 %v1360, %v1361
          %1363 = vadd.xlane.f32.xlu0 %v1362
          %v1364 = vpop.xlane.xlu0 %1363
          %v1365 = vadd.f32 %v958, %v999
          %v1366 = vadd.f32 %v1365, %v1040
          %v1367 = vadd.f32 %v1366, %v1081
          %v1368 = vadd.f32 %v1367, %v1122
          %v1369 = vadd.f32 %v1368, %v1163
          %v1370 = vadd.f32 %v1369, %v1204
          %v1371 = vsel %vm1269, %v1245, 0.0
          %v1372 = vadd.f32 %v1370, %v1371
          %1373 = vadd.xlane.f32.xlu0 %v1372
          %v1374 = vpop.xlane.xlu0 %1373
          %v1375 = vadd.f32 %v961, %v1002
          %v1376 = vadd.f32 %v1375, %v1043
          %v1377 = vadd.f32 %v1376, %v1084
          %v1378 = vadd.f32 %v1377, %v1125
          %v1379 = vadd.f32 %v1378, %v1166
          %v1380 = vadd.f32 %v1379, %v1207
          %v1381 = vsel %vm1269, %v1248, 0.0
          %v1382 = vadd.f32 %v1380, %v1381
          %1383 = vadd.xlane.f32.xlu0 %v1382
          %v1384 = vpop.xlane.xlu0 %1383
          %v1385 = vadd.f32 %v964, %v1005
          %v1386 = vadd.f32 %v1385, %v1046
          %v1387 = vadd.f32 %v1386, %v1087
          %v1388 = vadd.f32 %v1387, %v1128
          %v1389 = vadd.f32 %v1388, %v1169
          %v1390 = vadd.f32 %v1389, %v1210
          %v1391 = vsel %vm1269, %v1251, 0.0
          %v1392 = vadd.f32 %v1390, %v1391
          %1393 = vadd.xlane.f32.xlu0 %v1392
          %v1394 = vpop.xlane.xlu0 %1393
          %v1395 = vadd.f32 %v967, %v1008
          %v1396 = vadd.f32 %v1395, %v1049
          %v1397 = vadd.f32 %v1396, %v1090
          %v1398 = vadd.f32 %v1397, %v1131
          %v1399 = vadd.f32 %v1398, %v1172
          %v1400 = vadd.f32 %v1399, %v1213
          %v1401 = vsel %vm1269, %v1254, 0.0
          %v1402 = vadd.f32 %v1400, %v1401
          %1403 = vadd.xlane.f32.xlu0 %v1402
          %v1404 = vpop.xlane.xlu0 %1403
          %v1405 = vadd.f32 %v970, %v1011
          %v1406 = vadd.f32 %v1405, %v1052
          %v1407 = vadd.f32 %v1406, %v1093
          %v1408 = vadd.f32 %v1407, %v1134
          %v1409 = vadd.f32 %v1408, %v1175
          %v1410 = vadd.f32 %v1409, %v1216
          %v1411 = vsel %vm1269, %v1257, 0.0
          %v1412 = vadd.f32 %v1410, %v1411
          %1413 = vadd.xlane.f32.xlu0 %v1412
          %v1414 = vpop.xlane.xlu0 %1413
          %v1415 = vadd.f32 %v1327, %v1344
          %v1416 = vadd.f32 %v1328, %v1354
          %v1417 = vadd.f32 %v1329, %v1364
          %v1418 = vadd.f32 %v1330, %v1374
          %v1419 = vadd.f32 %v1331, %v1384
          %v1420 = vadd.f32 %v1332, %v1394
          %v1421 = vadd.f32 %v1333, %v1404
          %v1422 = vadd.f32 %v1334, %v1414
          %vm1423 = vcmask 7168
          %1424 = vst.msk [vmem:[#allocation4] sm:$0xff] %vm1423, %v1415
          %1425 = vst.msk [vmem:[#allocation4 + $0x8] sm:$0xff] %vm1423, %v1416
          %1426 = vst.msk [vmem:[#allocation4 + $0x10] sm:$0xff] %vm1423, %v1417
          %1427 = vst.msk [vmem:[#allocation4 + $0x18] sm:$0xff] %vm1423, %v1418
          %1428 = vst.msk [vmem:[#allocation4 + $0x20] sm:$0xff] %vm1423, %v1419
          %1429 = vst.msk [vmem:[#allocation4 + $0x28] sm:$0xff] %vm1423, %v1420
          %1430 = vst.msk [vmem:[#allocation4 + $0x30] sm:$0xff] %vm1423, %v1421
          %1431 = vst.msk [vmem:[#allocation4 + $0x38] sm:$0xff] %vm1423, %v1422
          %v1432 = vld [vmem:[#allocation5] sm:$0xff]
          %v1433 = vld [vmem:[#allocation5 + $0x8] sm:$0xff]
          %v1434 = vld [vmem:[#allocation5 + $0x10] sm:$0xff]
          %v1435 = vld [vmem:[#allocation5 + $0x18] sm:$0xff]
          %v1436 = vld [vmem:[#allocation5 + $0x20] sm:$0xff]
          %v1437 = vld [vmem:[#allocation5 + $0x28] sm:$0xff]
          %v1438 = vld [vmem:[#allocation5 + $0x30] sm:$0xff]
          %v1439 = vld [vmem:[#allocation5 + $0x38] sm:$0xff]
          %v1440 = vmul.f32 %v949, %v949
          %v1441 = vmul.f32 %v990, %v990
          %v1442 = vmul.f32 %v1031, %v1031
          %v1443 = vmul.f32 %v1072, %v1072
          %v1444 = vmul.f32 %v1113, %v1113
          %v1445 = vmul.f32 %v1154, %v1154
          %v1446 = vmul.f32 %v1195, %v1195
          %v1447 = vmul.f32 %v1236, %v1236
          %v1448 = vmul.f32 %v952, %v952
          %v1449 = vmul.f32 %v993, %v993
          %v1450 = vmul.f32 %v1034, %v1034
          %v1451 = vmul.f32 %v1075, %v1075
          %v1452 = vmul.f32 %v1116, %v1116
          %v1453 = vmul.f32 %v1157, %v1157
          %v1454 = vmul.f32 %v1198, %v1198
          %v1455 = vmul.f32 %v1239, %v1239
          %v1456 = vmul.f32 %v955, %v955
          %v1457 = vmul.f32 %v996, %v996
          %v1458 = vmul.f32 %v1037, %v1037
          %v1459 = vmul.f32 %v1078, %v1078
          %v1460 = vmul.f32 %v1119, %v1119
          %v1461 = vmul.f32 %v1160, %v1160
          %v1462 = vmul.f32 %v1201, %v1201
          %v1463 = vmul.f32 %v1242, %v1242
          %v1464 = vmul.f32 %v958, %v958
          %v1465 = vmul.f32 %v999, %v999
          %v1466 = vmul.f32 %v1040, %v1040
          %v1467 = vmul.f32 %v1081, %v1081
          %v1468 = vmul.f32 %v1122, %v1122
          %v1469 = vmul.f32 %v1163, %v1163
          %v1470 = vmul.f32 %v1204, %v1204
          %v1471 = vmul.f32 %v1245, %v1245
          %v1472 = vmul.f32 %v961, %v961
          %v1473 = vmul.f32 %v1002, %v1002
          %v1474 = vmul.f32 %v1043, %v1043
          %v1475 = vmul.f32 %v1084, %v1084
          %v1476 = vmul.f32 %v1125, %v1125
          %v1477 = vmul.f32 %v1166, %v1166
          %v1478 = vmul.f32 %v1207, %v1207
          %v1479 = vmul.f32 %v1248, %v1248
          %v1480 = vmul.f32 %v964, %v964
          %v1481 = vmul.f32 %v1005, %v1005
          %v1482 = vmul.f32 %v1046, %v1046
          %v1483 = vmul.f32 %v1087, %v1087
          %v1484 = vmul.f32 %v1128, %v1128
          %v1485 = vmul.f32 %v1169, %v1169
          %v1486 = vmul.f32 %v1210, %v1210
          %v1487 = vmul.f32 %v1251, %v1251
          %v1488 = vmul.f32 %v967, %v967
          %v1489 = vmul.f32 %v1008, %v1008
          %v1490 = vmul.f32 %v1049, %v1049
          %v1491 = vmul.f32 %v1090, %v1090
          %v1492 = vmul.f32 %v1131, %v1131
          %v1493 = vmul.f32 %v1172, %v1172
          %v1494 = vmul.f32 %v1213, %v1213
          %v1495 = vmul.f32 %v1254, %v1254
          %v1496 = vmul.f32 %v970, %v970
          %v1497 = vmul.f32 %v1011, %v1011
          %v1498 = vmul.f32 %v1052, %v1052
          %v1499 = vmul.f32 %v1093, %v1093
          %v1500 = vmul.f32 %v1134, %v1134
          %v1501 = vmul.f32 %v1175, %v1175
          %v1502 = vmul.f32 %v1216, %v1216
          %v1503 = vmul.f32 %v1257, %v1257
          %v1504 = vadd.f32 %v1440, %v1441
          %v1505 = vadd.f32 %v1504, %v1442
          %v1506 = vadd.f32 %v1505, %v1443
          %v1507 = vadd.f32 %v1506, %v1444
          %v1508 = vadd.f32 %v1507, %v1445
          %v1509 = vadd.f32 %v1508, %v1446
          %v1510 = vsel %vm1269, %v1447, 0.0
          %v1511 = vadd.f32 %v1509, %v1510
          %1512 = vadd.xlane.f32.xlu0 %v1511
          %v1513 = vpop.xlane.xlu0 %1512
          %v1514 = vadd.f32 %v1448, %v1449
          %v1515 = vadd.f32 %v1514, %v1450
          %v1516 = vadd.f32 %v1515, %v1451
          %v1517 = vadd.f32 %v1516, %v1452
          %v1518 = vadd.f32 %v1517, %v1453
          %v1519 = vadd.f32 %v1518, %v1454
          %v1520 = vsel %vm1269, %v1455, 0.0
          %v1521 = vadd.f32 %v1519, %v1520
          %1522 = vadd.xlane.f32.xlu0 %v1521
          %v1523 = vpop.xlane.xlu0 %1522
          %v1524 = vadd.f32 %v1456, %v1457
          %v1525 = vadd.f32 %v1524, %v1458
          %v1526 = vadd.f32 %v1525, %v1459
          %v1527 = vadd.f32 %v1526, %v1460
          %v1528 = vadd.f32 %v1527, %v1461
          %v1529 = vadd.f32 %v1528, %v1462
          %v1530 = vsel %vm1269, %v1463, 0.0
          %v1531 = vadd.f32 %v1529, %v1530
          %1532 = vadd.xlane.f32.xlu0 %v1531
          %v1533 = vpop.xlane.xlu0 %1532
          %v1534 = vadd.f32 %v1464, %v1465
          %v1535 = vadd.f32 %v1534, %v1466
          %v1536 = vadd.f32 %v1535, %v1467
          %v1537 = vadd.f32 %v1536, %v1468
          %v1538 = vadd.f32 %v1537, %v1469
          %v1539 = vadd.f32 %v1538, %v1470
          %v1540 = vsel %vm1269, %v1471, 0.0
          %v1541 = vadd.f32 %v1539, %v1540
          %1542 = vadd.xlane.f32.xlu0 %v1541
          %v1543 = vpop.xlane.xlu0 %1542
          %v1544 = vadd.f32 %v1472, %v1473
          %v1545 = vadd.f32 %v1544, %v1474
          %v1546 = vadd.f32 %v1545, %v1475
          %v1547 = vadd.f32 %v1546, %v1476
          %v1548 = vadd.f32 %v1547, %v1477
          %v1549 = vadd.f32 %v1548, %v1478
          %v1550 = vsel %vm1269, %v1479, 0.0
          %v1551 = vadd.f32 %v1549, %v1550
          %1552 = vadd.xlane.f32.xlu0 %v1551
          %v1553 = vpop.xlane.xlu0 %1552
          %v1554 = vadd.f32 %v1480, %v1481
          %v1555 = vadd.f32 %v1554, %v1482
          %v1556 = vadd.f32 %v1555, %v1483
          %v1557 = vadd.f32 %v1556, %v1484
          %v1558 = vadd.f32 %v1557, %v1485
          %v1559 = vadd.f32 %v1558, %v1486
          %v1560 = vsel %vm1269, %v1487, 0.0
          %v1561 = vadd.f32 %v1559, %v1560
          %1562 = vadd.xlane.f32.xlu0 %v1561
          %v1563 = vpop.xlane.xlu0 %1562
          %v1564 = vadd.f32 %v1488, %v1489
          %v1565 = vadd.f32 %v1564, %v1490
          %v1566 = vadd.f32 %v1565, %v1491
          %v1567 = vadd.f32 %v1566, %v1492
          %v1568 = vadd.f32 %v1567, %v1493
          %v1569 = vadd.f32 %v1568, %v1494
          %v1570 = vsel %vm1269, %v1495, 0.0
          %v1571 = vadd.f32 %v1569, %v1570
          %1572 = vadd.xlane.f32.xlu0 %v1571
          %v1573 = vpop.xlane.xlu0 %1572
          %v1574 = vadd.f32 %v1496, %v1497
          %v1575 = vadd.f32 %v1574, %v1498
          %v1576 = vadd.f32 %v1575, %v1499
          %v1577 = vadd.f32 %v1576, %v1500
          %v1578 = vadd.f32 %v1577, %v1501
          %v1579 = vadd.f32 %v1578, %v1502
          %v1580 = vsel %vm1269, %v1503, 0.0
          %v1581 = vadd.f32 %v1579, %v1580
          %1582 = vadd.xlane.f32.xlu0 %v1581
          %v1583 = vpop.xlane.xlu0 %1582
          %v1584 = vadd.f32 %v1432, %v1513
          %v1585 = vadd.f32 %v1433, %v1523
          %v1586 = vadd.f32 %v1434, %v1533
          %v1587 = vadd.f32 %v1435, %v1543
          %v1588 = vadd.f32 %v1436, %v1553
          %v1589 = vadd.f32 %v1437, %v1563
          %v1590 = vadd.f32 %v1438, %v1573
          %v1591 = vadd.f32 %v1439, %v1583
          %1592 = vst.msk [vmem:[#allocation5] sm:$0xff] %vm1423, %v1584
          %1593 = vst.msk [vmem:[#allocation5 + $0x8] sm:$0xff] %vm1423, %v1585
          %1594 = vst.msk [vmem:[#allocation5 + $0x10] sm:$0xff] %vm1423, %v1586
          %1595 = vst.msk [vmem:[#allocation5 + $0x18] sm:$0xff] %vm1423, %v1587
          %1596 = vst.msk [vmem:[#allocation5 + $0x20] sm:$0xff] %vm1423, %v1588
          %1597 = vst.msk [vmem:[#allocation5 + $0x28] sm:$0xff] %vm1423, %v1589
          %1598 = vst.msk [vmem:[#allocation5 + $0x30] sm:$0xff] %vm1423, %v1590
          %1599 = vst.msk [vmem:[#allocation5 + $0x38] sm:$0xff] %vm1423, %v1591
        $region64: #{fc_forward.1} parent=55 // pred_fallthru
          _
        %p1600 = scmp.eq.s32.totalorder %s29, 1
        // Predicated region
        $region65: #{fc_forward.1} parent=55 // pred_check
          %p1601 = pneg %p1600
        $region66: #{fc_forward.1} parent=55 // pred_check_branch
          %1603 = sbr.rel (%p1601) target = $region68
        $region67: #{fc_forward.1} parent=55 // pred_region
          // Predicated region
          $region69: #{fc_forward.1} parent=67 // pred_check
            %p1604 = pneg %p369
          $region70: #{fc_forward.1} parent=67 // pred_check_branch
            %1606 = sbr.rel (%p1604) target = $region72
          $region71: #{fc_forward.1} parent=67 // pred_region
            %v1607 = vld [vmem:[#allocation4] sm:$0xff]
            %v1608 = vld [vmem:[#allocation4 + $0x8] sm:$0xff]
            %v1609 = vld [vmem:[#allocation4 + $0x10] sm:$0xff]
            %v1610 = vld [vmem:[#allocation4 + $0x18] sm:$0xff]
            %v1611 = vld [vmem:[#allocation4 + $0x20] sm:$0xff]
            %v1612 = vld [vmem:[#allocation4 + $0x28] sm:$0xff]
            %v1613 = vld [vmem:[#allocation4 + $0x30] sm:$0xff]
            %v1614 = vld [vmem:[#allocation4 + $0x38] sm:$0xff]
            %v1615 = vmul.f32 %v1607, 0.001
            %v1616 = vmul.f32 %v1608, 0.001
            %v1617 = vmul.f32 %v1609, 0.001
            %v1618 = vmul.f32 %v1610, 0.001
            %v1619 = vmul.f32 %v1611, 0.001
            %v1620 = vmul.f32 %v1612, 0.001
            %v1621 = vmul.f32 %v1613, 0.001
            %v1622 = vmul.f32 %v1614, 0.001
            %v1623 = vld [vmem:[#allocation5] sm:$0xff]
            %v1624 = vld [vmem:[#allocation5 + $0x8] sm:$0xff]
            %v1625 = vld [vmem:[#allocation5 + $0x10] sm:$0xff]
            %v1626 = vld [vmem:[#allocation5 + $0x18] sm:$0xff]
            %v1627 = vld [vmem:[#allocation5 + $0x20] sm:$0xff]
            %v1628 = vld [vmem:[#allocation5 + $0x28] sm:$0xff]
            %v1629 = vld [vmem:[#allocation5 + $0x30] sm:$0xff]
            %v1630 = vld [vmem:[#allocation5 + $0x38] sm:$0xff]
            %v1631 = vmul.f32 %v1623, 0.001
            %v1632 = vmul.f32 %v1624, 0.001
            %v1633 = vmul.f32 %v1625, 0.001
            %v1634 = vmul.f32 %v1626, 0.001
            %v1635 = vmul.f32 %v1627, 0.001
            %v1636 = vmul.f32 %v1628, 0.001
            %v1637 = vmul.f32 %v1629, 0.001
            %v1638 = vmul.f32 %v1630, 0.001
            %v1639 = vmul.f32 %v1615, %v1615
            %v1640 = vmul.f32 %v1616, %v1616
            %v1641 = vmul.f32 %v1617, %v1617
            %v1642 = vmul.f32 %v1618, %v1618
            %v1643 = vmul.f32 %v1619, %v1619
            %v1644 = vmul.f32 %v1620, %v1620
            %v1645 = vmul.f32 %v1621, %v1621
            %v1646 = vmul.f32 %v1622, %v1622
            %v1647 = vsub.f32 %v1631, %v1639
            %v1648 = vsub.f32 %v1632, %v1640
            %v1649 = vsub.f32 %v1633, %v1641
            %v1650 = vsub.f32 %v1634, %v1642
            %v1651 = vsub.f32 %v1635, %v1643
            %v1652 = vsub.f32 %v1636, %v1644
            %v1653 = vsub.f32 %v1637, %v1645
            %v1654 = vsub.f32 %v1638, %v1646
            %v1655 = vmax.f32 %v1647, 0.0
            %v1656 = vmax.f32 %v1648, 0.0
            %v1657 = vmax.f32 %v1649, 0.0
            %v1658 = vmax.f32 %v1650, 0.0
            %v1659 = vmax.f32 %v1651, 0.0
            %v1660 = vmax.f32 %v1652, 0.0
            %v1661 = vmax.f32 %v1653, 0.0
            %v1662 = vmax.f32 %v1654, 0.0
            %v1663 = vld [vmem:[%s2] sm:$0xff]
            %v1664 = vld [vmem:[%s2 + $0x8] sm:$0xff]
            %v1665 = vld [vmem:[%s2 + $0x10] sm:$0xff]
            %v1666 = vld [vmem:[%s2 + $0x18] sm:$0xff]
            %v1667 = vld [vmem:[%s2 + $0x20] sm:$0xff]
            %v1668 = vld [vmem:[%s2 + $0x28] sm:$0xff]
            %v1669 = vld [vmem:[%s2 + $0x30] sm:$0xff]
            %v1670 = vld [vmem:[%s2 + $0x38] sm:$0xff]
            %v1671 = vadd.f32 %v1655, 1e-05
            %v1672 = vadd.f32 %v1656, 1e-05
            %v1673 = vadd.f32 %v1657, 1e-05
            %v1674 = vadd.f32 %v1658, 1e-05
            %v1675 = vadd.f32 %v1659, 1e-05
            %v1676 = vadd.f32 %v1660, 1e-05
            %v1677 = vadd.f32 %v1661, 1e-05
            %v1678 = vadd.f32 %v1662, 1e-05
            %v1679 = vrsqrt.pop %v1671
            %v1680 = vmul.f32 %v1679, %v1671
            %v1681 = vmul.f32 %v1680, %v1679
            %v1682 = vmul.f32 0.5, %v1681
            %v1683 = vsub.f32 1.5, %v1682
            %v1684 = vmul.f32 %v1679, %v1683
            %vm1685 = vweird.f32 %v1671
            %vm1686 = vweird.f32 %v1679
            %vm1687 = vmor %vm1685, %vm1686
            %v1688 = vsel %vm1687, %v1679, %v1684
            %v1689 = vrsqrt.pop %v1672
            %v1690 = vmul.f32 %v1689, %v1672
            %v1691 = vmul.f32 %v1690, %v1689
            %v1692 = vmul.f32 0.5, %v1691
            %v1693 = vsub.f32 1.5, %v1692
            %v1694 = vmul.f32 %v1689, %v1693
            %vm1695 = vweird.f32 %v1672
            %vm1696 = vweird.f32 %v1689
            %vm1697 = vmor %vm1695, %vm1696
            %v1698 = vsel %vm1697, %v1689, %v1694
            %v1699 = vrsqrt.pop %v1673
            %v1700 = vmul.f32 %v1699, %v1673
            %v1701 = vmul.f32 %v1700, %v1699
            %v1702 = vmul.f32 0.5, %v1701
            %v1703 = vsub.f32 1.5, %v1702
            %v1704 = vmul.f32 %v1699, %v1703
            %vm1705 = vweird.f32 %v1673
            %vm1706 = vweird.f32 %v1699
            %vm1707 = vmor %vm1705, %vm1706
            %v1708 = vsel %vm1707, %v1699, %v1704
            %v1709 = vrsqrt.pop %v1674
            %v1710 = vmul.f32 %v1709, %v1674
            %v1711 = vmul.f32 %v1710, %v1709
            %v1712 = vmul.f32 0.5, %v1711
            %v1713 = vsub.f32 1.5, %v1712
            %v1714 = vmul.f32 %v1709, %v1713
            %vm1715 = vweird.f32 %v1674
            %vm1716 = vweird.f32 %v1709
            %vm1717 = vmor %vm1715, %vm1716
            %v1718 = vsel %vm1717, %v1709, %v1714
            %v1719 = vrsqrt.pop %v1675
            %v1720 = vmul.f32 %v1719, %v1675
            %v1721 = vmul.f32 %v1720, %v1719
            %v1722 = vmul.f32 0.5, %v1721
            %v1723 = vsub.f32 1.5, %v1722
            %v1724 = vmul.f32 %v1719, %v1723
            %vm1725 = vweird.f32 %v1675
            %vm1726 = vweird.f32 %v1719
            %vm1727 = vmor %vm1725, %vm1726
            %v1728 = vsel %vm1727, %v1719, %v1724
            %v1729 = vrsqrt.pop %v1676
            %v1730 = vmul.f32 %v1729, %v1676
            %v1731 = vmul.f32 %v1730, %v1729
            %v1732 = vmul.f32 0.5, %v1731
            %v1733 = vsub.f32 1.5, %v1732
            %v1734 = vmul.f32 %v1729, %v1733
            %vm1735 = vweird.f32 %v1676
            %vm1736 = vweird.f32 %v1729
            %vm1737 = vmor %vm1735, %vm1736
            %v1738 = vsel %vm1737, %v1729, %v1734
            %v1739 = vrsqrt.pop %v1677
            %v1740 = vmul.f32 %v1739, %v1677
            %v1741 = vmul.f32 %v1740, %v1739
            %v1742 = vmul.f32 0.5, %v1741
            %v1743 = vsub.f32 1.5, %v1742
            %v1744 = vmul.f32 %v1739, %v1743
            %vm1745 = vweird.f32 %v1677
            %vm1746 = vweird.f32 %v1739
            %vm1747 = vmor %vm1745, %vm1746
            %v1748 = vsel %vm1747, %v1739, %v1744
            %v1749 = vrsqrt.pop %v1678
            %v1750 = vmul.f32 %v1749, %v1678
            %v1751 = vmul.f32 %v1750, %v1749
            %v1752 = vmul.f32 0.5, %v1751
            %v1753 = vsub.f32 1.5, %v1752
            %v1754 = vmul.f32 %v1749, %v1753
            %vm1755 = vweird.f32 %v1678
            %vm1756 = vweird.f32 %v1749
            %vm1757 = vmor %vm1755, %vm1756
            %v1758 = vsel %vm1757, %v1749, %v1754
            %v1759 = vmul.f32 %v1663, %v1688
            %v1760 = vmul.f32 %v1664, %v1698
            %v1761 = vmul.f32 %v1665, %v1708
            %v1762 = vmul.f32 %v1666, %v1718
            %v1763 = vmul.f32 %v1667, %v1728
            %v1764 = vmul.f32 %v1668, %v1738
            %v1765 = vmul.f32 %v1669, %v1748
            %v1766 = vmul.f32 %v1670, %v1758
            %vm1767 = vcmask 7168
            %1768 = vst.msk [vmem:[#allocation8] sm:$0xff] %vm1767, %v1759
            %1769 = vst.msk [vmem:[#allocation8 + $0x8] sm:$0xff] %vm1767, %v1760
            %1770 = vst.msk [vmem:[#allocation8 + $0x10] sm:$0xff] %vm1767, %v1761
            %1771 = vst.msk [vmem:[#allocation8 + $0x18] sm:$0xff] %vm1767, %v1762
            %1772 = vst.msk [vmem:[#allocation8 + $0x20] sm:$0xff] %vm1767, %v1763
            %1773 = vst.msk [vmem:[#allocation8 + $0x28] sm:$0xff] %vm1767, %v1764
            %1774 = vst.msk [vmem:[#allocation8 + $0x30] sm:$0xff] %vm1767, %v1765
            %1775 = vst.msk [vmem:[#allocation8 + $0x38] sm:$0xff] %vm1767, %v1766
            %v1776 = vld [vmem:[%s3] sm:$0xff]
            %v1777 = vld [vmem:[%s3 + $0x8] sm:$0xff]
            %v1778 = vld [vmem:[%s3 + $0x10] sm:$0xff]
            %v1779 = vld [vmem:[%s3 + $0x18] sm:$0xff]
            %v1780 = vld [vmem:[%s3 + $0x20] sm:$0xff]
            %v1781 = vld [vmem:[%s3 + $0x28] sm:$0xff]
            %v1782 = vld [vmem:[%s3 + $0x30] sm:$0xff]
            %v1783 = vld [vmem:[%s3 + $0x38] sm:$0xff]
            %v1784 = vmul.f32 %v1615, %v1759
            %v1785 = vmul.f32 %v1616, %v1760
            %v1786 = vmul.f32 %v1617, %v1761
            %v1787 = vmul.f32 %v1618, %v1762
            %v1788 = vmul.f32 %v1619, %v1763
            %v1789 = vmul.f32 %v1620, %v1764
            %v1790 = vmul.f32 %v1621, %v1765
            %v1791 = vmul.f32 %v1622, %v1766
            %v1792 = vsub.f32 %v1776, %v1784
            %v1793 = vsub.f32 %v1777, %v1785
            %v1794 = vsub.f32 %v1778, %v1786
            %v1795 = vsub.f32 %v1779, %v1787
            %v1796 = vsub.f32 %v1780, %v1788
            %v1797 = vsub.f32 %v1781, %v1789
            %v1798 = vsub.f32 %v1782, %v1790
            %v1799 = vsub.f32 %v1783, %v1791
            %1800 = vst.msk [vmem:[#allocation9] sm:$0xff] %vm1767, %v1792
            %1801 = vst.msk [vmem:[#allocation9 + $0x8] sm:$0xff] %vm1767, %v1793
            %1802 = vst.msk [vmem:[#allocation9 + $0x10] sm:$0xff] %vm1767, %v1794
            %1803 = vst.msk [vmem:[#allocation9 + $0x18] sm:$0xff] %vm1767, %v1795
            %1804 = vst.msk [vmem:[#allocation9 + $0x20] sm:$0xff] %vm1767, %v1796
            %1805 = vst.msk [vmem:[#allocation9 + $0x28] sm:$0xff] %vm1767, %v1797
            %1806 = vst.msk [vmem:[#allocation9 + $0x30] sm:$0xff] %vm1767, %v1798
            %1807 = vst.msk [vmem:[#allocation9 + $0x38] sm:$0xff] %vm1767, %v1799
          $region72: #{fc_forward.1} parent=67 // pred_fallthru
            _
          %s1808 = smul.u32 %s30, 64
          %s1809 = smul.addr %s1808, 8
          %s1810 = scalar_lea.vmem [#allocation2], %s1809
          %v1811 = vld [vmem:[%s1810] sm:$0xff]
          %v1812 = vld [vmem:[%s1810 + $0x8] sm:$0xff]
          %v1813 = vld [vmem:[%s1810 + $0x10] sm:$0xff]
          %v1814 = vld [vmem:[%s1810 + $0x18] sm:$0xff]
          %v1815 = vld [vmem:[%s1810 + $0x20] sm:$0xff]
          %v1816 = vld [vmem:[%s1810 + $0x28] sm:$0xff]
          %v1817 = vld [vmem:[%s1810 + $0x30] sm:$0xff]
          %v1818 = vld [vmem:[%s1810 + $0x38] sm:$0xff]
          %v1819 = vld [vmem:[%s1810 + $0x40] sm:$0xff]
          %v1820 = vld [vmem:[%s1810 + $0x48] sm:$0xff]
          %v1821 = vld [vmem:[%s1810 + $0x50] sm:$0xff]
          %v1822 = vld [vmem:[%s1810 + $0x58] sm:$0xff]
          %v1823 = vld [vmem:[%s1810 + $0x60] sm:$0xff]
          %v1824 = vld [vmem:[%s1810 + $0x68] sm:$0xff]
          %v1825 = vld [vmem:[%s1810 + $0x70] sm:$0xff]
          %v1826 = vld [vmem:[%s1810 + $0x78] sm:$0xff]
          %v1827 = vld [vmem:[%s1810 + $0x80] sm:$0xff]
          %v1828 = vld [vmem:[%s1810 + $0x88] sm:$0xff]
          %v1829 = vld [vmem:[%s1810 + $0x90] sm:$0xff]
          %v1830 = vld [vmem:[%s1810 + $0x98] sm:$0xff]
          %v1831 = vld [vmem:[%s1810 + $0xa0] sm:$0xff]
          %v1832 = vld [vmem:[%s1810 + $0xa8] sm:$0xff]
          %v1833 = vld [vmem:[%s1810 + $0xb0] sm:$0xff]
          %v1834 = vld [vmem:[%s1810 + $0xb8] sm:$0xff]
          %v1835 = vld [vmem:[%s1810 + $0xc0] sm:$0xff]
          %v1836 = vld [vmem:[%s1810 + $0xc8] sm:$0xff]
          %v1837 = vld [vmem:[%s1810 + $0xd0] sm:$0xff]
          %v1838 = vld [vmem:[%s1810 + $0xd8] sm:$0xff]
          %v1839 = vld [vmem:[%s1810 + $0xe0] sm:$0xff]
          %v1840 = vld [vmem:[%s1810 + $0xe8] sm:$0xff]
          %v1841 = vld [vmem:[%s1810 + $0xf0] sm:$0xff]
          %v1842 = vld [vmem:[%s1810 + $0xf8] sm:$0xff]
          %v1843 = vld [vmem:[%s1810 + $0x100] sm:$0xff]
          %v1844 = vld [vmem:[%s1810 + $0x108] sm:$0xff]
          %v1845 = vld [vmem:[%s1810 + $0x110] sm:$0xff]
          %v1846 = vld [vmem:[%s1810 + $0x118] sm:$0xff]
          %v1847 = vld [vmem:[%s1810 + $0x120] sm:$0xff]
          %v1848 = vld [vmem:[%s1810 + $0x128] sm:$0xff]
          %v1849 = vld [vmem:[%s1810 + $0x130] sm:$0xff]
          %v1850 = vld [vmem:[%s1810 + $0x138] sm:$0xff]
          %v1851 = vld [vmem:[%s1810 + $0x140] sm:$0xff]
          %v1852 = vld [vmem:[%s1810 + $0x148] sm:$0xff]
          %v1853 = vld [vmem:[%s1810 + $0x150] sm:$0xff]
          %v1854 = vld [vmem:[%s1810 + $0x158] sm:$0xff]
          %v1855 = vld [vmem:[%s1810 + $0x160] sm:$0xff]
          %v1856 = vld [vmem:[%s1810 + $0x168] sm:$0xff]
          %v1857 = vld [vmem:[%s1810 + $0x170] sm:$0xff]
          %v1858 = vld [vmem:[%s1810 + $0x178] sm:$0xff]
          %v1859 = vld [vmem:[%s1810 + $0x180] sm:$0xff]
          %v1860 = vld [vmem:[%s1810 + $0x188] sm:$0xff]
          %v1861 = vld [vmem:[%s1810 + $0x190] sm:$0xff]
          %v1862 = vld [vmem:[%s1810 + $0x198] sm:$0xff]
          %v1863 = vld [vmem:[%s1810 + $0x1a0] sm:$0xff]
          %v1864 = vld [vmem:[%s1810 + $0x1a8] sm:$0xff]
          %v1865 = vld [vmem:[%s1810 + $0x1b0] sm:$0xff]
          %v1866 = vld [vmem:[%s1810 + $0x1b8] sm:$0xff]
          %v1867 = vld [vmem:[%s1810 + $0x1c0] sm:$0xff]
          %v1868 = vld [vmem:[%s1810 + $0x1c8] sm:$0xff]
          %v1869 = vld [vmem:[%s1810 + $0x1d0] sm:$0xff]
          %v1870 = vld [vmem:[%s1810 + $0x1d8] sm:$0xff]
          %v1871 = vld [vmem:[%s1810 + $0x1e0] sm:$0xff]
          %v1872 = vld [vmem:[%s1810 + $0x1e8] sm:$0xff]
          %v1873 = vld [vmem:[%s1810 + $0x1f0] sm:$0xff]
          %v1874 = vld [vmem:[%s1810 + $0x1f8] sm:$0xff]
          %v1875 = vld [vmem:[#allocation8] sm:$0xff]
          %v1876 = vld [vmem:[#allocation8 + $0x8] sm:$0xff]
          %v1877 = vld [vmem:[#allocation8 + $0x10] sm:$0xff]
          %v1878 = vld [vmem:[#allocation8 + $0x18] sm:$0xff]
          %v1879 = vld [vmem:[#allocation8 + $0x20] sm:$0xff]
          %v1880 = vld [vmem:[#allocation8 + $0x28] sm:$0xff]
          %v1881 = vld [vmem:[#allocation8 + $0x30] sm:$0xff]
          %v1882 = vld [vmem:[#allocation8 + $0x38] sm:$0xff]
          %1884 = vset.pattern.permute.xlu0 0
          %1885 = vperm.xlu0 %1884, %v1875
          %v1886 = vpop.permute.xlu0 %1885
          %1889 = vset.pattern.permute.xlu0 0
          %1890 = vperm.xlu0 %1889, %v1876
          %v1891 = vpop.permute.xlu0 %1890
          %1894 = vset.pattern.permute.xlu0 0
          %1895 = vperm.xlu0 %1894, %v1877
          %v1896 = vpop.permute.xlu0 %1895
          %1899 = vset.pattern.permute.xlu0 0
          %1900 = vperm.xlu0 %1899, %v1878
          %v1901 = vpop.permute.xlu0 %1900
          %1904 = vset.pattern.permute.xlu0 0
          %1905 = vperm.xlu0 %1904, %v1879
          %v1906 = vpop.permute.xlu0 %1905
          %1909 = vset.pattern.permute.xlu0 0
          %1910 = vperm.xlu0 %1909, %v1880
          %v1911 = vpop.permute.xlu0 %1910
          %1914 = vset.pattern.permute.xlu0 0
          %1915 = vperm.xlu0 %1914, %v1881
          %v1916 = vpop.permute.xlu0 %1915
          %1919 = vset.pattern.permute.xlu0 0
          %1920 = vperm.xlu0 %1919, %v1882
          %v1921 = vpop.permute.xlu0 %1920
          %v1923 = vmul.f32 %v1811, %v1886
          %v1924 = vmul.f32 %v1812, %v1886
          %v1925 = vmul.f32 %v1813, %v1886
          %v1926 = vmul.f32 %v1814, %v1886
          %v1927 = vmul.f32 %v1815, %v1886
          %v1928 = vmul.f32 %v1816, %v1886
          %v1929 = vmul.f32 %v1817, %v1886
          %v1930 = vmul.f32 %v1818, %v1886
          %v1931 = vmul.f32 %v1819, %v1891
          %v1932 = vmul.f32 %v1820, %v1891
          %v1933 = vmul.f32 %v1821, %v1891
          %v1934 = vmul.f32 %v1822, %v1891
          %v1935 = vmul.f32 %v1823, %v1891
          %v1936 = vmul.f32 %v1824, %v1891
          %v1937 = vmul.f32 %v1825, %v1891
          %v1938 = vmul.f32 %v1826, %v1891
          %v1939 = vmul.f32 %v1827, %v1896
          %v1940 = vmul.f32 %v1828, %v1896
          %v1941 = vmul.f32 %v1829, %v1896
          %v1942 = vmul.f32 %v1830, %v1896
          %v1943 = vmul.f32 %v1831, %v1896
          %v1944 = vmul.f32 %v1832, %v1896
          %v1945 = vmul.f32 %v1833, %v1896
          %v1946 = vmul.f32 %v1834, %v1896
          %v1947 = vmul.f32 %v1835, %v1901
          %v1948 = vmul.f32 %v1836, %v1901
          %v1949 = vmul.f32 %v1837, %v1901
          %v1950 = vmul.f32 %v1838, %v1901
          %v1951 = vmul.f32 %v1839, %v1901
          %v1952 = vmul.f32 %v1840, %v1901
          %v1953 = vmul.f32 %v1841, %v1901
          %v1954 = vmul.f32 %v1842, %v1901
          %v1955 = vmul.f32 %v1843, %v1906
          %v1956 = vmul.f32 %v1844, %v1906
          %v1957 = vmul.f32 %v1845, %v1906
          %v1958 = vmul.f32 %v1846, %v1906
          %v1959 = vmul.f32 %v1847, %v1906
          %v1960 = vmul.f32 %v1848, %v1906
          %v1961 = vmul.f32 %v1849, %v1906
          %v1962 = vmul.f32 %v1850, %v1906
          %v1963 = vmul.f32 %v1851, %v1911
          %v1964 = vmul.f32 %v1852, %v1911
          %v1965 = vmul.f32 %v1853, %v1911
          %v1966 = vmul.f32 %v1854, %v1911
          %v1967 = vmul.f32 %v1855, %v1911
          %v1968 = vmul.f32 %v1856, %v1911
          %v1969 = vmul.f32 %v1857, %v1911
          %v1970 = vmul.f32 %v1858, %v1911
          %v1971 = vmul.f32 %v1859, %v1916
          %v1972 = vmul.f32 %v1860, %v1916
          %v1973 = vmul.f32 %v1861, %v1916
          %v1974 = vmul.f32 %v1862, %v1916
          %v1975 = vmul.f32 %v1863, %v1916
          %v1976 = vmul.f32 %v1864, %v1916
          %v1977 = vmul.f32 %v1865, %v1916
          %v1978 = vmul.f32 %v1866, %v1916
          %v1979 = vmul.f32 %v1867, %v1921
          %v1980 = vmul.f32 %v1868, %v1921
          %v1981 = vmul.f32 %v1869, %v1921
          %v1982 = vmul.f32 %v1870, %v1921
          %v1983 = vmul.f32 %v1871, %v1921
          %v1984 = vmul.f32 %v1872, %v1921
          %v1985 = vmul.f32 %v1873, %v1921
          %v1986 = vmul.f32 %v1874, %v1921
          %v1987 = vld [vmem:[#allocation9] sm:$0xff]
          %v1988 = vld [vmem:[#allocation9 + $0x8] sm:$0xff]
          %v1989 = vld [vmem:[#allocation9 + $0x10] sm:$0xff]
          %v1990 = vld [vmem:[#allocation9 + $0x18] sm:$0xff]
          %v1991 = vld [vmem:[#allocation9 + $0x20] sm:$0xff]
          %v1992 = vld [vmem:[#allocation9 + $0x28] sm:$0xff]
          %v1993 = vld [vmem:[#allocation9 + $0x30] sm:$0xff]
          %v1994 = vld [vmem:[#allocation9 + $0x38] sm:$0xff]
          %1996 = vset.pattern.permute.xlu0 0
          %1997 = vperm.xlu0 %1996, %v1987
          %v1998 = vpop.permute.xlu0 %1997
          %2001 = vset.pattern.permute.xlu0 0
          %2002 = vperm.xlu0 %2001, %v1988
          %v2003 = vpop.permute.xlu0 %2002
          %2006 = vset.pattern.permute.xlu0 0
          %2007 = vperm.xlu0 %2006, %v1989
          %v2008 = vpop.permute.xlu0 %2007
          %2011 = vset.pattern.permute.xlu0 0
          %2012 = vperm.xlu0 %2011, %v1990
          %v2013 = vpop.permute.xlu0 %2012
          %2016 = vset.pattern.permute.xlu0 0
          %2017 = vperm.xlu0 %2016, %v1991
          %v2018 = vpop.permute.xlu0 %2017
          %2021 = vset.pattern.permute.xlu0 0
          %2022 = vperm.xlu0 %2021, %v1992
          %v2023 = vpop.permute.xlu0 %2022
          %2026 = vset.pattern.permute.xlu0 0
          %2027 = vperm.xlu0 %2026, %v1993
          %v2028 = vpop.permute.xlu0 %2027
          %2031 = vset.pattern.permute.xlu0 0
          %2032 = vperm.xlu0 %2031, %v1994
          %v2033 = vpop.permute.xlu0 %2032
          %v2035 = vadd.f32 %v1923, %v1998
          %v2036 = vadd.f32 %v1924, %v1998
          %v2037 = vadd.f32 %v1925, %v1998
          %v2038 = vadd.f32 %v1926, %v1998
          %v2039 = vadd.f32 %v1927, %v1998
          %v2040 = vadd.f32 %v1928, %v1998
          %v2041 = vadd.f32 %v1929, %v1998
          %v2042 = vadd.f32 %v1930, %v1998
          %v2043 = vadd.f32 %v1931, %v2003
          %v2044 = vadd.f32 %v1932, %v2003
          %v2045 = vadd.f32 %v1933, %v2003
          %v2046 = vadd.f32 %v1934, %v2003
          %v2047 = vadd.f32 %v1935, %v2003
          %v2048 = vadd.f32 %v1936, %v2003
          %v2049 = vadd.f32 %v1937, %v2003
          %v2050 = vadd.f32 %v1938, %v2003
          %v2051 = vadd.f32 %v1939, %v2008
          %v2052 = vadd.f32 %v1940, %v2008
          %v2053 = vadd.f32 %v1941, %v2008
          %v2054 = vadd.f32 %v1942, %v2008
          %v2055 = vadd.f32 %v1943, %v2008
          %v2056 = vadd.f32 %v1944, %v2008
          %v2057 = vadd.f32 %v1945, %v2008
          %v2058 = vadd.f32 %v1946, %v2008
          %v2059 = vadd.f32 %v1947, %v2013
          %v2060 = vadd.f32 %v1948, %v2013
          %v2061 = vadd.f32 %v1949, %v2013
          %v2062 = vadd.f32 %v1950, %v2013
          %v2063 = vadd.f32 %v1951, %v2013
          %v2064 = vadd.f32 %v1952, %v2013
          %v2065 = vadd.f32 %v1953, %v2013
          %v2066 = vadd.f32 %v1954, %v2013
          %v2067 = vadd.f32 %v1955, %v2018
          %v2068 = vadd.f32 %v1956, %v2018
          %v2069 = vadd.f32 %v1957, %v2018
          %v2070 = vadd.f32 %v1958, %v2018
          %v2071 = vadd.f32 %v1959, %v2018
          %v2072 = vadd.f32 %v1960, %v2018
          %v2073 = vadd.f32 %v1961, %v2018
          %v2074 = vadd.f32 %v1962, %v2018
          %v2075 = vadd.f32 %v1963, %v2023
          %v2076 = vadd.f32 %v1964, %v2023
          %v2077 = vadd.f32 %v1965, %v2023
          %v2078 = vadd.f32 %v1966, %v2023
          %v2079 = vadd.f32 %v1967, %v2023
          %v2080 = vadd.f32 %v1968, %v2023
          %v2081 = vadd.f32 %v1969, %v2023
          %v2082 = vadd.f32 %v1970, %v2023
          %v2083 = vadd.f32 %v1971, %v2028
          %v2084 = vadd.f32 %v1972, %v2028
          %v2085 = vadd.f32 %v1973, %v2028
          %v2086 = vadd.f32 %v1974, %v2028
          %v2087 = vadd.f32 %v1975, %v2028
          %v2088 = vadd.f32 %v1976, %v2028
          %v2089 = vadd.f32 %v1977, %v2028
          %v2090 = vadd.f32 %v1978, %v2028
          %v2091 = vadd.f32 %v1979, %v2033
          %v2092 = vadd.f32 %v1980, %v2033
          %v2093 = vadd.f32 %v1981, %v2033
          %v2094 = vadd.f32 %v1982, %v2033
          %v2095 = vadd.f32 %v1983, %v2033
          %v2096 = vadd.f32 %v1984, %v2033
          %v2097 = vadd.f32 %v1985, %v2033
          %v2098 = vadd.f32 %v1986, %v2033
          %v2099 = vmax.f32 %v2035, 0.0
          %v2100 = vmax.f32 %v2036, 0.0
          %v2101 = vmax.f32 %v2037, 0.0
          %v2102 = vmax.f32 %v2038, 0.0
          %v2103 = vmax.f32 %v2039, 0.0
          %v2104 = vmax.f32 %v2040, 0.0
          %v2105 = vmax.f32 %v2041, 0.0
          %v2106 = vmax.f32 %v2042, 0.0
          %v2107 = vmax.f32 %v2043, 0.0
          %v2108 = vmax.f32 %v2044, 0.0
          %v2109 = vmax.f32 %v2045, 0.0
          %v2110 = vmax.f32 %v2046, 0.0
          %v2111 = vmax.f32 %v2047, 0.0
          %v2112 = vmax.f32 %v2048, 0.0
          %v2113 = vmax.f32 %v2049, 0.0
          %v2114 = vmax.f32 %v2050, 0.0
          %v2115 = vmax.f32 %v2051, 0.0
          %v2116 = vmax.f32 %v2052, 0.0
          %v2117 = vmax.f32 %v2053, 0.0
          %v2118 = vmax.f32 %v2054, 0.0
          %v2119 = vmax.f32 %v2055, 0.0
          %v2120 = vmax.f32 %v2056, 0.0
          %v2121 = vmax.f32 %v2057, 0.0
          %v2122 = vmax.f32 %v2058, 0.0
          %v2123 = vmax.f32 %v2059, 0.0
          %v2124 = vmax.f32 %v2060, 0.0
          %v2125 = vmax.f32 %v2061, 0.0
          %v2126 = vmax.f32 %v2062, 0.0
          %v2127 = vmax.f32 %v2063, 0.0
          %v2128 = vmax.f32 %v2064, 0.0
          %v2129 = vmax.f32 %v2065, 0.0
          %v2130 = vmax.f32 %v2066, 0.0
          %v2131 = vmax.f32 %v2067, 0.0
          %v2132 = vmax.f32 %v2068, 0.0
          %v2133 = vmax.f32 %v2069, 0.0
          %v2134 = vmax.f32 %v2070, 0.0
          %v2135 = vmax.f32 %v2071, 0.0
          %v2136 = vmax.f32 %v2072, 0.0
          %v2137 = vmax.f32 %v2073, 0.0
          %v2138 = vmax.f32 %v2074, 0.0
          %v2139 = vmax.f32 %v2075, 0.0
          %v2140 = vmax.f32 %v2076, 0.0
          %v2141 = vmax.f32 %v2077, 0.0
          %v2142 = vmax.f32 %v2078, 0.0
          %v2143 = vmax.f32 %v2079, 0.0
          %v2144 = vmax.f32 %v2080, 0.0
          %v2145 = vmax.f32 %v2081, 0.0
          %v2146 = vmax.f32 %v2082, 0.0
          %v2147 = vmax.f32 %v2083, 0.0
          %v2148 = vmax.f32 %v2084, 0.0
          %v2149 = vmax.f32 %v2085, 0.0
          %v2150 = vmax.f32 %v2086, 0.0
          %v2151 = vmax.f32 %v2087, 0.0
          %v2152 = vmax.f32 %v2088, 0.0
          %v2153 = vmax.f32 %v2089, 0.0
          %v2154 = vmax.f32 %v2090, 0.0
          %v2155 = vmax.f32 %v2091, 0.0
          %v2156 = vmax.f32 %v2092, 0.0
          %v2157 = vmax.f32 %v2093, 0.0
          %v2158 = vmax.f32 %v2094, 0.0
          %v2159 = vmax.f32 %v2095, 0.0
          %v2160 = vmax.f32 %v2096, 0.0
          %v2161 = vmax.f32 %v2097, 0.0
          %v2162 = vmax.f32 %v2098, 0.0
          %v2163 = vld [vmem:[%s4] sm:$0xff]
          %v2164 = vld [vmem:[%s4 + $0x8] sm:$0xff]
          %vm2165 = vcmask 523264
          %v2167 = vsel %vm2165, %v2163, 0
          %v2170 = vsel %vm2165, %v2164, 0
          %2172 = vmatpush.msra.mxu0 0.0
          %2173 = vmatpush.msra.mxu0 0.0
          %2174 = vmatpush.msra.mxu0 0.0
          %2175 = vmatpush.msra.mxu0 0.0
          %2176 = vmatpush.msra.mxu0 0.0
          %2177 = vmatpush.msra.mxu0 0.0
          %2178 = vmatpush.msra.mxu0 0.0
          %2179 = vmatpush.msra.mxu0 0.0
          %2180 = vmatpush.msra.mxu0 %v2155
          %2181 = vmatpush.msra.mxu0 %v2147
          %2182 = vmatpush.msra.mxu0 %v2139
          %2183 = vmatpush.msra.mxu0 %v2131
          %2184 = vmatpush.msra.mxu0 %v2123
          %2185 = vmatpush.msra.mxu0 %v2115
          %2186 = vmatpush.msra.mxu0 %v2107
          %2187 = vmatpush.msra.mxu0 %v2099
          %2188 = vmatmul.f32.gmra.mxu0 %v2167
          %v2189 = vpop.f32.mrf.mxu0
          %v2190 = vadd.f32 0.0, %v2189
          %2191 = vmatmul.f32.gmra.mxu0 %v2170
          %v2192 = vpop.f32.mrf.mxu0
          %v2193 = vadd.f32 0.0, %v2192
          %2194 = vdwg.mxu0
          %2195 = vmatpush.msra.mxu0 0.0
          %2196 = vmatpush.msra.mxu0 0.0
          %2197 = vmatpush.msra.mxu0 0.0
          %2198 = vmatpush.msra.mxu0 0.0
          %2199 = vmatpush.msra.mxu0 0.0
          %2200 = vmatpush.msra.mxu0 0.0
          %2201 = vmatpush.msra.mxu0 0.0
          %2202 = vmatpush.msra.mxu0 0.0
          %2203 = vmatpush.msra.mxu0 %v2156
          %2204 = vmatpush.msra.mxu0 %v2148
          %2205 = vmatpush.msra.mxu0 %v2140
          %2206 = vmatpush.msra.mxu0 %v2132
          %2207 = vmatpush.msra.mxu0 %v2124
          %2208 = vmatpush.msra.mxu0 %v2116
          %2209 = vmatpush.msra.mxu0 %v2108
          %2210 = vmatpush.msra.mxu0 %v2100
          %2211 = vmatmul.f32.gmra.mxu0 %v2167
          %v2212 = vpop.f32.mrf.mxu0
          %v2213 = vadd.f32 0.0, %v2212
          %2214 = vmatmul.f32.gmra.mxu0 %v2170
          %v2215 = vpop.f32.mrf.mxu0
          %v2216 = vadd.f32 0.0, %v2215
          %2217 = vdwg.mxu0
          %2218 = vmatpush.msra.mxu0 0.0
          %2219 = vmatpush.msra.mxu0 0.0
          %2220 = vmatpush.msra.mxu0 0.0
          %2221 = vmatpush.msra.mxu0 0.0
          %2222 = vmatpush.msra.mxu0 0.0
          %2223 = vmatpush.msra.mxu0 0.0
          %2224 = vmatpush.msra.mxu0 0.0
          %2225 = vmatpush.msra.mxu0 0.0
          %2226 = vmatpush.msra.mxu0 %v2157
          %2227 = vmatpush.msra.mxu0 %v2149
          %2228 = vmatpush.msra.mxu0 %v2141
          %2229 = vmatpush.msra.mxu0 %v2133
          %2230 = vmatpush.msra.mxu0 %v2125
          %2231 = vmatpush.msra.mxu0 %v2117
          %2232 = vmatpush.msra.mxu0 %v2109
          %2233 = vmatpush.msra.mxu0 %v2101
          %2234 = vmatmul.f32.gmra.mxu0 %v2167
          %v2235 = vpop.f32.mrf.mxu0
          %v2236 = vadd.f32 0.0, %v2235
          %2237 = vmatmul.f32.gmra.mxu0 %v2170
          %v2238 = vpop.f32.mrf.mxu0
          %v2239 = vadd.f32 0.0, %v2238
          %2240 = vdwg.mxu0
          %2241 = vmatpush.msra.mxu0 0.0
          %2242 = vmatpush.msra.mxu0 0.0
          %2243 = vmatpush.msra.mxu0 0.0
          %2244 = vmatpush.msra.mxu0 0.0
          %2245 = vmatpush.msra.mxu0 0.0
          %2246 = vmatpush.msra.mxu0 0.0
          %2247 = vmatpush.msra.mxu0 0.0
          %2248 = vmatpush.msra.mxu0 0.0
          %2249 = vmatpush.msra.mxu0 %v2158
          %2250 = vmatpush.msra.mxu0 %v2150
          %2251 = vmatpush.msra.mxu0 %v2142
          %2252 = vmatpush.msra.mxu0 %v2134
          %2253 = vmatpush.msra.mxu0 %v2126
          %2254 = vmatpush.msra.mxu0 %v2118
          %2255 = vmatpush.msra.mxu0 %v2110
          %2256 = vmatpush.msra.mxu0 %v2102
          %2257 = vmatmul.f32.gmra.mxu0 %v2167
          %v2258 = vpop.f32.mrf.mxu0
          %v2259 = vadd.f32 0.0, %v2258
          %2260 = vmatmul.f32.gmra.mxu0 %v2170
          %v2261 = vpop.f32.mrf.mxu0
          %v2262 = vadd.f32 0.0, %v2261
          %2263 = vdwg.mxu0
          %2264 = vmatpush.msra.mxu0 0.0
          %2265 = vmatpush.msra.mxu0 0.0
          %2266 = vmatpush.msra.mxu0 0.0
          %2267 = vmatpush.msra.mxu0 0.0
          %2268 = vmatpush.msra.mxu0 0.0
          %2269 = vmatpush.msra.mxu0 0.0
          %2270 = vmatpush.msra.mxu0 0.0
          %2271 = vmatpush.msra.mxu0 0.0
          %2272 = vmatpush.msra.mxu0 %v2159
          %2273 = vmatpush.msra.mxu0 %v2151
          %2274 = vmatpush.msra.mxu0 %v2143
          %2275 = vmatpush.msra.mxu0 %v2135
          %2276 = vmatpush.msra.mxu0 %v2127
          %2277 = vmatpush.msra.mxu0 %v2119
          %2278 = vmatpush.msra.mxu0 %v2111
          %2279 = vmatpush.msra.mxu0 %v2103
          %2280 = vmatmul.f32.gmra.mxu0 %v2167
          %v2281 = vpop.f32.mrf.mxu0
          %v2282 = vadd.f32 0.0, %v2281
          %2283 = vmatmul.f32.gmra.mxu0 %v2170
          %v2284 = vpop.f32.mrf.mxu0
          %v2285 = vadd.f32 0.0, %v2284
          %2286 = vdwg.mxu0
          %2287 = vmatpush.msra.mxu0 0.0
          %2288 = vmatpush.msra.mxu0 0.0
          %2289 = vmatpush.msra.mxu0 0.0
          %2290 = vmatpush.msra.mxu0 0.0
          %2291 = vmatpush.msra.mxu0 0.0
          %2292 = vmatpush.msra.mxu0 0.0
          %2293 = vmatpush.msra.mxu0 0.0
          %2294 = vmatpush.msra.mxu0 0.0
          %2295 = vmatpush.msra.mxu0 %v2160
          %2296 = vmatpush.msra.mxu0 %v2152
          %2297 = vmatpush.msra.mxu0 %v2144
          %2298 = vmatpush.msra.mxu0 %v2136
          %2299 = vmatpush.msra.mxu0 %v2128
          %2300 = vmatpush.msra.mxu0 %v2120
          %2301 = vmatpush.msra.mxu0 %v2112
          %2302 = vmatpush.msra.mxu0 %v2104
          %2303 = vmatmul.f32.gmra.mxu0 %v2167
          %v2304 = vpop.f32.mrf.mxu0
          %v2305 = vadd.f32 0.0, %v2304
          %2306 = vmatmul.f32.gmra.mxu0 %v2170
          %v2307 = vpop.f32.mrf.mxu0
          %v2308 = vadd.f32 0.0, %v2307
          %2309 = vdwg.mxu0
          %2310 = vmatpush.msra.mxu0 0.0
          %2311 = vmatpush.msra.mxu0 0.0
          %2312 = vmatpush.msra.mxu0 0.0
          %2313 = vmatpush.msra.mxu0 0.0
          %2314 = vmatpush.msra.mxu0 0.0
          %2315 = vmatpush.msra.mxu0 0.0
          %2316 = vmatpush.msra.mxu0 0.0
          %2317 = vmatpush.msra.mxu0 0.0
          %2318 = vmatpush.msra.mxu0 %v2161
          %2319 = vmatpush.msra.mxu0 %v2153
          %2320 = vmatpush.msra.mxu0 %v2145
          %2321 = vmatpush.msra.mxu0 %v2137
          %2322 = vmatpush.msra.mxu0 %v2129
          %2323 = vmatpush.msra.mxu0 %v2121
          %2324 = vmatpush.msra.mxu0 %v2113
          %2325 = vmatpush.msra.mxu0 %v2105
          %2326 = vmatmul.f32.gmra.mxu0 %v2167
          %v2327 = vpop.f32.mrf.mxu0
          %v2328 = vadd.f32 0.0, %v2327
          %2329 = vmatmul.f32.gmra.mxu0 %v2170
          %v2330 = vpop.f32.mrf.mxu0
          %v2331 = vadd.f32 0.0, %v2330
          %2332 = vdwg.mxu0
          %2333 = vmatpush.msra.mxu0 0.0
          %2334 = vmatpush.msra.mxu0 0.0
          %2335 = vmatpush.msra.mxu0 0.0
          %2336 = vmatpush.msra.mxu0 0.0
          %2337 = vmatpush.msra.mxu0 0.0
          %2338 = vmatpush.msra.mxu0 0.0
          %2339 = vmatpush.msra.mxu0 0.0
          %2340 = vmatpush.msra.mxu0 0.0
          %2341 = vmatpush.msra.mxu0 %v2162
          %2342 = vmatpush.msra.mxu0 %v2154
          %2343 = vmatpush.msra.mxu0 %v2146
          %2344 = vmatpush.msra.mxu0 %v2138
          %2345 = vmatpush.msra.mxu0 %v2130
          %2346 = vmatpush.msra.mxu0 %v2122
          %2347 = vmatpush.msra.mxu0 %v2114
          %2348 = vmatpush.msra.mxu0 %v2106
          %2349 = vmatmul.f32.gmra.mxu0 %v2167
          %v2350 = vpop.f32.mrf.mxu0
          %v2351 = vadd.f32 0.0, %v2350
          %2352 = vmatmul.f32.gmra.mxu0 %v2170
          %v2353 = vpop.f32.mrf.mxu0
          %v2354 = vadd.f32 0.0, %v2353
          %2355 = vdwg.mxu0
          %s2356 = smul.u32 %s30, 16
          %s2357 = smul.addr %s2356, 8
          %s2358 = scalar_lea.vmem [#allocation3], %s2357
          %2359 = vst [vmem:[%s2358] sm:$0xff] %v2190
          %2360 = vst [vmem:[%s2358 + $0x8] sm:$0xff] %v2213
          %2361 = vst [vmem:[%s2358 + $0x10] sm:$0xff] %v2236
          %2362 = vst [vmem:[%s2358 + $0x18] sm:$0xff] %v2259
          %2363 = vst [vmem:[%s2358 + $0x20] sm:$0xff] %v2282
          %2364 = vst [vmem:[%s2358 + $0x28] sm:$0xff] %v2305
          %2365 = vst [vmem:[%s2358 + $0x30] sm:$0xff] %v2328
          %vm2366 = vcmask 850944
          %2367 = vst.msk [vmem:[%s2358 + $0x38] sm:$0xff] %vm2366, %v2351
          %2368 = vst [vmem:[%s2358 + $0x40] sm:$0xff] %v2193
          %2369 = vst [vmem:[%s2358 + $0x48] sm:$0xff] %v2216
          %2370 = vst [vmem:[%s2358 + $0x50] sm:$0xff] %v2239
          %2371 = vst [vmem:[%s2358 + $0x58] sm:$0xff] %v2262
          %2372 = vst [vmem:[%s2358 + $0x60] sm:$0xff] %v2285
          %2373 = vst [vmem:[%s2358 + $0x68] sm:$0xff] %v2308
          %2374 = vst [vmem:[%s2358 + $0x70] sm:$0xff] %v2331
          %2375 = vst.msk [vmem:[%s2358 + $0x78] sm:$0xff] %vm2366, %v2354
          %v2376 = vld [vmem:[#allocation6] sm:$0xff]
          %v2377 = vld [vmem:[#allocation6 + $0x8] sm:$0xff]
          %v2378 = vadd.f32 %v2190, %v2213
          %v2379 = vadd.f32 %v2378, %v2236
          %v2380 = vadd.f32 %v2379, %v2259
          %v2381 = vadd.f32 %v2380, %v2282
          %v2382 = vadd.f32 %v2381, %v2305
          %v2383 = vadd.f32 %v2382, %v2328
          %v2384 = vsel %vm2366, %v2351, 0.0
          %v2385 = vadd.f32 %v2383, %v2384
          %2386 = vadd.xlane.f32.xlu0 %v2385
          %v2387 = vpop.xlane.xlu0 %2386
          %v2388 = vadd.f32 %v2193, %v2216
          %v2389 = vadd.f32 %v2388, %v2239
          %v2390 = vadd.f32 %v2389, %v2262
          %v2391 = vadd.f32 %v2390, %v2285
          %v2392 = vadd.f32 %v2391, %v2308
          %v2393 = vadd.f32 %v2392, %v2331
          %v2394 = vsel %vm2366, %v2354, 0.0
          %v2395 = vadd.f32 %v2393, %v2394
          %2396 = vadd.xlane.f32.xlu0 %v2395
          %v2397 = vpop.xlane.xlu0 %2396
          %v2398 = vadd.f32 %v2376, %v2387
          %v2399 = vadd.f32 %v2377, %v2397
          %vm2400 = vcmask 7168
          %2401 = vst.msk [vmem:[#allocation6] sm:$0xff] %vm2400, %v2398
          %2402 = vst.msk [vmem:[#allocation6 + $0x8] sm:$0xff] %vm2400, %v2399
          %v2403 = vld [vmem:[#allocation7] sm:$0xff]
          %v2404 = vld [vmem:[#allocation7 + $0x8] sm:$0xff]
          %v2405 = vmul.f32 %v2190, %v2190
          %v2406 = vmul.f32 %v2213, %v2213
          %v2407 = vmul.f32 %v2236, %v2236
          %v2408 = vmul.f32 %v2259, %v2259
          %v2409 = vmul.f32 %v2282, %v2282
          %v2410 = vmul.f32 %v2305, %v2305
          %v2411 = vmul.f32 %v2328, %v2328
          %v2412 = vmul.f32 %v2351, %v2351
          %v2413 = vmul.f32 %v2193, %v2193
          %v2414 = vmul.f32 %v2216, %v2216
          %v2415 = vmul.f32 %v2239, %v2239
          %v2416 = vmul.f32 %v2262, %v2262
          %v2417 = vmul.f32 %v2285, %v2285
          %v2418 = vmul.f32 %v2308, %v2308
          %v2419 = vmul.f32 %v2331, %v2331
          %v2420 = vmul.f32 %v2354, %v2354
          %v2421 = vadd.f32 %v2405, %v2406
          %v2422 = vadd.f32 %v2421, %v2407
          %v2423 = vadd.f32 %v2422, %v2408
          %v2424 = vadd.f32 %v2423, %v2409
          %v2425 = vadd.f32 %v2424, %v2410
          %v2426 = vadd.f32 %v2425, %v2411
          %v2427 = vsel %vm2366, %v2412, 0.0
          %v2428 = vadd.f32 %v2426, %v2427
          %2429 = vadd.xlane.f32.xlu0 %v2428
          %v2430 = vpop.xlane.xlu0 %2429
          %v2431 = vadd.f32 %v2413, %v2414
          %v2432 = vadd.f32 %v2431, %v2415
          %v2433 = vadd.f32 %v2432, %v2416
          %v2434 = vadd.f32 %v2433, %v2417
          %v2435 = vadd.f32 %v2434, %v2418
          %v2436 = vadd.f32 %v2435, %v2419
          %v2437 = vsel %vm2366, %v2420, 0.0
          %v2438 = vadd.f32 %v2436, %v2437
          %2439 = vadd.xlane.f32.xlu0 %v2438
          %v2440 = vpop.xlane.xlu0 %2439
          %v2441 = vadd.f32 %v2403, %v2430
          %v2442 = vadd.f32 %v2404, %v2440
          %2443 = vst.msk [vmem:[#allocation7] sm:$0xff] %vm2400, %v2441
          %2444 = vst.msk [vmem:[#allocation7 + $0x8] sm:$0xff] %vm2400, %v2442
        $region68: #{fc_forward.1} parent=55 // pred_fallthru
          _
        %p2445 = scmp.eq.s32.totalorder %s29, 2
        // Predicated region
        $region73: #{fc_forward.1} parent=55 // pred_check
          %p2446 = pneg %p2445
        $region74: #{fc_forward.1} parent=55 // pred_check_branch
          %2448 = sbr.rel (%p2446) target = $region76
        $region75: #{fc_forward.1} parent=55 // pred_region
          // Predicated region
          $region77: #{fc_forward.1} parent=75 // pred_check
            %p2449 = pneg %p369
          $region78: #{fc_forward.1} parent=75 // pred_check_branch
            %2451 = sbr.rel (%p2449) target = $region80
          $region79: #{fc_forward.1} parent=75 // pred_region
            %v2452 = vld [vmem:[#allocation6] sm:$0xff]
            %v2453 = vld [vmem:[#allocation6 + $0x8] sm:$0xff]
            %v2454 = vmul.f32 %v2452, 0.001
            %v2455 = vmul.f32 %v2453, 0.001
            %v2456 = vld [vmem:[#allocation7] sm:$0xff]
            %v2457 = vld [vmem:[#allocation7 + $0x8] sm:$0xff]
            %v2458 = vmul.f32 %v2456, 0.001
            %v2459 = vmul.f32 %v2457, 0.001
            %v2460 = vmul.f32 %v2454, %v2454
            %v2461 = vmul.f32 %v2455, %v2455
            %v2462 = vsub.f32 %v2458, %v2460
            %v2463 = vsub.f32 %v2459, %v2461
            %v2464 = vmax.f32 %v2462, 0.0
            %v2465 = vmax.f32 %v2463, 0.0
            %v2466 = vld [vmem:[%s5] sm:$0xff]
            %v2467 = vld [vmem:[%s5 + $0x8] sm:$0xff]
            %v2468 = vadd.f32 %v2464, 1e-05
            %v2469 = vadd.f32 %v2465, 1e-05
            %v2470 = vrsqrt.pop %v2468
            %v2471 = vmul.f32 %v2470, %v2468
            %v2472 = vmul.f32 %v2471, %v2470
            %v2473 = vmul.f32 0.5, %v2472
            %v2474 = vsub.f32 1.5, %v2473
            %v2475 = vmul.f32 %v2470, %v2474
            %vm2476 = vweird.f32 %v2468
            %vm2477 = vweird.f32 %v2470
            %vm2478 = vmor %vm2476, %vm2477
            %v2479 = vsel %vm2478, %v2470, %v2475
            %v2480 = vrsqrt.pop %v2469
            %v2481 = vmul.f32 %v2480, %v2469
            %v2482 = vmul.f32 %v2481, %v2480
            %v2483 = vmul.f32 0.5, %v2482
            %v2484 = vsub.f32 1.5, %v2483
            %v2485 = vmul.f32 %v2480, %v2484
            %vm2486 = vweird.f32 %v2469
            %vm2487 = vweird.f32 %v2480
            %vm2488 = vmor %vm2486, %vm2487
            %v2489 = vsel %vm2488, %v2480, %v2485
            %v2490 = vmul.f32 %v2466, %v2479
            %v2491 = vmul.f32 %v2467, %v2489
            %vm2492 = vcmask 7168
            %2493 = vst.msk [vmem:[#allocation10] sm:$0xff] %vm2492, %v2490
            %2494 = vst.msk [vmem:[#allocation10 + $0x8] sm:$0xff] %vm2492, %v2491
            %v2495 = vld [vmem:[%s6] sm:$0xff]
            %v2496 = vld [vmem:[%s6 + $0x8] sm:$0xff]
            %v2497 = vmul.f32 %v2454, %v2490
            %v2498 = vmul.f32 %v2455, %v2491
            %v2499 = vsub.f32 %v2495, %v2497
            %v2500 = vsub.f32 %v2496, %v2498
            %2501 = vst.msk [vmem:[#allocation11] sm:$0xff] %vm2492, %v2499
            %2502 = vst.msk [vmem:[#allocation11 + $0x8] sm:$0xff] %vm2492, %v2500
          $region80: #{fc_forward.1} parent=75 // pred_fallthru
            _
          %s2503 = smul.u32 %s30, 16
          %s2504 = smul.addr %s2503, 8
          %s2505 = scalar_lea.vmem [#allocation3], %s2504
          %v2506 = vld [vmem:[%s2505] sm:$0xff]
          %v2507 = vld [vmem:[%s2505 + $0x8] sm:$0xff]
          %v2508 = vld [vmem:[%s2505 + $0x10] sm:$0xff]
          %v2509 = vld [vmem:[%s2505 + $0x18] sm:$0xff]
          %v2510 = vld [vmem:[%s2505 + $0x20] sm:$0xff]
          %v2511 = vld [vmem:[%s2505 + $0x28] sm:$0xff]
          %v2512 = vld [vmem:[%s2505 + $0x30] sm:$0xff]
          %v2513 = vld [vmem:[%s2505 + $0x38] sm:$0xff]
          %v2514 = vld [vmem:[%s2505 + $0x40] sm:$0xff]
          %v2515 = vld [vmem:[%s2505 + $0x48] sm:$0xff]
          %v2516 = vld [vmem:[%s2505 + $0x50] sm:$0xff]
          %v2517 = vld [vmem:[%s2505 + $0x58] sm:$0xff]
          %v2518 = vld [vmem:[%s2505 + $0x60] sm:$0xff]
          %v2519 = vld [vmem:[%s2505 + $0x68] sm:$0xff]
          %v2520 = vld [vmem:[%s2505 + $0x70] sm:$0xff]
          %v2521 = vld [vmem:[%s2505 + $0x78] sm:$0xff]
          %v2522 = vld [vmem:[#allocation10] sm:$0xff]
          %v2523 = vld [vmem:[#allocation10 + $0x8] sm:$0xff]
          %2525 = vset.pattern.permute.xlu0 0
          %2526 = vperm.xlu0 %2525, %v2522
          %v2527 = vpop.permute.xlu0 %2526
          %2530 = vset.pattern.permute.xlu0 0
          %2531 = vperm.xlu0 %2530, %v2523
          %v2532 = vpop.permute.xlu0 %2531
          %v2534 = vmul.f32 %v2506, %v2527
          %v2535 = vmul.f32 %v2507, %v2527
          %v2536 = vmul.f32 %v2508, %v2527
          %v2537 = vmul.f32 %v2509, %v2527
          %v2538 = vmul.f32 %v2510, %v2527
          %v2539 = vmul.f32 %v2511, %v2527
          %v2540 = vmul.f32 %v2512, %v2527
          %v2541 = vmul.f32 %v2513, %v2527
          %v2542 = vmul.f32 %v2514, %v2532
          %v2543 = vmul.f32 %v2515, %v2532
          %v2544 = vmul.f32 %v2516, %v2532
          %v2545 = vmul.f32 %v2517, %v2532
          %v2546 = vmul.f32 %v2518, %v2532
          %v2547 = vmul.f32 %v2519, %v2532
          %v2548 = vmul.f32 %v2520, %v2532
          %v2549 = vmul.f32 %v2521, %v2532
          %v2550 = vld [vmem:[#allocation11] sm:$0xff]
          %v2551 = vld [vmem:[#allocation11 + $0x8] sm:$0xff]
          %2553 = vset.pattern.permute.xlu0 0
          %2554 = vperm.xlu0 %2553, %v2550
          %v2555 = vpop.permute.xlu0 %2554
          %2558 = vset.pattern.permute.xlu0 0
          %2559 = vperm.xlu0 %2558, %v2551
          %v2560 = vpop.permute.xlu0 %2559
          %v2562 = vadd.f32 %v2534, %v2555
          %v2563 = vadd.f32 %v2535, %v2555
          %v2564 = vadd.f32 %v2536, %v2555
          %v2565 = vadd.f32 %v2537, %v2555
          %v2566 = vadd.f32 %v2538, %v2555
          %v2567 = vadd.f32 %v2539, %v2555
          %v2568 = vadd.f32 %v2540, %v2555
          %v2569 = vadd.f32 %v2541, %v2555
          %v2570 = vadd.f32 %v2542, %v2560
          %v2571 = vadd.f32 %v2543, %v2560
          %v2572 = vadd.f32 %v2544, %v2560
          %v2573 = vadd.f32 %v2545, %v2560
          %v2574 = vadd.f32 %v2546, %v2560
          %v2575 = vadd.f32 %v2547, %v2560
          %v2576 = vadd.f32 %v2548, %v2560
          %v2577 = vadd.f32 %v2549, %v2560
          %v2578 = vmax.f32 %v2562, 0.0
          %v2579 = vmax.f32 %v2563, 0.0
          %v2580 = vmax.f32 %v2564, 0.0
          %v2581 = vmax.f32 %v2565, 0.0
          %v2582 = vmax.f32 %v2566, 0.0
          %v2583 = vmax.f32 %v2567, 0.0
          %v2584 = vmax.f32 %v2568, 0.0
          %v2585 = vmax.f32 %v2569, 0.0
          %v2586 = vmax.f32 %v2570, 0.0
          %v2587 = vmax.f32 %v2571, 0.0
          %v2588 = vmax.f32 %v2572, 0.0
          %v2589 = vmax.f32 %v2573, 0.0
          %v2590 = vmax.f32 %v2574, 0.0
          %v2591 = vmax.f32 %v2575, 0.0
          %v2592 = vmax.f32 %v2576, 0.0
          %v2593 = vmax.f32 %v2577, 0.0
          %v2594 = vld [vmem:[%s7] sm:$0x1]
          %v2595 = vld [vmem:[#allocation12] sm:$0x1]
          %2597 = vset.pattern.permute.xlu0 0
          %2598 = vperm.xlu0 %2597, %v2595
          %v2599 = vpop.permute.xlu0 %2598
          %v2601 = vperm.slane %v2599, 0
          %vm2602 = vcmask 130048
          %v2604 = vsel %vm2602, %v2594, 0
          %2606 = vmatpush.msra.mxu0 0.0
          %2607 = vmatpush.msra.mxu0 0.0
          %2608 = vmatpush.msra.mxu0 0.0
          %2609 = vmatpush.msra.mxu0 0.0
          %2610 = vmatpush.msra.mxu0 0.0
          %2611 = vmatpush.msra.mxu0 0.0
          %2612 = vmatpush.msra.mxu0 0.0
          %2613 = vmatpush.msra.mxu0 0.0
          %2614 = vmatpush.msra.mxu0 0.0
          %2615 = vmatpush.msra.mxu0 0.0
          %2616 = vmatpush.msra.mxu0 0.0
          %2617 = vmatpush.msra.mxu0 0.0
          %2618 = vmatpush.msra.mxu0 0.0
          %2619 = vmatpush.msra.mxu0 0.0
          %2620 = vmatpush.msra.mxu0 %v2586
          %2621 = vmatpush.msra.mxu0 %v2578
          %2622 = vmatmul.f32.gmra.mxu0 %v2604
          %v2623 = vpop.f32.mrf.mxu0
          %v2624 = vadd.f32 %v2601, %v2623
          %2625 = vdwg.mxu0
          %2626 = vmatpush.msra.mxu0 0.0
          %2627 = vmatpush.msra.mxu0 0.0
          %2628 = vmatpush.msra.mxu0 0.0
          %2629 = vmatpush.msra.mxu0 0.0
          %2630 = vmatpush.msra.mxu0 0.0
          %2631 = vmatpush.msra.mxu0 0.0
          %2632 = vmatpush.msra.mxu0 0.0
          %2633 = vmatpush.msra.mxu0 0.0
          %2634 = vmatpush.msra.mxu0 0.0
          %2635 = vmatpush.msra.mxu0 0.0
          %2636 = vmatpush.msra.mxu0 0.0
          %2637 = vmatpush.msra.mxu0 0.0
          %2638 = vmatpush.msra.mxu0 0.0
          %2639 = vmatpush.msra.mxu0 0.0
          %2640 = vmatpush.msra.mxu0 %v2587
          %2641 = vmatpush.msra.mxu0 %v2579
          %2642 = vmatmul.f32.gmra.mxu0 %v2604
          %v2643 = vpop.f32.mrf.mxu0
          %v2644 = vadd.f32 %v2601, %v2643
          %2645 = vdwg.mxu0
          %2646 = vmatpush.msra.mxu0 0.0
          %2647 = vmatpush.msra.mxu0 0.0
          %2648 = vmatpush.msra.mxu0 0.0
          %2649 = vmatpush.msra.mxu0 0.0
          %2650 = vmatpush.msra.mxu0 0.0
          %2651 = vmatpush.msra.mxu0 0.0
          %2652 = vmatpush.msra.mxu0 0.0
          %2653 = vmatpush.msra.mxu0 0.0
          %2654 = vmatpush.msra.mxu0 0.0
          %2655 = vmatpush.msra.mxu0 0.0
          %2656 = vmatpush.msra.mxu0 0.0
          %2657 = vmatpush.msra.mxu0 0.0
          %2658 = vmatpush.msra.mxu0 0.0
          %2659 = vmatpush.msra.mxu0 0.0
          %2660 = vmatpush.msra.mxu0 %v2588
          %2661 = vmatpush.msra.mxu0 %v2580
          %2662 = vmatmul.f32.gmra.mxu0 %v2604
          %v2663 = vpop.f32.mrf.mxu0
          %v2664 = vadd.f32 %v2601, %v2663
          %2665 = vdwg.mxu0
          %2666 = vmatpush.msra.mxu0 0.0
          %2667 = vmatpush.msra.mxu0 0.0
          %2668 = vmatpush.msra.mxu0 0.0
          %2669 = vmatpush.msra.mxu0 0.0
          %2670 = vmatpush.msra.mxu0 0.0
          %2671 = vmatpush.msra.mxu0 0.0
          %2672 = vmatpush.msra.mxu0 0.0
          %2673 = vmatpush.msra.mxu0 0.0
          %2674 = vmatpush.msra.mxu0 0.0
          %2675 = vmatpush.msra.mxu0 0.0
          %2676 = vmatpush.msra.mxu0 0.0
          %2677 = vmatpush.msra.mxu0 0.0
          %2678 = vmatpush.msra.mxu0 0.0
          %2679 = vmatpush.msra.mxu0 0.0
          %2680 = vmatpush.msra.mxu0 %v2589
          %2681 = vmatpush.msra.mxu0 %v2581
          %2682 = vmatmul.f32.gmra.mxu0 %v2604
          %v2683 = vpop.f32.mrf.mxu0
          %v2684 = vadd.f32 %v2601, %v2683
          %2685 = vdwg.mxu0
          %2686 = vmatpush.msra.mxu0 0.0
          %2687 = vmatpush.msra.mxu0 0.0
          %2688 = vmatpush.msra.mxu0 0.0
          %2689 = vmatpush.msra.mxu0 0.0
          %2690 = vmatpush.msra.mxu0 0.0
          %2691 = vmatpush.msra.mxu0 0.0
          %2692 = vmatpush.msra.mxu0 0.0
          %2693 = vmatpush.msra.mxu0 0.0
          %2694 = vmatpush.msra.mxu0 0.0
          %2695 = vmatpush.msra.mxu0 0.0
          %2696 = vmatpush.msra.mxu0 0.0
          %2697 = vmatpush.msra.mxu0 0.0
          %2698 = vmatpush.msra.mxu0 0.0
          %2699 = vmatpush.msra.mxu0 0.0
          %2700 = vmatpush.msra.mxu0 %v2590
          %2701 = vmatpush.msra.mxu0 %v2582
          %2702 = vmatmul.f32.gmra.mxu0 %v2604
          %v2703 = vpop.f32.mrf.mxu0
          %v2704 = vadd.f32 %v2601, %v2703
          %2705 = vdwg.mxu0
          %2706 = vmatpush.msra.mxu0 0.0
          %2707 = vmatpush.msra.mxu0 0.0
          %2708 = vmatpush.msra.mxu0 0.0
          %2709 = vmatpush.msra.mxu0 0.0
          %2710 = vmatpush.msra.mxu0 0.0
          %2711 = vmatpush.msra.mxu0 0.0
          %2712 = vmatpush.msra.mxu0 0.0
          %2713 = vmatpush.msra.mxu0 0.0
          %2714 = vmatpush.msra.mxu0 0.0
          %2715 = vmatpush.msra.mxu0 0.0
          %2716 = vmatpush.msra.mxu0 0.0
          %2717 = vmatpush.msra.mxu0 0.0
          %2718 = vmatpush.msra.mxu0 0.0
          %2719 = vmatpush.msra.mxu0 0.0
          %2720 = vmatpush.msra.mxu0 %v2591
          %2721 = vmatpush.msra.mxu0 %v2583
          %2722 = vmatmul.f32.gmra.mxu0 %v2604
          %v2723 = vpop.f32.mrf.mxu0
          %v2724 = vadd.f32 %v2601, %v2723
          %2725 = vdwg.mxu0
          %2726 = vmatpush.msra.mxu0 0.0
          %2727 = vmatpush.msra.mxu0 0.0
          %2728 = vmatpush.msra.mxu0 0.0
          %2729 = vmatpush.msra.mxu0 0.0
          %2730 = vmatpush.msra.mxu0 0.0
          %2731 = vmatpush.msra.mxu0 0.0
          %2732 = vmatpush.msra.mxu0 0.0
          %2733 = vmatpush.msra.mxu0 0.0
          %2734 = vmatpush.msra.mxu0 0.0
          %2735 = vmatpush.msra.mxu0 0.0
          %2736 = vmatpush.msra.mxu0 0.0
          %2737 = vmatpush.msra.mxu0 0.0
          %2738 = vmatpush.msra.mxu0 0.0
          %2739 = vmatpush.msra.mxu0 0.0
          %2740 = vmatpush.msra.mxu0 %v2592
          %2741 = vmatpush.msra.mxu0 %v2584
          %2742 = vmatmul.f32.gmra.mxu0 %v2604
          %v2743 = vpop.f32.mrf.mxu0
          %v2744 = vadd.f32 %v2601, %v2743
          %2745 = vdwg.mxu0
          %2746 = vmatpush.msra.mxu0 0.0
          %2747 = vmatpush.msra.mxu0 0.0
          %2748 = vmatpush.msra.mxu0 0.0
          %2749 = vmatpush.msra.mxu0 0.0
          %2750 = vmatpush.msra.mxu0 0.0
          %2751 = vmatpush.msra.mxu0 0.0
          %2752 = vmatpush.msra.mxu0 0.0
          %2753 = vmatpush.msra.mxu0 0.0
          %2754 = vmatpush.msra.mxu0 0.0
          %2755 = vmatpush.msra.mxu0 0.0
          %2756 = vmatpush.msra.mxu0 0.0
          %2757 = vmatpush.msra.mxu0 0.0
          %2758 = vmatpush.msra.mxu0 0.0
          %2759 = vmatpush.msra.mxu0 0.0
          %2760 = vmatpush.msra.mxu0 %v2593
          %2761 = vmatpush.msra.mxu0 %v2585
          %2762 = vmatmul.f32.gmra.mxu0 %v2604
          %v2763 = vpop.f32.mrf.mxu0
          %v2764 = vadd.f32 %v2601, %v2763
          %2765 = vdwg.mxu0
          %v2774 = vrot.slane %v2644, 7
          %v2775 = vrot.slane %v2664, 6
          %v2776 = vrot.slane %v2684, 5
          %v2777 = vrot.slane %v2704, 4
          %v2778 = vrot.slane %v2724, 3
          %v2779 = vrot.slane %v2744, 2
          %v2780 = vrot.slane %v2764, 1
          %vm2781 = vcmask 1040384
          %v2782 = vsel %vm2781, %v2624, %v2774
          %vm2783 = vcmask 1042434
          %v2784 = vsel %vm2783, %v2775, %v2776
          %vm2785 = vcmask 1041408
          %v2786 = vsel %vm2785, %v2782, %v2784
          %vm2787 = vcmask 1044484
          %v2788 = vsel %vm2787, %v2777, %v2778
          %vm2789 = vcmask 1046534
          %v2790 = vsel %vm2789, %v2779, %v2780
          %vm2791 = vcmask 1045508
          %v2792 = vsel %vm2791, %v2788, %v2790
          %vm2793 = vcmask 1043456
          %v2794 = vsel %vm2793, %v2786, %v2792
          %v2796 = vlaneseq
          %vm2797 = vcmp.ge.s32.totalorder %v2796, 0
          %vm2798 = vcmp.lt.s32.totalorder %v2796, 1000
          %vm2799 = vmand %vm2797, %vm2798
          %2800 = vst.msk [vmem:[%s354] sm:$0xff] %vm2799, %v2794
        $region76: #{fc_forward.1} parent=55 // pred_fallthru
          _
        %s2801 = sand.u32 %s247, 1
        %s2802 = scalar_lea.sflag [#allocation14], %s2801
        %s2803 = sand.u32 %s247, 1
        %s2804 = smul.addr %s2803, 8
        %s2805 = scalar_lea.vmem [#allocation13], %s2804
        // Predicated region
        $region81: #{fc_forward.1} parent=55 // pred_check
          %p2806 = pneg %p257
        $region82: #{fc_forward.1} parent=55 // pred_check_branch
          %2808 = sbr.rel (%p2806) target = $region84
        $region83: #{fc_forward.1} parent=55 // pred_region
          %p2809 = scmp.eq.s32.totalorder %s29, 2
          %s2810 = scalar_select %p2809, %s30, 0
          %s2811 = smul.u32 8, %s2810
          %2813 = vsyncadd %s2802, 0
          %s2814 = scalar_lea.hbm %s9, %s2811
          %s2816 = sshll.u32 %s2805, 4
          %s2817 = int_to_ptr.vmem [resolvable:$true] %s2816
          %s2818 = sshll.u32 %s2814, 4
          %s2819 = int_to_ptr.hbm [resolvable:$true] %s2818
          %2821 = dma.vmem_to_hbm [thread:$0]  %s2817, 128, %s2819, %s2802
        $region84: #{fc_forward.1} parent=55 // pred_fallthru
          _
      $region56: #{fc_forward.1} parent=5 // pred_fallthru
        _
      %p2822 = scmp.le.s32.totalorder 2, %s20
      // Predicated region
      $region85: #{fc_forward.1} parent=5 // pred_check
        %p2823 = pneg %p2822
      $region86: #{fc_forward.1} parent=5 // pred_check_branch
        %2825 = sbr.rel (%p2823) target = $region88
      $region87: #{fc_forward.1} parent=5 // pred_region
        %s2826 = ssub.s32 %s20, 2
        // Predicated region
        $region89: #{fc_forward.1} parent=87 // pred_check
          %p2827 = pneg %p263
        $region90: #{fc_forward.1} parent=87 // pred_check_branch
          %2829 = sbr.rel (%p2827) target = $region92
        $region91: #{fc_forward.1} parent=87 // pred_region
          %s2830 = sand.u32 %s248, 1
          %s2831 = scalar_lea.sflag [#allocation14], %s2830
          %s2832 = sand.u32 %s248, 1
          %s2833 = smul.addr %s2832, 8
          %s2834 = scalar_lea.vmem [#allocation13], %s2833
          %2836 = dma.done %s2831, 128
        $region92: #{fc_forward.1} parent=87 // pred_fallthru
          _
      $region88: #{fc_forward.1} parent=5 // pred_fallthru
        _
    $region6: #{fc_forward.1} parent=1 // loop_footer
      %s24 = sadd.s32 1, %s20
    $region7: #{fc_forward.1} parent=1 // loop_footer_branch
      %19 = sbr.rel target = $region3
    $region8: #{fc_forward.1} parent=1 // loop_exit
      _
    %2837 = vsyncpa [#allocation14], 1
    %s2838 = scalar_lea.sflag [#allocation14], 1
    %2839 = vsyncpa %s2838, 1

</llo_original>
